<compile_context>
chip_gen: v5e
topology: v5e:2x2
jax: 0.10.0
libtpu: 0.0.40
codegen_flags: <defaults>
</compile_context>

<pallas_src>
import functools

import jax
import jax.numpy as jnp
from jax.experimental import pallas as pl
from jax.experimental.pallas import tpu as pltpu


# ----------------------------------------------------------------------------
# In-kernel building blocks (operate on VMEM-resident values, one batch row)
# ----------------------------------------------------------------------------
def _mha(q_in, kv_in, keep_mask, wqkv, wo, bo, *, heads, head_dim, self_attn):
    """Multi-head attention for one batch element.

    q_in: (Lq, E); kv_in: (Lk, E); keep_mask: bool, broadcastable to (H*Lq, Lk).
    wqkv: (E, 3E) block-diagonal [Q*scale | K | V]; wo: (E, E); bo: (1, E).
    """
    embed = heads * head_dim
    if self_attn:
        # one MXU push for all of Q, K, V (96-lane-wide output)
        qkv = jnp.dot(q_in, wqkv, preferred_element_type=jnp.float32)   # (L, 3E)
        q_p = qkv[:, :embed]
        k_p = qkv[:, embed:2 * embed]
        v_p = qkv[:, 2 * embed:]
    else:
        q_p = jnp.dot(q_in, wqkv[:, :embed], preferred_element_type=jnp.float32)
        kv = jnp.dot(kv_in, wqkv[:, embed:], preferred_element_type=jnp.float32)
        k_p = kv[:, :embed]
        v_p = kv[:, embed:]

    lq = q_p.shape[0]
    # contract last-dim vs last-dim -> no explicit K transpose (saves XLU work)
    dn = (((1,), (1,)), ((), ()))
    e_parts = []
    for h in range(heads):                                   # static, tiny
        sl = slice(h * head_dim, (h + 1) * head_dim)
        e_parts.append(jax.lax.dot_general(q_p[:, sl], k_p[:, sl], dn,
                                           preferred_element_type=jnp.float32))
    # stack head energies along sublanes -> ONE softmax for all heads
    energy = jnp.concatenate(e_parts, axis=0)                # (H*Lq, Lk)
    energy = jnp.where(keep_mask, energy, jnp.float32(-1e20))
    energy = energy - jnp.max(energy, axis=-1, keepdims=True)
    p = jnp.exp(energy)
    attn = p * pl.reciprocal(jnp.sum(p, axis=-1, keepdims=True), approx=True)

    # fold the output projection per head -> no lane-axis concatenate of contexts
    out = bo
    for h in range(heads):
        sl = slice(h * head_dim, (h + 1) * head_dim)
        ctx_h = jnp.dot(attn[h * lq:(h + 1) * lq, :], v_p[:, sl],
                        preferred_element_type=jnp.float32)  # (Lq, d)
        out = out + jnp.dot(ctx_h, wo[sl, :], preferred_element_type=jnp.float32)
    return out                                               # (Lq, E)


def _add_layernorm(x, y, g, b, eps=1e-5):
    z = x + y
    mean = jnp.mean(z, axis=-1, keepdims=True)
    var = jnp.mean((z - mean) ** 2, axis=-1, keepdims=True)
    return (z - mean) * jax.lax.rsqrt(var + eps) * g + b


def _ffn(x, w1, b1, w2, b2):
    h = jnp.dot(x, w1, preferred_element_type=jnp.float32) + b1
    h = jnp.maximum(h, 0.0)
    return jnp.dot(h, w2, preferred_element_type=jnp.float32) + b2


# ----------------------------------------------------------------------------
# Single fused forward kernel (whole encoder + decoder + fc_out, one batch row)
# ----------------------------------------------------------------------------
def transformer_kernel(
        enc_in_ref, dec_in_ref, kmask_ref,
        e_wqkv, e_wo, e_bo, e_g1, e_bn1, e_g2, e_bn2, e_w1, e_b1, e_w2, e_b2,
        s_wqkv, s_wo, s_bo, d_g0, d_bn0,
        c_wqkv, c_wo, c_bo, d_g1, d_bn1, d_g2, d_bn2, d_w1, d_b1, d_w2, d_b2,
        fc_w, fc_b,
        o_ref, *, heads, head_dim, num_layers):
    keep_src = kmask_ref[...] > 0.5                     # (1, Ls) key-validity
    enc = enc_in_ref[...]                               # (Ls, E)

    # ---- Encoder stack (all layers fused; static loop over leading layer axis)
    for l in range(num_layers):
        a = _mha(enc, enc, keep_src, e_wqkv[l], e_wo[l], e_bo[l],
                 heads=heads, head_dim=head_dim, self_attn=True)
        h = _add_layernorm(a, enc, e_g1[l], e_bn1[l])
        f = _ffn(h, e_w1[l], e_b1[l], e_w2[l], e_b2[l])
        enc = _add_layernorm(f, h, e_g2[l], e_bn2[l])

    # ---- Decoder stack
    dec = dec_in_ref[...]                               # (Lt, E)
    lt = dec.shape[0]
    # causal keep-mask built in-register, replicated per head along sublanes
    row = jax.lax.broadcasted_iota(jnp.int32, (lt, lt), 0)
    col = jax.lax.broadcasted_iota(jnp.int32, (lt, lt), 1)
    row_h = jnp.concatenate([row] * heads, axis=0)      # (H*Lt, Lt)
    col_h = jnp.concatenate([col] * heads, axis=0)
    causal = col_h <= row_h

    for l in range(num_layers):
        sa = _mha(dec, dec, causal, s_wqkv[l], s_wo[l], s_bo[l],
                  heads=heads, head_dim=head_dim, self_attn=True)
        q = _add_layernorm(sa, dec, d_g0[l], d_bn0[l])
        ca = _mha(q, enc, keep_src, c_wqkv[l], c_wo[l], c_bo[l],
                  heads=heads, head_dim=head_dim, self_attn=False)
        h = _add_layernorm(ca, q, d_g1[l], d_bn1[l])
        f = _ffn(h, d_w1[l], d_b1[l], d_w2[l], d_b2[l])
        dec = _add_layernorm(f, h, d_g2[l], d_bn2[l])

    # ---- fc_out: lane-dense (vocab padded to a multiple of 128 in the wrapper)
    o_ref[...] = (jnp.dot(dec, fc_w[...], preferred_element_type=jnp.float32)
                  + fc_b[...]).astype(o_ref.dtype)


# ----------------------------------------------------------------------------
# pallas_call wrapper
# ----------------------------------------------------------------------------
def _rep_spec(shape):
    # weight replicated across the batch grid (constant block index -> no re-DMA)
    return pl.BlockSpec(shape, lambda n, _nd=len(shape): (0,) * _nd)


def _block_diag(w, heads):
    # shared per-head (d, d) weight -> block-diagonal (E, E): one wide MXU push
    return jnp.kron(jnp.eye(heads, dtype=w.dtype), w)


def _fold_qkv(attn_params, heads, embed_size):
    # (E, 3E) = [ Q*1/sqrt(E) | K | V ], scale folded into Q (masked_fill value
    # stays -1e20 unscaled; exp underflows to 0 either way, matching torch).
    scale = 1.0 / (embed_size ** 0.5)
    wq = _block_diag(attn_params["wq"], heads) * scale
    wk = _block_diag(attn_params["wk"], heads)
    wv = _block_diag(attn_params["wv"], heads)
    return jnp.concatenate([wq, wk, wv], axis=1)


def transformer_forward_call(enc_in, dec_in, src_key_mask, weights,
                             *, heads, head_dim, num_layers):
    N, Ls, E = enc_in.shape
    Lt = dec_in.shape[1]
    Vp = weights[-2].shape[1]                    # padded vocab (lane dense)

    kernel = functools.partial(transformer_kernel, heads=heads,
                               head_dim=head_dim, num_layers=num_layers)
    in_specs = ([pl.BlockSpec((None, Ls, E), lambda n: (n, 0, 0)),
                 pl.BlockSpec((None, Lt, E), lambda n: (n, 0, 0)),
                 pl.BlockSpec((None, 1, Ls), lambda n: (n, 0, 0))]
                + [_rep_spec(w.shape) for w in weights])
    return pl.pallas_call(
        kernel,
        out_shape=jax.ShapeDtypeStruct((N, Lt, Vp), jnp.float32),
        grid=(N,),
        in_specs=in_specs,
        out_specs=pl.BlockSpec((None, Lt, Vp), lambda n: (n, 0, 0)),
        compiler_params=pltpu.CompilerParams(
            dimension_semantics=("parallel",),        # v7x: one batch row per TC
            vmem_limit_bytes=16 * 1024 * 1024),       # document: usage << 1 MiB
    )(enc_in, dec_in, src_key_mask, *weights)


# ----------------------------------------------------------------------------
# Parameter initialization (deterministic, in-script)
# ----------------------------------------------------------------------------
def init_linear(key, fan_in, fan_out):
    k1, k2 = jax.random.split(key)
    w = jax.random.normal(k1, (fan_in, fan_out), jnp.float32) / jnp.sqrt(fan_in)
    b = 0.01 * jax.random.normal(k2, (1, fan_out), jnp.float32)
    return w, b


def init_attention(key, embed_size, heads):
    d = embed_size // heads
    ks = jax.random.split(key, 4)
    wv = jax.random.normal(ks[0], (d, d), jnp.float32) / jnp.sqrt(d)
    wk = jax.random.normal(ks[1], (d, d), jnp.float32) / jnp.sqrt(d)
    wq = jax.random.normal(ks[2], (d, d), jnp.float32) / jnp.sqrt(d)
    wo, bo = init_linear(ks[3], embed_size, embed_size)
    return dict(wv=wv, wk=wk, wq=wq, wo=wo, bo=bo)


def init_transformer_block(key, embed_size, heads, forward_expansion):
    ks = jax.random.split(key, 3)
    return dict(
        attn=init_attention(ks[0], embed_size, heads),
        ln1_g=jnp.ones((1, embed_size), jnp.float32),
        ln1_b=jnp.zeros((1, embed_size), jnp.float32),
        ln2_g=jnp.ones((1, embed_size), jnp.float32),
        ln2_b=jnp.zeros((1, embed_size), jnp.float32),
        ff1=init_linear(ks[1], embed_size, forward_expansion * embed_size),
        ff2=init_linear(ks[2], forward_expansion * embed_size, embed_size),
    )


def init_decoder_block(key, embed_size, heads, forward_expansion):
    ks = jax.random.split(key, 2)
    return dict(
        self_attn=init_attention(ks[0], embed_size, heads),
        ln_g=jnp.ones((1, embed_size), jnp.float32),
        ln_b=jnp.zeros((1, embed_size), jnp.float32),
        tblock=init_transformer_block(ks[1], embed_size, heads, forward_expansion),
    )


def init_transformer(key, src_vocab, trg_vocab, embed_size, num_layers,
                     heads, forward_expansion, max_length):
    keys = jax.random.split(key, 6 + 2 * num_layers)
    return dict(
        enc_word_emb=0.02 * jax.random.normal(keys[0], (src_vocab, embed_size), jnp.float32),
        enc_pos_emb=0.02 * jax.random.normal(keys[1], (max_length, embed_size), jnp.float32),
        dec_word_emb=0.02 * jax.random.normal(keys[2], (trg_vocab, embed_size), jnp.float32),
        dec_pos_emb=0.02 * jax.random.normal(keys[3], (max_length, embed_size), jnp.float32),
        enc_layers=[init_transformer_block(keys[4 + i], embed_size, heads, forward_expansion)
                    for i in range(num_layers)],
        dec_layers=[init_decoder_block(keys[4 + num_layers + i], embed_size, heads,
                                       forward_expansion) for i in range(num_layers)],
        fc_out=init_linear(keys[4 + 2 * num_layers], embed_size, trg_vocab),
    )


# ----------------------------------------------------------------------------
# Forward pass (dropout p=0 -> identity, omitted)
# ----------------------------------------------------------------------------
def transformer_fwd(params, src, trg, *, src_pad_idx, heads, embed_size, num_layers):
    head_dim = embed_size // heads
    N, Ls = src.shape
    _, Lt = trg.shape

    # embedding gathers + positional embeddings (plain-JAX glue)
    # TODO(synk): token-id gathers stay in XLA; moving them in-kernel would need
    # a scalar-prefetch gather for marginal gain at these sizes.
    enc_in = params["enc_word_emb"][src] + params["enc_pos_emb"][jnp.arange(Ls)][None, :, :]
    dec_in = params["dec_word_emb"][trg] + params["dec_pos_emb"][jnp.arange(Lt)][None, :, :]
    # (N, 1, Ls) key-validity mask (1 = keep, 0 = pad); causal mask built in-kernel
    src_key_mask = (src != src_pad_idx).astype(jnp.float32)[:, None, :]

    # fold + stack per-layer weights along a leading layer axis (single launch)
    enc_layers, dec_layers = params["enc_layers"], params["dec_layers"]

    def stack(fn):
        return jnp.stack([fn(i) for i in range(num_layers)], axis=0)

    e_wqkv = stack(lambda i: _fold_qkv(enc_layers[i]["attn"], heads, embed_size))
    e_wo = stack(lambda i: enc_layers[i]["attn"]["wo"])
    e_bo = stack(lambda i: enc_layers[i]["attn"]["bo"])
    e_g1 = stack(lambda i: enc_layers[i]["ln1_g"])
    e_bn1 = stack(lambda i: enc_layers[i]["ln1_b"])
    e_g2 = stack(lambda i: enc_layers[i]["ln2_g"])
    e_bn2 = stack(lambda i: enc_layers[i]["ln2_b"])
    e_w1 = stack(lambda i: enc_layers[i]["ff1"][0])
    e_b1 = stack(lambda i: enc_layers[i]["ff1"][1])
    e_w2 = stack(lambda i: enc_layers[i]["ff2"][0])
    e_b2 = stack(lambda i: enc_layers[i]["ff2"][1])

    s_wqkv = stack(lambda i: _fold_qkv(dec_layers[i]["self_attn"], heads, embed_size))
    s_wo = stack(lambda i: dec_layers[i]["self_attn"]["wo"])
    s_bo = stack(lambda i: dec_layers[i]["self_attn"]["bo"])
    d_g0 = stack(lambda i: dec_layers[i]["ln_g"])
    d_bn0 = stack(lambda i: dec_layers[i]["ln_b"])
    c_wqkv = stack(lambda i: _fold_qkv(dec_layers[i]["tblock"]["attn"], heads, embed_size))
    c_wo = stack(lambda i: dec_layers[i]["tblock"]["attn"]["wo"])
    c_bo = stack(lambda i: dec_layers[i]["tblock"]["attn"]["bo"])
    d_g1 = stack(lambda i: dec_layers[i]["tblock"]["ln1_g"])
    d_bn1 = stack(lambda i: dec_layers[i]["tblock"]["ln1_b"])
    d_g2 = stack(lambda i: dec_layers[i]["tblock"]["ln2_g"])
    d_bn2 = stack(lambda i: dec_layers[i]["tblock"]["ln2_b"])
    d_w1 = stack(lambda i: dec_layers[i]["tblock"]["ff1"][0])
    d_b1 = stack(lambda i: dec_layers[i]["tblock"]["ff1"][1])
    d_w2 = stack(lambda i: dec_layers[i]["tblock"]["ff2"][0])
    d_b2 = stack(lambda i: dec_layers[i]["tblock"]["ff2"][1])

    # fc_out padded to a lane-dense vocab (multiple of 128); sliced back below
    fc_w, fc_b = params["fc_out"]
    V = fc_w.shape[1]
    Vp = ((V + 127) // 128) * 128
    fc_w_pad = jnp.zeros((embed_size, Vp), jnp.float32).at[:, :V].set(fc_w)
    fc_b_pad = jnp.zeros((1, Vp), jnp.float32).at[:, :V].set(fc_b)

    weights = (e_wqkv, e_wo, e_bo, e_g1, e_bn1, e_g2, e_bn2, e_w1, e_b1, e_w2, e_b2,
               s_wqkv, s_wo, s_bo, d_g0, d_bn0,
               c_wqkv, c_wo, c_bo, d_g1, d_bn1, d_g2, d_bn2, d_w1, d_b1, d_w2, d_b2,
               fc_w_pad, fc_b_pad)

    out_pad = transformer_forward_call(enc_in, dec_in, src_key_mask, weights,
                                       heads=heads, head_dim=head_dim,
                                       num_layers=num_layers)
    return out_pad[:, :, :V]


# ----------------------------------------------------------------------------
# Main
# ----------------------------------------------------------------------------
if __name__ == "__main__":
    SRC_VOCAB = 50
    TRG_VOCAB = 48
    SRC_PAD = 0
    EMBED = 32
    HEADS = 4
    LAYERS = 2
    FWD_EXP = 4
    MAX_LEN = 16
    N = 2
    L_SRC = 8
    L_TRG = 8

    root = jax.random.PRNGKey(0)
    k_par, k_src, k_trg = jax.random.split(root, 3)
    params = init_transformer(k_par, SRC_VOCAB, TRG_VOCAB, EMBED, LAYERS,
                              HEADS, FWD_EXP, MAX_LEN)

    src = jax.random.randint(k_src, (N, L_SRC), 1, SRC_VOCAB)
    trg = jax.random.randint(k_trg, (N, L_TRG), 1, TRG_VOCAB)
    # include some padding tokens so the src mask actually does something
    src = src.at[:, -2:].set(SRC_PAD)

    fwd = jax.jit(functools.partial(transformer_fwd, src_pad_idx=SRC_PAD,
                                    heads=HEADS, embed_size=EMBED,
                                    num_layers=LAYERS))
    out = fwd(params, src, trg)
    out = jax.block_until_ready(out)

    assert out.shape == (N, L_TRG, TRG_VOCAB)
    assert bool(jnp.all(jnp.isfinite(out)))
    print("KERNEL_OK")
</pallas_src>

<mosaic_0001>
module attributes {stable_mosaic.version = 11 : i64} {
  func.func @transformer_kernel(%arg0: i32, %arg1: memref<1x8x32xf32, #tpu.memory_space<vmem>>, %arg2: memref<1x8x32xf32, #tpu.memory_space<vmem>>, %arg3: memref<1x1x8xf32, #tpu.memory_space<vmem>>, %arg4: memref<2x32x96xf32, #tpu.memory_space<vmem>>, %arg5: memref<2x32x32xf32, #tpu.memory_space<vmem>>, %arg6: memref<2x1x32xf32, #tpu.memory_space<vmem>>, %arg7: memref<2x1x32xf32, #tpu.memory_space<vmem>>, %arg8: memref<2x1x32xf32, #tpu.memory_space<vmem>>, %arg9: memref<2x1x32xf32, #tpu.memory_space<vmem>>, %arg10: memref<2x1x32xf32, #tpu.memory_space<vmem>>, %arg11: memref<2x32x128xf32, #tpu.memory_space<vmem>>, %arg12: memref<2x1x128xf32, #tpu.memory_space<vmem>>, %arg13: memref<2x128x32xf32, #tpu.memory_space<vmem>>, %arg14: memref<2x1x32xf32, #tpu.memory_space<vmem>>, %arg15: memref<2x32x96xf32, #tpu.memory_space<vmem>>, %arg16: memref<2x32x32xf32, #tpu.memory_space<vmem>>, %arg17: memref<2x1x32xf32, #tpu.memory_space<vmem>>, %arg18: memref<2x1x32xf32, #tpu.memory_space<vmem>>, %arg19: memref<2x1x32xf32, #tpu.memory_space<vmem>>, %arg20: memref<2x32x96xf32, #tpu.memory_space<vmem>>, %arg21: memref<2x32x32xf32, #tpu.memory_space<vmem>>, %arg22: memref<2x1x32xf32, #tpu.memory_space<vmem>>, %arg23: memref<2x1x32xf32, #tpu.memory_space<vmem>>, %arg24: memref<2x1x32xf32, #tpu.memory_space<vmem>>, %arg25: memref<2x1x32xf32, #tpu.memory_space<vmem>>, %arg26: memref<2x1x32xf32, #tpu.memory_space<vmem>>, %arg27: memref<2x32x128xf32, #tpu.memory_space<vmem>>, %arg28: memref<2x1x128xf32, #tpu.memory_space<vmem>>, %arg29: memref<2x128x32xf32, #tpu.memory_space<vmem>>, %arg30: memref<2x1x32xf32, #tpu.memory_space<vmem>>, %arg31: memref<32x128xf32, #tpu.memory_space<vmem>>, %arg32: memref<1x128xf32, #tpu.memory_space<vmem>>, %arg33: memref<1x8x128xf32, #tpu.memory_space<vmem>>) attributes {dimension_semantics = [#tpu.dimension_semantics<parallel>], iteration_bounds = array<i64: 2>, scalar_prefetch = 0 : i64, scratch_operands = 0 : i64, tpu.core_type = #tpu.core_type<tc>, window_params = [{transform_indices = @transform_0, window_bounds = array<i64: 1, 8, 32>}, {transform_indices = @transform_1, window_bounds = array<i64: 1, 8, 32>}, {transform_indices = @transform_2, window_bounds = array<i64: 1, 1, 8>}, {pipeline_mode = #tpu.pipeline_mode<synchronous>, transform_indices = @transform_3, window_bounds = array<i64: 2, 32, 96>}, {pipeline_mode = #tpu.pipeline_mode<synchronous>, transform_indices = @transform_4, window_bounds = array<i64: 2, 32, 32>}, {pipeline_mode = #tpu.pipeline_mode<synchronous>, transform_indices = @transform_5, window_bounds = array<i64: 2, 1, 32>}, {pipeline_mode = #tpu.pipeline_mode<synchronous>, transform_indices = @transform_6, window_bounds = array<i64: 2, 1, 32>}, {pipeline_mode = #tpu.pipeline_mode<synchronous>, transform_indices = @transform_7, window_bounds = array<i64: 2, 1, 32>}, {pipeline_mode = #tpu.pipeline_mode<synchronous>, transform_indices = @transform_8, window_bounds = array<i64: 2, 1, 32>}, {pipeline_mode = #tpu.pipeline_mode<synchronous>, transform_indices = @transform_9, window_bounds = array<i64: 2, 1, 32>}, {pipeline_mode = #tpu.pipeline_mode<synchronous>, transform_indices = @transform_10, window_bounds = array<i64: 2, 32, 128>}, {pipeline_mode = #tpu.pipeline_mode<synchronous>, transform_indices = @transform_11, window_bounds = array<i64: 2, 1, 128>}, {pipeline_mode = #tpu.pipeline_mode<synchronous>, transform_indices = @transform_12, window_bounds = array<i64: 2, 128, 32>}, {pipeline_mode = #tpu.pipeline_mode<synchronous>, transform_indices = @transform_13, window_bounds = array<i64: 2, 1, 32>}, {pipeline_mode = #tpu.pipeline_mode<synchronous>, transform_indices = @transform_14, window_bounds = array<i64: 2, 32, 96>}, {pipeline_mode = #tpu.pipeline_mode<synchronous>, transform_indices = @transform_15, window_bounds = array<i64: 2, 32, 32>}, {pipeline_mode = #tpu.pipeline_mode<synchronous>, transform_indices = @transform_16, window_bounds = array<i64: 2, 1, 32>}, {pipeline_mode = #tpu.pipeline_mode<synchronous>, transform_indices = @transform_17, window_bounds = array<i64: 2, 1, 32>}, {pipeline_mode = #tpu.pipeline_mode<synchronous>, transform_indices = @transform_18, window_bounds = array<i64: 2, 1, 32>}, {pipeline_mode = #tpu.pipeline_mode<synchronous>, transform_indices = @transform_19, window_bounds = array<i64: 2, 32, 96>}, {pipeline_mode = #tpu.pipeline_mode<synchronous>, transform_indices = @transform_20, window_bounds = array<i64: 2, 32, 32>}, {pipeline_mode = #tpu.pipeline_mode<synchronous>, transform_indices = @transform_21, window_bounds = array<i64: 2, 1, 32>}, {pipeline_mode = #tpu.pipeline_mode<synchronous>, transform_indices = @transform_22, window_bounds = array<i64: 2, 1, 32>}, {pipeline_mode = #tpu.pipeline_mode<synchronous>, transform_indices = @transform_23, window_bounds = array<i64: 2, 1, 32>}, {pipeline_mode = #tpu.pipeline_mode<synchronous>, transform_indices = @transform_24, window_bounds = array<i64: 2, 1, 32>}, {pipeline_mode = #tpu.pipeline_mode<synchronous>, transform_indices = @transform_25, window_bounds = array<i64: 2, 1, 32>}, {pipeline_mode = #tpu.pipeline_mode<synchronous>, transform_indices = @transform_26, window_bounds = array<i64: 2, 32, 128>}, {pipeline_mode = #tpu.pipeline_mode<synchronous>, transform_indices = @transform_27, window_bounds = array<i64: 2, 1, 128>}, {pipeline_mode = #tpu.pipeline_mode<synchronous>, transform_indices = @transform_28, window_bounds = array<i64: 2, 128, 32>}, {pipeline_mode = #tpu.pipeline_mode<synchronous>, transform_indices = @transform_29, window_bounds = array<i64: 2, 1, 32>}, {pipeline_mode = #tpu.pipeline_mode<synchronous>, transform_indices = @transform_30, window_bounds = array<i64: 32, 128>}, {pipeline_mode = #tpu.pipeline_mode<synchronous>, transform_indices = @transform_31, window_bounds = array<i64: 1, 128>}, {transform_indices = @transform_32, window_bounds = array<i64: 1, 8, 128>}]} {
    %c0 = arith.constant 0 : index
    %c0_0 = arith.constant 0 : index
    %c0_1 = arith.constant 0 : index
    %0 = vector.load %arg3[%c0, %c0_0, %c0_1] : memref<1x1x8xf32, #tpu.memory_space<vmem>>, vector<1x1x8xf32>
    %1 = vector.shape_cast %0 : vector<1x1x8xf32> to vector<1x8xf32>
    %cst = arith.constant 5.000000e-01 : f32
    %2 = vector.broadcast %cst : f32 to vector<1x8xf32>
    %3 = arith.cmpf ogt, %1, %2 : vector<1x8xf32>
    %c0_2 = arith.constant 0 : index
    %c0_3 = arith.constant 0 : index
    %c0_4 = arith.constant 0 : index
    %4 = vector.load %arg1[%c0_2, %c0_3, %c0_4] : memref<1x8x32xf32, #tpu.memory_space<vmem>>, vector<1x8x32xf32>
    %5 = vector.shape_cast %4 : vector<1x8x32xf32> to vector<8x32xf32>
    %c0_5 = arith.constant 0 : index
    %c0_6 = arith.constant 0 : index
    %c0_7 = arith.constant 0 : index
    %6 = vector.load %arg4[%c0_5, %c0_6, %c0_7] : memref<2x32x96xf32, #tpu.memory_space<vmem>>, vector<1x32x96xf32>
    %7 = vector.shape_cast %6 : vector<1x32x96xf32> to vector<32x96xf32>
    %c0_8 = arith.constant 0 : index
    %c0_9 = arith.constant 0 : index
    %c0_10 = arith.constant 0 : index
    %8 = vector.load %arg5[%c0_8, %c0_9, %c0_10] : memref<2x32x32xf32, #tpu.memory_space<vmem>>, vector<1x32x32xf32>
    %9 = vector.shape_cast %8 : vector<1x32x32xf32> to vector<32x32xf32>
    %c0_11 = arith.constant 0 : index
    %c0_12 = arith.constant 0 : index
    %c0_13 = arith.constant 0 : index
    %10 = vector.load %arg6[%c0_11, %c0_12, %c0_13] : memref<2x1x32xf32, #tpu.memory_space<vmem>>, vector<1x1x32xf32>
    %11 = vector.shape_cast %10 : vector<1x1x32xf32> to vector<1x32xf32>
    %cst_14 = arith.constant dense<0.000000e+00> : vector<8x96xf32>
    %12 = tpu.matmul %5, %7, %cst_14 {dimension_numbers = #tpu.dot_dimension_numbers<[1], [0], [0], [1], [0, 0, 1, 1], [], []>} : vector<8x32xf32>, vector<32x96xf32>, vector<8x96xf32> -> vector<8x96xf32>
    %13 = vector.extract_strided_slice %12 {offsets = [0, 0], sizes = [8, 32], strides = [1, 1]} : vector<8x96xf32> to vector<8x32xf32>
    %14 = vector.extract_strided_slice %12 {offsets = [0, 32], sizes = [8, 32], strides = [1, 1]} : vector<8x96xf32> to vector<8x32xf32>
    %15 = vector.extract_strided_slice %12 {offsets = [0, 64], sizes = [8, 32], strides = [1, 1]} : vector<8x96xf32> to vector<8x32xf32>
    %16 = vector.extract_strided_slice %13 {offsets = [0, 0], sizes = [8, 8], strides = [1, 1]} : vector<8x32xf32> to vector<8x8xf32>
    %17 = vector.extract_strided_slice %14 {offsets = [0, 0], sizes = [8, 8], strides = [1, 1]} : vector<8x32xf32> to vector<8x8xf32>
    %cst_15 = arith.constant dense<0.000000e+00> : vector<8x8xf32>
    %18 = tpu.matmul %16, %17, %cst_15 {dimension_numbers = #tpu.dot_dimension_numbers<[1], [1], [0], [0], [0, 0, 1, 0], [], []>} : vector<8x8xf32>, vector<8x8xf32>, vector<8x8xf32> -> vector<8x8xf32>
    %19 = vector.extract_strided_slice %13 {offsets = [0, 8], sizes = [8, 8], strides = [1, 1]} : vector<8x32xf32> to vector<8x8xf32>
    %20 = vector.extract_strided_slice %14 {offsets = [0, 8], sizes = [8, 8], strides = [1, 1]} : vector<8x32xf32> to vector<8x8xf32>
    %cst_16 = arith.constant dense<0.000000e+00> : vector<8x8xf32>
    %21 = tpu.matmul %19, %20, %cst_16 {dimension_numbers = #tpu.dot_dimension_numbers<[1], [1], [0], [0], [0, 0, 1, 0], [], []>} : vector<8x8xf32>, vector<8x8xf32>, vector<8x8xf32> -> vector<8x8xf32>
    %22 = vector.extract_strided_slice %13 {offsets = [0, 16], sizes = [8, 8], strides = [1, 1]} : vector<8x32xf32> to vector<8x8xf32>
    %23 = vector.extract_strided_slice %14 {offsets = [0, 16], sizes = [8, 8], strides = [1, 1]} : vector<8x32xf32> to vector<8x8xf32>
    %cst_17 = arith.constant dense<0.000000e+00> : vector<8x8xf32>
    %24 = tpu.matmul %22, %23, %cst_17 {dimension_numbers = #tpu.dot_dimension_numbers<[1], [1], [0], [0], [0, 0, 1, 0], [], []>} : vector<8x8xf32>, vector<8x8xf32>, vector<8x8xf32> -> vector<8x8xf32>
    %25 = vector.extract_strided_slice %13 {offsets = [0, 24], sizes = [8, 8], strides = [1, 1]} : vector<8x32xf32> to vector<8x8xf32>
    %26 = vector.extract_strided_slice %14 {offsets = [0, 24], sizes = [8, 8], strides = [1, 1]} : vector<8x32xf32> to vector<8x8xf32>
    %cst_18 = arith.constant dense<0.000000e+00> : vector<8x8xf32>
    %27 = tpu.matmul %25, %26, %cst_18 {dimension_numbers = #tpu.dot_dimension_numbers<[1], [1], [0], [0], [0, 0, 1, 0], [], []>} : vector<8x8xf32>, vector<8x8xf32>, vector<8x8xf32> -> vector<8x8xf32>
    %28 = tpu.concatenate %18, %21, %24, %27 in 0 : vector<8x8xf32>, vector<8x8xf32>, vector<8x8xf32>, vector<8x8xf32> -> vector<32x8xf32>
    %cst_19 = arith.constant -1.000000e+20 : f32
    %29 = vector.shape_cast %3 : vector<1x8xi1> to vector<1x8xi1>
    %30 = vector.broadcast %29 : vector<1x8xi1> to vector<32x8xi1>
    %31 = vector.broadcast %cst_19 : f32 to vector<32x8xf32>
    %32 = arith.select %30, %28, %31 : vector<32x8xi1>, vector<32x8xf32>
    %cst_20 = arith.constant dense<0xFF800000> : vector<32xf32>
    %33 = vector.multi_reduction <maximumf>, %32, %cst_20 [1] : vector<32x8xf32> to vector<32xf32>
    %34 = vector.shape_cast %33 : vector<32xf32> to vector<32x1xf32>
    %35 = vector.broadcast %34 : vector<32x1xf32> to vector<32x8xf32>
    %36 = arith.subf %32, %35 : vector<32x8xf32>
    %37 = math.exp %36 : vector<32x8xf32>
    %cst_21 = arith.constant dense<0.000000e+00> : vector<32xf32>
    %38 = vector.multi_reduction <add>, %37, %cst_21 [1] : vector<32x8xf32> to vector<32xf32>
    %39 = vector.shape_cast %38 : vector<32xf32> to vector<32x1xf32>
    %40 = tpu.reciprocal %39 {approx = true} : vector<32x1xf32> -> vector<32x1xf32>
    %41 = vector.broadcast %40 : vector<32x1xf32> to vector<32x8xf32>
    %42 = arith.mulf %37, %41 : vector<32x8xf32>
    %43 = vector.extract_strided_slice %42 {offsets = [0, 0], sizes = [8, 8], strides = [1, 1]} : vector<32x8xf32> to vector<8x8xf32>
    %44 = vector.extract_strided_slice %15 {offsets = [0, 0], sizes = [8, 8], strides = [1, 1]} : vector<8x32xf32> to vector<8x8xf32>
    %cst_22 = arith.constant dense<0.000000e+00> : vector<8x8xf32>
    %45 = tpu.matmul %43, %44, %cst_22 {dimension_numbers = #tpu.dot_dimension_numbers<[1], [0], [0], [1], [0, 0, 1, 1], [], []>} : vector<8x8xf32>, vector<8x8xf32>, vector<8x8xf32> -> vector<8x8xf32>
    %46 = vector.extract_strided_slice %9 {offsets = [0, 0], sizes = [8, 32], strides = [1, 1]} : vector<32x32xf32> to vector<8x32xf32>
    %cst_23 = arith.constant dense<0.000000e+00> : vector<8x32xf32>
    %47 = tpu.matmul %45, %46, %cst_23 {dimension_numbers = #tpu.dot_dimension_numbers<[1], [0], [0], [1], [0, 0, 1, 1], [], []>} : vector<8x8xf32>, vector<8x32xf32>, vector<8x32xf32> -> vector<8x32xf32>
    %48 = vector.broadcast %11 : vector<1x32xf32> to vector<8x32xf32>
    %49 = arith.addf %48, %47 : vector<8x32xf32>
    %50 = vector.extract_strided_slice %42 {offsets = [8, 0], sizes = [8, 8], strides = [1, 1]} : vector<32x8xf32> to vector<8x8xf32>
    %51 = vector.extract_strided_slice %15 {offsets = [0, 8], sizes = [8, 8], strides = [1, 1]} : vector<8x32xf32> to vector<8x8xf32>
    %cst_24 = arith.constant dense<0.000000e+00> : vector<8x8xf32>
    %52 = tpu.matmul %50, %51, %cst_24 {dimension_numbers = #tpu.dot_dimension_numbers<[1], [0], [0], [1], [0, 0, 1, 1], [], []>} : vector<8x8xf32>, vector<8x8xf32>, vector<8x8xf32> -> vector<8x8xf32>
    %53 = vector.extract_strided_slice %9 {offsets = [8, 0], sizes = [8, 32], strides = [1, 1]} : vector<32x32xf32> to vector<8x32xf32>
    %cst_25 = arith.constant dense<0.000000e+00> : vector<8x32xf32>
    %54 = tpu.matmul %52, %53, %cst_25 {dimension_numbers = #tpu.dot_dimension_numbers<[1], [0], [0], [1], [0, 0, 1, 1], [], []>} : vector<8x8xf32>, vector<8x32xf32>, vector<8x32xf32> -> vector<8x32xf32>
    %55 = arith.addf %49, %54 : vector<8x32xf32>
    %56 = vector.extract_strided_slice %42 {offsets = [16, 0], sizes = [8, 8], strides = [1, 1]} : vector<32x8xf32> to vector<8x8xf32>
    %57 = vector.extract_strided_slice %15 {offsets = [0, 16], sizes = [8, 8], strides = [1, 1]} : vector<8x32xf32> to vector<8x8xf32>
    %cst_26 = arith.constant dense<0.000000e+00> : vector<8x8xf32>
    %58 = tpu.matmul %56, %57, %cst_26 {dimension_numbers = #tpu.dot_dimension_numbers<[1], [0], [0], [1], [0, 0, 1, 1], [], []>} : vector<8x8xf32>, vector<8x8xf32>, vector<8x8xf32> -> vector<8x8xf32>
    %59 = vector.extract_strided_slice %9 {offsets = [16, 0], sizes = [8, 32], strides = [1, 1]} : vector<32x32xf32> to vector<8x32xf32>
    %cst_27 = arith.constant dense<0.000000e+00> : vector<8x32xf32>
    %60 = tpu.matmul %58, %59, %cst_27 {dimension_numbers = #tpu.dot_dimension_numbers<[1], [0], [0], [1], [0, 0, 1, 1], [], []>} : vector<8x8xf32>, vector<8x32xf32>, vector<8x32xf32> -> vector<8x32xf32>
    %61 = arith.addf %55, %60 : vector<8x32xf32>
    %62 = vector.extract_strided_slice %42 {offsets = [24, 0], sizes = [8, 8], strides = [1, 1]} : vector<32x8xf32> to vector<8x8xf32>
    %63 = vector.extract_strided_slice %15 {offsets = [0, 24], sizes = [8, 8], strides = [1, 1]} : vector<8x32xf32> to vector<8x8xf32>
    %cst_28 = arith.constant dense<0.000000e+00> : vector<8x8xf32>
    %64 = tpu.matmul %62, %63, %cst_28 {dimension_numbers = #tpu.dot_dimension_numbers<[1], [0], [0], [1], [0, 0, 1, 1], [], []>} : vector<8x8xf32>, vector<8x8xf32>, vector<8x8xf32> -> vector<8x8xf32>
    %65 = vector.extract_strided_slice %9 {offsets = [24, 0], sizes = [8, 32], strides = [1, 1]} : vector<32x32xf32> to vector<8x32xf32>
    %cst_29 = arith.constant dense<0.000000e+00> : vector<8x32xf32>
    %66 = tpu.matmul %64, %65, %cst_29 {dimension_numbers = #tpu.dot_dimension_numbers<[1], [0], [0], [1], [0, 0, 1, 1], [], []>} : vector<8x8xf32>, vector<8x32xf32>, vector<8x32xf32> -> vector<8x32xf32>
    %67 = arith.addf %61, %66 : vector<8x32xf32>
    %c0_30 = arith.constant 0 : index
    %c0_31 = arith.constant 0 : index
    %c0_32 = arith.constant 0 : index
    %68 = vector.load %arg7[%c0_30, %c0_31, %c0_32] : memref<2x1x32xf32, #tpu.memory_space<vmem>>, vector<1x1x32xf32>
    %69 = vector.shape_cast %68 : vector<1x1x32xf32> to vector<1x32xf32>
    %c0_33 = arith.constant 0 : index
    %c0_34 = arith.constant 0 : index
    %c0_35 = arith.constant 0 : index
    %70 = vector.load %arg8[%c0_33, %c0_34, %c0_35] : memref<2x1x32xf32, #tpu.memory_space<vmem>>, vector<1x1x32xf32>
    %71 = vector.shape_cast %70 : vector<1x1x32xf32> to vector<1x32xf32>
    %72 = arith.addf %67, %5 : vector<8x32xf32>
    %cst_36 = arith.constant dense<0.000000e+00> : vector<8xf32>
    %73 = vector.multi_reduction <add>, %72, %cst_36 [1] : vector<8x32xf32> to vector<8xf32>
    %74 = vector.shape_cast %73 : vector<8xf32> to vector<8x1xf32>
    %cst_37 = arith.constant 3.200000e+01 : f32
    %75 = vector.broadcast %cst_37 : f32 to vector<8x1xf32>
    %76 = arith.divf %74, %75 : vector<8x1xf32>
    %77 = vector.broadcast %76 : vector<8x1xf32> to vector<8x32xf32>
    %78 = arith.subf %72, %77 : vector<8x32xf32>
    %79 = arith.mulf %78, %78 : vector<8x32xf32>
    %cst_38 = arith.constant dense<0.000000e+00> : vector<8xf32>
    %80 = vector.multi_reduction <add>, %79, %cst_38 [1] : vector<8x32xf32> to vector<8xf32>
    %81 = vector.shape_cast %80 : vector<8xf32> to vector<8x1xf32>
    %cst_39 = arith.constant 3.200000e+01 : f32
    %82 = vector.broadcast %cst_39 : f32 to vector<8x1xf32>
    %83 = arith.divf %81, %82 : vector<8x1xf32>
    %84 = vector.broadcast %76 : vector<8x1xf32> to vector<8x32xf32>
    %85 = arith.subf %72, %84 : vector<8x32xf32>
    %cst_40 = arith.constant 9.99999974E-6 : f32
    %86 = vector.broadcast %cst_40 : f32 to vector<8x1xf32>
    %87 = arith.addf %83, %86 : vector<8x1xf32>
    %88 = math.rsqrt %87 : vector<8x1xf32>
    %89 = vector.broadcast %88 : vector<8x1xf32> to vector<8x32xf32>
    %90 = arith.mulf %85, %89 : vector<8x32xf32>
    %91 = vector.broadcast %69 : vector<1x32xf32> to vector<8x32xf32>
    %92 = arith.mulf %90, %91 : vector<8x32xf32>
    %93 = vector.broadcast %71 : vector<1x32xf32> to vector<8x32xf32>
    %94 = arith.addf %92, %93 : vector<8x32xf32>
    %c0_41 = arith.constant 0 : index
    %c0_42 = arith.constant 0 : index
    %c0_43 = arith.constant 0 : index
    %95 = vector.load %arg11[%c0_41, %c0_42, %c0_43] : memref<2x32x128xf32, #tpu.memory_space<vmem>>, vector<1x32x128xf32>
    %96 = vector.shape_cast %95 : vector<1x32x128xf32> to vector<32x128xf32>
    %c0_44 = arith.constant 0 : index
    %c0_45 = arith.constant 0 : index
    %c0_46 = arith.constant 0 : index
    %97 = vector.load %arg12[%c0_44, %c0_45, %c0_46] : memref<2x1x128xf32, #tpu.memory_space<vmem>>, vector<1x1x128xf32>
    %98 = vector.shape_cast %97 : vector<1x1x128xf32> to vector<1x128xf32>
    %c0_47 = arith.constant 0 : index
    %c0_48 = arith.constant 0 : index
    %c0_49 = arith.constant 0 : index
    %99 = vector.load %arg13[%c0_47, %c0_48, %c0_49] : memref<2x128x32xf32, #tpu.memory_space<vmem>>, vector<1x128x32xf32>
    %100 = vector.shape_cast %99 : vector<1x128x32xf32> to vector<128x32xf32>
    %c0_50 = arith.constant 0 : index
    %c0_51 = arith.constant 0 : index
    %c0_52 = arith.constant 0 : index
    %101 = vector.load %arg14[%c0_50, %c0_51, %c0_52] : memref<2x1x32xf32, #tpu.memory_space<vmem>>, vector<1x1x32xf32>
    %102 = vector.shape_cast %101 : vector<1x1x32xf32> to vector<1x32xf32>
    %cst_53 = arith.constant dense<0.000000e+00> : vector<8x128xf32>
    %103 = tpu.matmul %94, %96, %cst_53 {dimension_numbers = #tpu.dot_dimension_numbers<[1], [0], [0], [1], [0, 0, 1, 1], [], []>} : vector<8x32xf32>, vector<32x128xf32>, vector<8x128xf32> -> vector<8x128xf32>
    %104 = vector.broadcast %98 : vector<1x128xf32> to vector<8x128xf32>
    %105 = arith.addf %103, %104 : vector<8x128xf32>
    %cst_54 = arith.constant 0.000000e+00 : f32
    %106 = vector.broadcast %cst_54 : f32 to vector<8x128xf32>
    %107 = arith.maximumf %105, %106 : vector<8x128xf32>
    %cst_55 = arith.constant dense<0.000000e+00> : vector<8x32xf32>
    %108 = tpu.matmul %107, %100, %cst_55 {dimension_numbers = #tpu.dot_dimension_numbers<[1], [0], [0], [1], [0, 0, 1, 1], [], []>} : vector<8x128xf32>, vector<128x32xf32>, vector<8x32xf32> -> vector<8x32xf32>
    %109 = vector.broadcast %102 : vector<1x32xf32> to vector<8x32xf32>
    %110 = arith.addf %108, %109 : vector<8x32xf32>
    %c0_56 = arith.constant 0 : index
    %c0_57 = arith.constant 0 : index
    %c0_58 = arith.constant 0 : index
    %111 = vector.load %arg9[%c0_56, %c0_57, %c0_58] : memref<2x1x32xf32, #tpu.memory_space<vmem>>, vector<1x1x32xf32>
    %112 = vector.shape_cast %111 : vector<1x1x32xf32> to vector<1x32xf32>
    %c0_59 = arith.constant 0 : index
    %c0_60 = arith.constant 0 : index
    %c0_61 = arith.constant 0 : index
    %113 = vector.load %arg10[%c0_59, %c0_60, %c0_61] : memref<2x1x32xf32, #tpu.memory_space<vmem>>, vector<1x1x32xf32>
    %114 = vector.shape_cast %113 : vector<1x1x32xf32> to vector<1x32xf32>
    %115 = arith.addf %110, %94 : vector<8x32xf32>
    %cst_62 = arith.constant dense<0.000000e+00> : vector<8xf32>
    %116 = vector.multi_reduction <add>, %115, %cst_62 [1] : vector<8x32xf32> to vector<8xf32>
    %117 = vector.shape_cast %116 : vector<8xf32> to vector<8x1xf32>
    %cst_63 = arith.constant 3.200000e+01 : f32
    %118 = vector.broadcast %cst_63 : f32 to vector<8x1xf32>
    %119 = arith.divf %117, %118 : vector<8x1xf32>
    %120 = vector.broadcast %119 : vector<8x1xf32> to vector<8x32xf32>
    %121 = arith.subf %115, %120 : vector<8x32xf32>
    %122 = arith.mulf %121, %121 : vector<8x32xf32>
    %cst_64 = arith.constant dense<0.000000e+00> : vector<8xf32>
    %123 = vector.multi_reduction <add>, %122, %cst_64 [1] : vector<8x32xf32> to vector<8xf32>
    %124 = vector.shape_cast %123 : vector<8xf32> to vector<8x1xf32>
    %cst_65 = arith.constant 3.200000e+01 : f32
    %125 = vector.broadcast %cst_65 : f32 to vector<8x1xf32>
    %126 = arith.divf %124, %125 : vector<8x1xf32>
    %127 = vector.broadcast %119 : vector<8x1xf32> to vector<8x32xf32>
    %128 = arith.subf %115, %127 : vector<8x32xf32>
    %cst_66 = arith.constant 9.99999974E-6 : f32
    %129 = vector.broadcast %cst_66 : f32 to vector<8x1xf32>
    %130 = arith.addf %126, %129 : vector<8x1xf32>
    %131 = math.rsqrt %130 : vector<8x1xf32>
    %132 = vector.broadcast %131 : vector<8x1xf32> to vector<8x32xf32>
    %133 = arith.mulf %128, %132 : vector<8x32xf32>
    %134 = vector.broadcast %112 : vector<1x32xf32> to vector<8x32xf32>
    %135 = arith.mulf %133, %134 : vector<8x32xf32>
    %136 = vector.broadcast %114 : vector<1x32xf32> to vector<8x32xf32>
    %137 = arith.addf %135, %136 : vector<8x32xf32>
    %c1 = arith.constant 1 : index
    %c0_67 = arith.constant 0 : index
    %c0_68 = arith.constant 0 : index
    %138 = vector.load %arg4[%c1, %c0_67, %c0_68] : memref<2x32x96xf32, #tpu.memory_space<vmem>>, vector<1x32x96xf32>
    %139 = vector.shape_cast %138 : vector<1x32x96xf32> to vector<32x96xf32>
    %c1_69 = arith.constant 1 : index
    %c0_70 = arith.constant 0 : index
    %c0_71 = arith.constant 0 : index
    %140 = vector.load %arg5[%c1_69, %c0_70, %c0_71] : memref<2x32x32xf32, #tpu.memory_space<vmem>>, vector<1x32x32xf32>
    %141 = vector.shape_cast %140 : vector<1x32x32xf32> to vector<32x32xf32>
    %c1_72 = arith.constant 1 : index
    %c0_73 = arith.constant 0 : index
    %c0_74 = arith.constant 0 : index
    %142 = vector.load %arg6[%c1_72, %c0_73, %c0_74] : memref<2x1x32xf32, #tpu.memory_space<vmem>>, vector<1x1x32xf32>
    %143 = vector.shape_cast %142 : vector<1x1x32xf32> to vector<1x32xf32>
    %cst_75 = arith.constant dense<0.000000e+00> : vector<8x96xf32>
    %144 = tpu.matmul %137, %139, %cst_75 {dimension_numbers = #tpu.dot_dimension_numbers<[1], [0], [0], [1], [0, 0, 1, 1], [], []>} : vector<8x32xf32>, vector<32x96xf32>, vector<8x96xf32> -> vector<8x96xf32>
    %145 = vector.extract_strided_slice %144 {offsets = [0, 0], sizes = [8, 32], strides = [1, 1]} : vector<8x96xf32> to vector<8x32xf32>
    %146 = vector.extract_strided_slice %144 {offsets = [0, 32], sizes = [8, 32], strides = [1, 1]} : vector<8x96xf32> to vector<8x32xf32>
    %147 = vector.extract_strided_slice %144 {offsets = [0, 64], sizes = [8, 32], strides = [1, 1]} : vector<8x96xf32> to vector<8x32xf32>
    %148 = vector.extract_strided_slice %145 {offsets = [0, 0], sizes = [8, 8], strides = [1, 1]} : vector<8x32xf32> to vector<8x8xf32>
    %149 = vector.extract_strided_slice %146 {offsets = [0, 0], sizes = [8, 8], strides = [1, 1]} : vector<8x32xf32> to vector<8x8xf32>
    %cst_76 = arith.constant dense<0.000000e+00> : vector<8x8xf32>
    %150 = tpu.matmul %148, %149, %cst_76 {dimension_numbers = #tpu.dot_dimension_numbers<[1], [1], [0], [0], [0, 0, 1, 0], [], []>} : vector<8x8xf32>, vector<8x8xf32>, vector<8x8xf32> -> vector<8x8xf32>
    %151 = vector.extract_strided_slice %145 {offsets = [0, 8], sizes = [8, 8], strides = [1, 1]} : vector<8x32xf32> to vector<8x8xf32>
    %152 = vector.extract_strided_slice %146 {offsets = [0, 8], sizes = [8, 8], strides = [1, 1]} : vector<8x32xf32> to vector<8x8xf32>
    %cst_77 = arith.constant dense<0.000000e+00> : vector<8x8xf32>
    %153 = tpu.matmul %151, %152, %cst_77 {dimension_numbers = #tpu.dot_dimension_numbers<[1], [1], [0], [0], [0, 0, 1, 0], [], []>} : vector<8x8xf32>, vector<8x8xf32>, vector<8x8xf32> -> vector<8x8xf32>
    %154 = vector.extract_strided_slice %145 {offsets = [0, 16], sizes = [8, 8], strides = [1, 1]} : vector<8x32xf32> to vector<8x8xf32>
    %155 = vector.extract_strided_slice %146 {offsets = [0, 16], sizes = [8, 8], strides = [1, 1]} : vector<8x32xf32> to vector<8x8xf32>
    %cst_78 = arith.constant dense<0.000000e+00> : vector<8x8xf32>
    %156 = tpu.matmul %154, %155, %cst_78 {dimension_numbers = #tpu.dot_dimension_numbers<[1], [1], [0], [0], [0, 0, 1, 0], [], []>} : vector<8x8xf32>, vector<8x8xf32>, vector<8x8xf32> -> vector<8x8xf32>
    %157 = vector.extract_strided_slice %145 {offsets = [0, 24], sizes = [8, 8], strides = [1, 1]} : vector<8x32xf32> to vector<8x8xf32>
    %158 = vector.extract_strided_slice %146 {offsets = [0, 24], sizes = [8, 8], strides = [1, 1]} : vector<8x32xf32> to vector<8x8xf32>
    %cst_79 = arith.constant dense<0.000000e+00> : vector<8x8xf32>
    %159 = tpu.matmul %157, %158, %cst_79 {dimension_numbers = #tpu.dot_dimension_numbers<[1], [1], [0], [0], [0, 0, 1, 0], [], []>} : vector<8x8xf32>, vector<8x8xf32>, vector<8x8xf32> -> vector<8x8xf32>
    %160 = tpu.concatenate %150, %153, %156, %159 in 0 : vector<8x8xf32>, vector<8x8xf32>, vector<8x8xf32>, vector<8x8xf32> -> vector<32x8xf32>
    %cst_80 = arith.constant -1.000000e+20 : f32
    %161 = vector.shape_cast %3 : vector<1x8xi1> to vector<1x8xi1>
    %162 = vector.broadcast %161 : vector<1x8xi1> to vector<32x8xi1>
    %163 = vector.broadcast %cst_80 : f32 to vector<32x8xf32>
    %164 = arith.select %162, %160, %163 : vector<32x8xi1>, vector<32x8xf32>
    %cst_81 = arith.constant dense<0xFF800000> : vector<32xf32>
    %165 = vector.multi_reduction <maximumf>, %164, %cst_81 [1] : vector<32x8xf32> to vector<32xf32>
    %166 = vector.shape_cast %165 : vector<32xf32> to vector<32x1xf32>
    %167 = vector.broadcast %166 : vector<32x1xf32> to vector<32x8xf32>
    %168 = arith.subf %164, %167 : vector<32x8xf32>
    %169 = math.exp %168 : vector<32x8xf32>
    %cst_82 = arith.constant dense<0.000000e+00> : vector<32xf32>
    %170 = vector.multi_reduction <add>, %169, %cst_82 [1] : vector<32x8xf32> to vector<32xf32>
    %171 = vector.shape_cast %170 : vector<32xf32> to vector<32x1xf32>
    %172 = tpu.reciprocal %171 {approx = true} : vector<32x1xf32> -> vector<32x1xf32>
    %173 = vector.broadcast %172 : vector<32x1xf32> to vector<32x8xf32>
    %174 = arith.mulf %169, %173 : vector<32x8xf32>
    %175 = vector.extract_strided_slice %174 {offsets = [0, 0], sizes = [8, 8], strides = [1, 1]} : vector<32x8xf32> to vector<8x8xf32>
    %176 = vector.extract_strided_slice %147 {offsets = [0, 0], sizes = [8, 8], strides = [1, 1]} : vector<8x32xf32> to vector<8x8xf32>
    %cst_83 = arith.constant dense<0.000000e+00> : vector<8x8xf32>
    %177 = tpu.matmul %175, %176, %cst_83 {dimension_numbers = #tpu.dot_dimension_numbers<[1], [0], [0], [1], [0, 0, 1, 1], [], []>} : vector<8x8xf32>, vector<8x8xf32>, vector<8x8xf32> -> vector<8x8xf32>
    %178 = vector.extract_strided_slice %141 {offsets = [0, 0], sizes = [8, 32], strides = [1, 1]} : vector<32x32xf32> to vector<8x32xf32>
    %cst_84 = arith.constant dense<0.000000e+00> : vector<8x32xf32>
    %179 = tpu.matmul %177, %178, %cst_84 {dimension_numbers = #tpu.dot_dimension_numbers<[1], [0], [0], [1], [0, 0, 1, 1], [], []>} : vector<8x8xf32>, vector<8x32xf32>, vector<8x32xf32> -> vector<8x32xf32>
    %180 = vector.broadcast %143 : vector<1x32xf32> to vector<8x32xf32>
    %181 = arith.addf %180, %179 : vector<8x32xf32>
    %182 = vector.extract_strided_slice %174 {offsets = [8, 0], sizes = [8, 8], strides = [1, 1]} : vector<32x8xf32> to vector<8x8xf32>
    %183 = vector.extract_strided_slice %147 {offsets = [0, 8], sizes = [8, 8], strides = [1, 1]} : vector<8x32xf32> to vector<8x8xf32>
    %cst_85 = arith.constant dense<0.000000e+00> : vector<8x8xf32>
    %184 = tpu.matmul %182, %183, %cst_85 {dimension_numbers = #tpu.dot_dimension_numbers<[1], [0], [0], [1], [0, 0, 1, 1], [], []>} : vector<8x8xf32>, vector<8x8xf32>, vector<8x8xf32> -> vector<8x8xf32>
    %185 = vector.extract_strided_slice %141 {offsets = [8, 0], sizes = [8, 32], strides = [1, 1]} : vector<32x32xf32> to vector<8x32xf32>
    %cst_86 = arith.constant dense<0.000000e+00> : vector<8x32xf32>
    %186 = tpu.matmul %184, %185, %cst_86 {dimension_numbers = #tpu.dot_dimension_numbers<[1], [0], [0], [1], [0, 0, 1, 1], [], []>} : vector<8x8xf32>, vector<8x32xf32>, vector<8x32xf32> -> vector<8x32xf32>
    %187 = arith.addf %181, %186 : vector<8x32xf32>
    %188 = vector.extract_strided_slice %174 {offsets = [16, 0], sizes = [8, 8], strides = [1, 1]} : vector<32x8xf32> to vector<8x8xf32>
    %189 = vector.extract_strided_slice %147 {offsets = [0, 16], sizes = [8, 8], strides = [1, 1]} : vector<8x32xf32> to vector<8x8xf32>
    %cst_87 = arith.constant dense<0.000000e+00> : vector<8x8xf32>
    %190 = tpu.matmul %188, %189, %cst_87 {dimension_numbers = #tpu.dot_dimension_numbers<[1], [0], [0], [1], [0, 0, 1, 1], [], []>} : vector<8x8xf32>, vector<8x8xf32>, vector<8x8xf32> -> vector<8x8xf32>
    %191 = vector.extract_strided_slice %141 {offsets = [16, 0], sizes = [8, 32], strides = [1, 1]} : vector<32x32xf32> to vector<8x32xf32>
    %cst_88 = arith.constant dense<0.000000e+00> : vector<8x32xf32>
    %192 = tpu.matmul %190, %191, %cst_88 {dimension_numbers = #tpu.dot_dimension_numbers<[1], [0], [0], [1], [0, 0, 1, 1], [], []>} : vector<8x8xf32>, vector<8x32xf32>, vector<8x32xf32> -> vector<8x32xf32>
    %193 = arith.addf %187, %192 : vector<8x32xf32>
    %194 = vector.extract_strided_slice %174 {offsets = [24, 0], sizes = [8, 8], strides = [1, 1]} : vector<32x8xf32> to vector<8x8xf32>
    %195 = vector.extract_strided_slice %147 {offsets = [0, 24], sizes = [8, 8], strides = [1, 1]} : vector<8x32xf32> to vector<8x8xf32>
    %cst_89 = arith.constant dense<0.000000e+00> : vector<8x8xf32>
    %196 = tpu.matmul %194, %195, %cst_89 {dimension_numbers = #tpu.dot_dimension_numbers<[1], [0], [0], [1], [0, 0, 1, 1], [], []>} : vector<8x8xf32>, vector<8x8xf32>, vector<8x8xf32> -> vector<8x8xf32>
    %197 = vector.extract_strided_slice %141 {offsets = [24, 0], sizes = [8, 32], strides = [1, 1]} : vector<32x32xf32> to vector<8x32xf32>
    %cst_90 = arith.constant dense<0.000000e+00> : vector<8x32xf32>
    %198 = tpu.matmul %196, %197, %cst_90 {dimension_numbers = #tpu.dot_dimension_numbers<[1], [0], [0], [1], [0, 0, 1, 1], [], []>} : vector<8x8xf32>, vector<8x32xf32>, vector<8x32xf32> -> vector<8x32xf32>
    %199 = arith.addf %193, %198 : vector<8x32xf32>
    %c1_91 = arith.constant 1 : index
    %c0_92 = arith.constant 0 : index
    %c0_93 = arith.constant 0 : index
    %200 = vector.load %arg7[%c1_91, %c0_92, %c0_93] : memref<2x1x32xf32, #tpu.memory_space<vmem>>, vector<1x1x32xf32>
    %201 = vector.shape_cast %200 : vector<1x1x32xf32> to vector<1x32xf32>
    %c1_94 = arith.constant 1 : index
    %c0_95 = arith.constant 0 : index
    %c0_96 = arith.constant 0 : index
    %202 = vector.load %arg8[%c1_94, %c0_95, %c0_96] : memref<2x1x32xf32, #tpu.memory_space<vmem>>, vector<1x1x32xf32>
    %203 = vector.shape_cast %202 : vector<1x1x32xf32> to vector<1x32xf32>
    %204 = arith.addf %199, %137 : vector<8x32xf32>
    %cst_97 = arith.constant dense<0.000000e+00> : vector<8xf32>
    %205 = vector.multi_reduction <add>, %204, %cst_97 [1] : vector<8x32xf32> to vector<8xf32>
    %206 = vector.shape_cast %205 : vector<8xf32> to vector<8x1xf32>
    %cst_98 = arith.constant 3.200000e+01 : f32
    %207 = vector.broadcast %cst_98 : f32 to vector<8x1xf32>
    %208 = arith.divf %206, %207 : vector<8x1xf32>
    %209 = vector.broadcast %208 : vector<8x1xf32> to vector<8x32xf32>
    %210 = arith.subf %204, %209 : vector<8x32xf32>
    %211 = arith.mulf %210, %210 : vector<8x32xf32>
    %cst_99 = arith.constant dense<0.000000e+00> : vector<8xf32>
    %212 = vector.multi_reduction <add>, %211, %cst_99 [1] : vector<8x32xf32> to vector<8xf32>
    %213 = vector.shape_cast %212 : vector<8xf32> to vector<8x1xf32>
    %cst_100 = arith.constant 3.200000e+01 : f32
    %214 = vector.broadcast %cst_100 : f32 to vector<8x1xf32>
    %215 = arith.divf %213, %214 : vector<8x1xf32>
    %216 = vector.broadcast %208 : vector<8x1xf32> to vector<8x32xf32>
    %217 = arith.subf %204, %216 : vector<8x32xf32>
    %cst_101 = arith.constant 9.99999974E-6 : f32
    %218 = vector.broadcast %cst_101 : f32 to vector<8x1xf32>
    %219 = arith.addf %215, %218 : vector<8x1xf32>
    %220 = math.rsqrt %219 : vector<8x1xf32>
    %221 = vector.broadcast %220 : vector<8x1xf32> to vector<8x32xf32>
    %222 = arith.mulf %217, %221 : vector<8x32xf32>
    %223 = vector.broadcast %201 : vector<1x32xf32> to vector<8x32xf32>
    %224 = arith.mulf %222, %223 : vector<8x32xf32>
    %225 = vector.broadcast %203 : vector<1x32xf32> to vector<8x32xf32>
    %226 = arith.addf %224, %225 : vector<8x32xf32>
    %c1_102 = arith.constant 1 : index
    %c0_103 = arith.constant 0 : index
    %c0_104 = arith.constant 0 : index
    %227 = vector.load %arg11[%c1_102, %c0_103, %c0_104] : memref<2x32x128xf32, #tpu.memory_space<vmem>>, vector<1x32x128xf32>
    %228 = vector.shape_cast %227 : vector<1x32x128xf32> to vector<32x128xf32>
    %c1_105 = arith.constant 1 : index
    %c0_106 = arith.constant 0 : index
    %c0_107 = arith.constant 0 : index
    %229 = vector.load %arg12[%c1_105, %c0_106, %c0_107] : memref<2x1x128xf32, #tpu.memory_space<vmem>>, vector<1x1x128xf32>
    %230 = vector.shape_cast %229 : vector<1x1x128xf32> to vector<1x128xf32>
    %c1_108 = arith.constant 1 : index
    %c0_109 = arith.constant 0 : index
    %c0_110 = arith.constant 0 : index
    %231 = vector.load %arg13[%c1_108, %c0_109, %c0_110] : memref<2x128x32xf32, #tpu.memory_space<vmem>>, vector<1x128x32xf32>
    %232 = vector.shape_cast %231 : vector<1x128x32xf32> to vector<128x32xf32>
    %c1_111 = arith.constant 1 : index
    %c0_112 = arith.constant 0 : index
    %c0_113 = arith.constant 0 : index
    %233 = vector.load %arg14[%c1_111, %c0_112, %c0_113] : memref<2x1x32xf32, #tpu.memory_space<vmem>>, vector<1x1x32xf32>
    %234 = vector.shape_cast %233 : vector<1x1x32xf32> to vector<1x32xf32>
    %cst_114 = arith.constant dense<0.000000e+00> : vector<8x128xf32>
    %235 = tpu.matmul %226, %228, %cst_114 {dimension_numbers = #tpu.dot_dimension_numbers<[1], [0], [0], [1], [0, 0, 1, 1], [], []>} : vector<8x32xf32>, vector<32x128xf32>, vector<8x128xf32> -> vector<8x128xf32>
    %236 = vector.broadcast %230 : vector<1x128xf32> to vector<8x128xf32>
    %237 = arith.addf %235, %236 : vector<8x128xf32>
    %cst_115 = arith.constant 0.000000e+00 : f32
    %238 = vector.broadcast %cst_115 : f32 to vector<8x128xf32>
    %239 = arith.maximumf %237, %238 : vector<8x128xf32>
    %cst_116 = arith.constant dense<0.000000e+00> : vector<8x32xf32>
    %240 = tpu.matmul %239, %232, %cst_116 {dimension_numbers = #tpu.dot_dimension_numbers<[1], [0], [0], [1], [0, 0, 1, 1], [], []>} : vector<8x128xf32>, vector<128x32xf32>, vector<8x32xf32> -> vector<8x32xf32>
    %241 = vector.broadcast %234 : vector<1x32xf32> to vector<8x32xf32>
    %242 = arith.addf %240, %241 : vector<8x32xf32>
    %c1_117 = arith.constant 1 : index
    %c0_118 = arith.constant 0 : index
    %c0_119 = arith.constant 0 : index
    %243 = vector.load %arg9[%c1_117, %c0_118, %c0_119] : memref<2x1x32xf32, #tpu.memory_space<vmem>>, vector<1x1x32xf32>
    %244 = vector.shape_cast %243 : vector<1x1x32xf32> to vector<1x32xf32>
    %c1_120 = arith.constant 1 : index
    %c0_121 = arith.constant 0 : index
    %c0_122 = arith.constant 0 : index
    %245 = vector.load %arg10[%c1_120, %c0_121, %c0_122] : memref<2x1x32xf32, #tpu.memory_space<vmem>>, vector<1x1x32xf32>
    %246 = vector.shape_cast %245 : vector<1x1x32xf32> to vector<1x32xf32>
    %247 = arith.addf %242, %226 : vector<8x32xf32>
    %cst_123 = arith.constant dense<0.000000e+00> : vector<8xf32>
    %248 = vector.multi_reduction <add>, %247, %cst_123 [1] : vector<8x32xf32> to vector<8xf32>
    %249 = vector.shape_cast %248 : vector<8xf32> to vector<8x1xf32>
    %cst_124 = arith.constant 3.200000e+01 : f32
    %250 = vector.broadcast %cst_124 : f32 to vector<8x1xf32>
    %251 = arith.divf %249, %250 : vector<8x1xf32>
    %252 = vector.broadcast %251 : vector<8x1xf32> to vector<8x32xf32>
    %253 = arith.subf %247, %252 : vector<8x32xf32>
    %254 = arith.mulf %253, %253 : vector<8x32xf32>
    %cst_125 = arith.constant dense<0.000000e+00> : vector<8xf32>
    %255 = vector.multi_reduction <add>, %254, %cst_125 [1] : vector<8x32xf32> to vector<8xf32>
    %256 = vector.shape_cast %255 : vector<8xf32> to vector<8x1xf32>
    %cst_126 = arith.constant 3.200000e+01 : f32
    %257 = vector.broadcast %cst_126 : f32 to vector<8x1xf32>
    %258 = arith.divf %256, %257 : vector<8x1xf32>
    %259 = vector.broadcast %251 : vector<8x1xf32> to vector<8x32xf32>
    %260 = arith.subf %247, %259 : vector<8x32xf32>
    %cst_127 = arith.constant 9.99999974E-6 : f32
    %261 = vector.broadcast %cst_127 : f32 to vector<8x1xf32>
    %262 = arith.addf %258, %261 : vector<8x1xf32>
    %263 = math.rsqrt %262 : vector<8x1xf32>
    %264 = vector.broadcast %263 : vector<8x1xf32> to vector<8x32xf32>
    %265 = arith.mulf %260, %264 : vector<8x32xf32>
    %266 = vector.broadcast %244 : vector<1x32xf32> to vector<8x32xf32>
    %267 = arith.mulf %265, %266 : vector<8x32xf32>
    %268 = vector.broadcast %246 : vector<1x32xf32> to vector<8x32xf32>
    %269 = arith.addf %267, %268 : vector<8x32xf32>
    %c0_128 = arith.constant 0 : index
    %c0_129 = arith.constant 0 : index
    %c0_130 = arith.constant 0 : index
    %270 = vector.load %arg2[%c0_128, %c0_129, %c0_130] : memref<1x8x32xf32, #tpu.memory_space<vmem>>, vector<1x8x32xf32>
    %271 = vector.shape_cast %270 : vector<1x8x32xf32> to vector<8x32xf32>
    %272 = tpu.iota {dimensions = array<i32: 0>} : vector<8x8xi32>
    %273 = tpu.iota {dimensions = array<i32: 1>} : vector<8x8xi32>
    %274 = tpu.concatenate %272, %272, %272, %272 in 0 : vector<8x8xi32>, vector<8x8xi32>, vector<8x8xi32>, vector<8x8xi32> -> vector<32x8xi32>
    %275 = tpu.concatenate %273, %273, %273, %273 in 0 : vector<8x8xi32>, vector<8x8xi32>, vector<8x8xi32>, vector<8x8xi32> -> vector<32x8xi32>
    %276 = arith.cmpi sle, %275, %274 : vector<32x8xi32>
    %c0_131 = arith.constant 0 : index
    %c0_132 = arith.constant 0 : index
    %c0_133 = arith.constant 0 : index
    %277 = vector.load %arg15[%c0_131, %c0_132, %c0_133] : memref<2x32x96xf32, #tpu.memory_space<vmem>>, vector<1x32x96xf32>
    %278 = vector.shape_cast %277 : vector<1x32x96xf32> to vector<32x96xf32>
    %c0_134 = arith.constant 0 : index
    %c0_135 = arith.constant 0 : index
    %c0_136 = arith.constant 0 : index
    %279 = vector.load %arg16[%c0_134, %c0_135, %c0_136] : memref<2x32x32xf32, #tpu.memory_space<vmem>>, vector<1x32x32xf32>
    %280 = vector.shape_cast %279 : vector<1x32x32xf32> to vector<32x32xf32>
    %c0_137 = arith.constant 0 : index
    %c0_138 = arith.constant 0 : index
    %c0_139 = arith.constant 0 : index
    %281 = vector.load %arg17[%c0_137, %c0_138, %c0_139] : memref<2x1x32xf32, #tpu.memory_space<vmem>>, vector<1x1x32xf32>
    %282 = vector.shape_cast %281 : vector<1x1x32xf32> to vector<1x32xf32>
    %cst_140 = arith.constant dense<0.000000e+00> : vector<8x96xf32>
    %283 = tpu.matmul %271, %278, %cst_140 {dimension_numbers = #tpu.dot_dimension_numbers<[1], [0], [0], [1], [0, 0, 1, 1], [], []>} : vector<8x32xf32>, vector<32x96xf32>, vector<8x96xf32> -> vector<8x96xf32>
    %284 = vector.extract_strided_slice %283 {offsets = [0, 0], sizes = [8, 32], strides = [1, 1]} : vector<8x96xf32> to vector<8x32xf32>
    %285 = vector.extract_strided_slice %283 {offsets = [0, 32], sizes = [8, 32], strides = [1, 1]} : vector<8x96xf32> to vector<8x32xf32>
    %286 = vector.extract_strided_slice %283 {offsets = [0, 64], sizes = [8, 32], strides = [1, 1]} : vector<8x96xf32> to vector<8x32xf32>
    %287 = vector.extract_strided_slice %284 {offsets = [0, 0], sizes = [8, 8], strides = [1, 1]} : vector<8x32xf32> to vector<8x8xf32>
    %288 = vector.extract_strided_slice %285 {offsets = [0, 0], sizes = [8, 8], strides = [1, 1]} : vector<8x32xf32> to vector<8x8xf32>
    %cst_141 = arith.constant dense<0.000000e+00> : vector<8x8xf32>
    %289 = tpu.matmul %287, %288, %cst_141 {dimension_numbers = #tpu.dot_dimension_numbers<[1], [1], [0], [0], [0, 0, 1, 0], [], []>} : vector<8x8xf32>, vector<8x8xf32>, vector<8x8xf32> -> vector<8x8xf32>
    %290 = vector.extract_strided_slice %284 {offsets = [0, 8], sizes = [8, 8], strides = [1, 1]} : vector<8x32xf32> to vector<8x8xf32>
    %291 = vector.extract_strided_slice %285 {offsets = [0, 8], sizes = [8, 8], strides = [1, 1]} : vector<8x32xf32> to vector<8x8xf32>
    %cst_142 = arith.constant dense<0.000000e+00> : vector<8x8xf32>
    %292 = tpu.matmul %290, %291, %cst_142 {dimension_numbers = #tpu.dot_dimension_numbers<[1], [1], [0], [0], [0, 0, 1, 0], [], []>} : vector<8x8xf32>, vector<8x8xf32>, vector<8x8xf32> -> vector<8x8xf32>
    %293 = vector.extract_strided_slice %284 {offsets = [0, 16], sizes = [8, 8], strides = [1, 1]} : vector<8x32xf32> to vector<8x8xf32>
    %294 = vector.extract_strided_slice %285 {offsets = [0, 16], sizes = [8, 8], strides = [1, 1]} : vector<8x32xf32> to vector<8x8xf32>
    %cst_143 = arith.constant dense<0.000000e+00> : vector<8x8xf32>
    %295 = tpu.matmul %293, %294, %cst_143 {dimension_numbers = #tpu.dot_dimension_numbers<[1], [1], [0], [0], [0, 0, 1, 0], [], []>} : vector<8x8xf32>, vector<8x8xf32>, vector<8x8xf32> -> vector<8x8xf32>
    %296 = vector.extract_strided_slice %284 {offsets = [0, 24], sizes = [8, 8], strides = [1, 1]} : vector<8x32xf32> to vector<8x8xf32>
    %297 = vector.extract_strided_slice %285 {offsets = [0, 24], sizes = [8, 8], strides = [1, 1]} : vector<8x32xf32> to vector<8x8xf32>
    %cst_144 = arith.constant dense<0.000000e+00> : vector<8x8xf32>
    %298 = tpu.matmul %296, %297, %cst_144 {dimension_numbers = #tpu.dot_dimension_numbers<[1], [1], [0], [0], [0, 0, 1, 0], [], []>} : vector<8x8xf32>, vector<8x8xf32>, vector<8x8xf32> -> vector<8x8xf32>
    %299 = tpu.concatenate %289, %292, %295, %298 in 0 : vector<8x8xf32>, vector<8x8xf32>, vector<8x8xf32>, vector<8x8xf32> -> vector<32x8xf32>
    %cst_145 = arith.constant -1.000000e+20 : f32
    %300 = vector.broadcast %cst_145 : f32 to vector<32x8xf32>
    %301 = arith.select %276, %299, %300 : vector<32x8xi1>, vector<32x8xf32>
    %cst_146 = arith.constant dense<0xFF800000> : vector<32xf32>
    %302 = vector.multi_reduction <maximumf>, %301, %cst_146 [1] : vector<32x8xf32> to vector<32xf32>
    %303 = vector.shape_cast %302 : vector<32xf32> to vector<32x1xf32>
    %304 = vector.broadcast %303 : vector<32x1xf32> to vector<32x8xf32>
    %305 = arith.subf %301, %304 : vector<32x8xf32>
    %306 = math.exp %305 : vector<32x8xf32>
    %cst_147 = arith.constant dense<0.000000e+00> : vector<32xf32>
    %307 = vector.multi_reduction <add>, %306, %cst_147 [1] : vector<32x8xf32> to vector<32xf32>
    %308 = vector.shape_cast %307 : vector<32xf32> to vector<32x1xf32>
    %309 = tpu.reciprocal %308 {approx = true} : vector<32x1xf32> -> vector<32x1xf32>
    %310 = vector.broadcast %309 : vector<32x1xf32> to vector<32x8xf32>
    %311 = arith.mulf %306, %310 : vector<32x8xf32>
    %312 = vector.extract_strided_slice %311 {offsets = [0, 0], sizes = [8, 8], strides = [1, 1]} : vector<32x8xf32> to vector<8x8xf32>
    %313 = vector.extract_strided_slice %286 {offsets = [0, 0], sizes = [8, 8], strides = [1, 1]} : vector<8x32xf32> to vector<8x8xf32>
    %cst_148 = arith.constant dense<0.000000e+00> : vector<8x8xf32>
    %314 = tpu.matmul %312, %313, %cst_148 {dimension_numbers = #tpu.dot_dimension_numbers<[1], [0], [0], [1], [0, 0, 1, 1], [], []>} : vector<8x8xf32>, vector<8x8xf32>, vector<8x8xf32> -> vector<8x8xf32>
    %315 = vector.extract_strided_slice %280 {offsets = [0, 0], sizes = [8, 32], strides = [1, 1]} : vector<32x32xf32> to vector<8x32xf32>
    %cst_149 = arith.constant dense<0.000000e+00> : vector<8x32xf32>
    %316 = tpu.matmul %314, %315, %cst_149 {dimension_numbers = #tpu.dot_dimension_numbers<[1], [0], [0], [1], [0, 0, 1, 1], [], []>} : vector<8x8xf32>, vector<8x32xf32>, vector<8x32xf32> -> vector<8x32xf32>
    %317 = vector.broadcast %282 : vector<1x32xf32> to vector<8x32xf32>
    %318 = arith.addf %317, %316 : vector<8x32xf32>
    %319 = vector.extract_strided_slice %311 {offsets = [8, 0], sizes = [8, 8], strides = [1, 1]} : vector<32x8xf32> to vector<8x8xf32>
    %320 = vector.extract_strided_slice %286 {offsets = [0, 8], sizes = [8, 8], strides = [1, 1]} : vector<8x32xf32> to vector<8x8xf32>
    %cst_150 = arith.constant dense<0.000000e+00> : vector<8x8xf32>
    %321 = tpu.matmul %319, %320, %cst_150 {dimension_numbers = #tpu.dot_dimension_numbers<[1], [0], [0], [1], [0, 0, 1, 1], [], []>} : vector<8x8xf32>, vector<8x8xf32>, vector<8x8xf32> -> vector<8x8xf32>
    %322 = vector.extract_strided_slice %280 {offsets = [8, 0], sizes = [8, 32], strides = [1, 1]} : vector<32x32xf32> to vector<8x32xf32>
    %cst_151 = arith.constant dense<0.000000e+00> : vector<8x32xf32>
    %323 = tpu.matmul %321, %322, %cst_151 {dimension_numbers = #tpu.dot_dimension_numbers<[1], [0], [0], [1], [0, 0, 1, 1], [], []>} : vector<8x8xf32>, vector<8x32xf32>, vector<8x32xf32> -> vector<8x32xf32>
    %324 = arith.addf %318, %323 : vector<8x32xf32>
    %325 = vector.extract_strided_slice %311 {offsets = [16, 0], sizes = [8, 8], strides = [1, 1]} : vector<32x8xf32> to vector<8x8xf32>
    %326 = vector.extract_strided_slice %286 {offsets = [0, 16], sizes = [8, 8], strides = [1, 1]} : vector<8x32xf32> to vector<8x8xf32>
    %cst_152 = arith.constant dense<0.000000e+00> : vector<8x8xf32>
    %327 = tpu.matmul %325, %326, %cst_152 {dimension_numbers = #tpu.dot_dimension_numbers<[1], [0], [0], [1], [0, 0, 1, 1], [], []>} : vector<8x8xf32>, vector<8x8xf32>, vector<8x8xf32> -> vector<8x8xf32>
    %328 = vector.extract_strided_slice %280 {offsets = [16, 0], sizes = [8, 32], strides = [1, 1]} : vector<32x32xf32> to vector<8x32xf32>
    %cst_153 = arith.constant dense<0.000000e+00> : vector<8x32xf32>
    %329 = tpu.matmul %327, %328, %cst_153 {dimension_numbers = #tpu.dot_dimension_numbers<[1], [0], [0], [1], [0, 0, 1, 1], [], []>} : vector<8x8xf32>, vector<8x32xf32>, vector<8x32xf32> -> vector<8x32xf32>
    %330 = arith.addf %324, %329 : vector<8x32xf32>
    %331 = vector.extract_strided_slice %311 {offsets = [24, 0], sizes = [8, 8], strides = [1, 1]} : vector<32x8xf32> to vector<8x8xf32>
    %332 = vector.extract_strided_slice %286 {offsets = [0, 24], sizes = [8, 8], strides = [1, 1]} : vector<8x32xf32> to vector<8x8xf32>
    %cst_154 = arith.constant dense<0.000000e+00> : vector<8x8xf32>
    %333 = tpu.matmul %331, %332, %cst_154 {dimension_numbers = #tpu.dot_dimension_numbers<[1], [0], [0], [1], [0, 0, 1, 1], [], []>} : vector<8x8xf32>, vector<8x8xf32>, vector<8x8xf32> -> vector<8x8xf32>
    %334 = vector.extract_strided_slice %280 {offsets = [24, 0], sizes = [8, 32], strides = [1, 1]} : vector<32x32xf32> to vector<8x32xf32>
    %cst_155 = arith.constant dense<0.000000e+00> : vector<8x32xf32>
    %335 = tpu.matmul %333, %334, %cst_155 {dimension_numbers = #tpu.dot_dimension_numbers<[1], [0], [0], [1], [0, 0, 1, 1], [], []>} : vector<8x8xf32>, vector<8x32xf32>, vector<8x32xf32> -> vector<8x32xf32>
    %336 = arith.addf %330, %335 : vector<8x32xf32>
    %c0_156 = arith.constant 0 : index
    %c0_157 = arith.constant 0 : index
    %c0_158 = arith.constant 0 : index
    %337 = vector.load %arg18[%c0_156, %c0_157, %c0_158] : memref<2x1x32xf32, #tpu.memory_space<vmem>>, vector<1x1x32xf32>
    %338 = vector.shape_cast %337 : vector<1x1x32xf32> to vector<1x32xf32>
    %c0_159 = arith.constant 0 : index
    %c0_160 = arith.constant 0 : index
    %c0_161 = arith.constant 0 : index
    %339 = vector.load %arg19[%c0_159, %c0_160, %c0_161] : memref<2x1x32xf32, #tpu.memory_space<vmem>>, vector<1x1x32xf32>
    %340 = vector.shape_cast %339 : vector<1x1x32xf32> to vector<1x32xf32>
    %341 = arith.addf %336, %271 : vector<8x32xf32>
    %cst_162 = arith.constant dense<0.000000e+00> : vector<8xf32>
    %342 = vector.multi_reduction <add>, %341, %cst_162 [1] : vector<8x32xf32> to vector<8xf32>
    %343 = vector.shape_cast %342 : vector<8xf32> to vector<8x1xf32>
    %cst_163 = arith.constant 3.200000e+01 : f32
    %344 = vector.broadcast %cst_163 : f32 to vector<8x1xf32>
    %345 = arith.divf %343, %344 : vector<8x1xf32>
    %346 = vector.broadcast %345 : vector<8x1xf32> to vector<8x32xf32>
    %347 = arith.subf %341, %346 : vector<8x32xf32>
    %348 = arith.mulf %347, %347 : vector<8x32xf32>
    %cst_164 = arith.constant dense<0.000000e+00> : vector<8xf32>
    %349 = vector.multi_reduction <add>, %348, %cst_164 [1] : vector<8x32xf32> to vector<8xf32>
    %350 = vector.shape_cast %349 : vector<8xf32> to vector<8x1xf32>
    %cst_165 = arith.constant 3.200000e+01 : f32
    %351 = vector.broadcast %cst_165 : f32 to vector<8x1xf32>
    %352 = arith.divf %350, %351 : vector<8x1xf32>
    %353 = vector.broadcast %345 : vector<8x1xf32> to vector<8x32xf32>
    %354 = arith.subf %341, %353 : vector<8x32xf32>
    %cst_166 = arith.constant 9.99999974E-6 : f32
    %355 = vector.broadcast %cst_166 : f32 to vector<8x1xf32>
    %356 = arith.addf %352, %355 : vector<8x1xf32>
    %357 = math.rsqrt %356 : vector<8x1xf32>
    %358 = vector.broadcast %357 : vector<8x1xf32> to vector<8x32xf32>
    %359 = arith.mulf %354, %358 : vector<8x32xf32>
    %360 = vector.broadcast %338 : vector<1x32xf32> to vector<8x32xf32>
    %361 = arith.mulf %359, %360 : vector<8x32xf32>
    %362 = vector.broadcast %340 : vector<1x32xf32> to vector<8x32xf32>
    %363 = arith.addf %361, %362 : vector<8x32xf32>
    %c0_167 = arith.constant 0 : index
    %c0_168 = arith.constant 0 : index
    %c0_169 = arith.constant 0 : index
    %364 = vector.load %arg20[%c0_167, %c0_168, %c0_169] : memref<2x32x96xf32, #tpu.memory_space<vmem>>, vector<1x32x96xf32>
    %365 = vector.shape_cast %364 : vector<1x32x96xf32> to vector<32x96xf32>
    %c0_170 = arith.constant 0 : index
    %c0_171 = arith.constant 0 : index
    %c0_172 = arith.constant 0 : index
    %366 = vector.load %arg21[%c0_170, %c0_171, %c0_172] : memref<2x32x32xf32, #tpu.memory_space<vmem>>, vector<1x32x32xf32>
    %367 = vector.shape_cast %366 : vector<1x32x32xf32> to vector<32x32xf32>
    %c0_173 = arith.constant 0 : index
    %c0_174 = arith.constant 0 : index
    %c0_175 = arith.constant 0 : index
    %368 = vector.load %arg22[%c0_173, %c0_174, %c0_175] : memref<2x1x32xf32, #tpu.memory_space<vmem>>, vector<1x1x32xf32>
    %369 = vector.shape_cast %368 : vector<1x1x32xf32> to vector<1x32xf32>
    %370 = vector.extract_strided_slice %365 {offsets = [0, 0], sizes = [32, 32], strides = [1, 1]} : vector<32x96xf32> to vector<32x32xf32>
    %cst_176 = arith.constant dense<0.000000e+00> : vector<8x32xf32>
    %371 = tpu.matmul %363, %370, %cst_176 {dimension_numbers = #tpu.dot_dimension_numbers<[1], [0], [0], [1], [0, 0, 1, 1], [], []>} : vector<8x32xf32>, vector<32x32xf32>, vector<8x32xf32> -> vector<8x32xf32>
    %372 = vector.extract_strided_slice %365 {offsets = [0, 32], sizes = [32, 64], strides = [1, 1]} : vector<32x96xf32> to vector<32x64xf32>
    %cst_177 = arith.constant dense<0.000000e+00> : vector<8x64xf32>
    %373 = tpu.matmul %269, %372, %cst_177 {dimension_numbers = #tpu.dot_dimension_numbers<[1], [0], [0], [1], [0, 0, 1, 1], [], []>} : vector<8x32xf32>, vector<32x64xf32>, vector<8x64xf32> -> vector<8x64xf32>
    %374 = vector.extract_strided_slice %373 {offsets = [0, 0], sizes = [8, 32], strides = [1, 1]} : vector<8x64xf32> to vector<8x32xf32>
    %375 = vector.extract_strided_slice %373 {offsets = [0, 32], sizes = [8, 32], strides = [1, 1]} : vector<8x64xf32> to vector<8x32xf32>
    %376 = vector.extract_strided_slice %371 {offsets = [0, 0], sizes = [8, 8], strides = [1, 1]} : vector<8x32xf32> to vector<8x8xf32>
    %377 = vector.extract_strided_slice %374 {offsets = [0, 0], sizes = [8, 8], strides = [1, 1]} : vector<8x32xf32> to vector<8x8xf32>
    %cst_178 = arith.constant dense<0.000000e+00> : vector<8x8xf32>
    %378 = tpu.matmul %376, %377, %cst_178 {dimension_numbers = #tpu.dot_dimension_numbers<[1], [1], [0], [0], [0, 0, 1, 0], [], []>} : vector<8x8xf32>, vector<8x8xf32>, vector<8x8xf32> -> vector<8x8xf32>
    %379 = vector.extract_strided_slice %371 {offsets = [0, 8], sizes = [8, 8], strides = [1, 1]} : vector<8x32xf32> to vector<8x8xf32>
    %380 = vector.extract_strided_slice %374 {offsets = [0, 8], sizes = [8, 8], strides = [1, 1]} : vector<8x32xf32> to vector<8x8xf32>
    %cst_179 = arith.constant dense<0.000000e+00> : vector<8x8xf32>
    %381 = tpu.matmul %379, %380, %cst_179 {dimension_numbers = #tpu.dot_dimension_numbers<[1], [1], [0], [0], [0, 0, 1, 0], [], []>} : vector<8x8xf32>, vector<8x8xf32>, vector<8x8xf32> -> vector<8x8xf32>
    %382 = vector.extract_strided_slice %371 {offsets = [0, 16], sizes = [8, 8], strides = [1, 1]} : vector<8x32xf32> to vector<8x8xf32>
    %383 = vector.extract_strided_slice %374 {offsets = [0, 16], sizes = [8, 8], strides = [1, 1]} : vector<8x32xf32> to vector<8x8xf32>
    %cst_180 = arith.constant dense<0.000000e+00> : vector<8x8xf32>
    %384 = tpu.matmul %382, %383, %cst_180 {dimension_numbers = #tpu.dot_dimension_numbers<[1], [1], [0], [0], [0, 0, 1, 0], [], []>} : vector<8x8xf32>, vector<8x8xf32>, vector<8x8xf32> -> vector<8x8xf32>
    %385 = vector.extract_strided_slice %371 {offsets = [0, 24], sizes = [8, 8], strides = [1, 1]} : vector<8x32xf32> to vector<8x8xf32>
    %386 = vector.extract_strided_slice %374 {offsets = [0, 24], sizes = [8, 8], strides = [1, 1]} : vector<8x32xf32> to vector<8x8xf32>
    %cst_181 = arith.constant dense<0.000000e+00> : vector<8x8xf32>
    %387 = tpu.matmul %385, %386, %cst_181 {dimension_numbers = #tpu.dot_dimension_numbers<[1], [1], [0], [0], [0, 0, 1, 0], [], []>} : vector<8x8xf32>, vector<8x8xf32>, vector<8x8xf32> -> vector<8x8xf32>
    %388 = tpu.concatenate %378, %381, %384, %387 in 0 : vector<8x8xf32>, vector<8x8xf32>, vector<8x8xf32>, vector<8x8xf32> -> vector<32x8xf32>
    %cst_182 = arith.constant -1.000000e+20 : f32
    %389 = vector.shape_cast %3 : vector<1x8xi1> to vector<1x8xi1>
    %390 = vector.broadcast %389 : vector<1x8xi1> to vector<32x8xi1>
    %391 = vector.broadcast %cst_182 : f32 to vector<32x8xf32>
    %392 = arith.select %390, %388, %391 : vector<32x8xi1>, vector<32x8xf32>
    %cst_183 = arith.constant dense<0xFF800000> : vector<32xf32>
    %393 = vector.multi_reduction <maximumf>, %392, %cst_183 [1] : vector<32x8xf32> to vector<32xf32>
    %394 = vector.shape_cast %393 : vector<32xf32> to vector<32x1xf32>
    %395 = vector.broadcast %394 : vector<32x1xf32> to vector<32x8xf32>
    %396 = arith.subf %392, %395 : vector<32x8xf32>
    %397 = math.exp %396 : vector<32x8xf32>
    %cst_184 = arith.constant dense<0.000000e+00> : vector<32xf32>
    %398 = vector.multi_reduction <add>, %397, %cst_184 [1] : vector<32x8xf32> to vector<32xf32>
    %399 = vector.shape_cast %398 : vector<32xf32> to vector<32x1xf32>
    %400 = tpu.reciprocal %399 {approx = true} : vector<32x1xf32> -> vector<32x1xf32>
    %401 = vector.broadcast %400 : vector<32x1xf32> to vector<32x8xf32>
    %402 = arith.mulf %397, %401 : vector<32x8xf32>
    %403 = vector.extract_strided_slice %402 {offsets = [0, 0], sizes = [8, 8], strides = [1, 1]} : vector<32x8xf32> to vector<8x8xf32>
    %404 = vector.extract_strided_slice %375 {offsets = [0, 0], sizes = [8, 8], strides = [1, 1]} : vector<8x32xf32> to vector<8x8xf32>
    %cst_185 = arith.constant dense<0.000000e+00> : vector<8x8xf32>
    %405 = tpu.matmul %403, %404, %cst_185 {dimension_numbers = #tpu.dot_dimension_numbers<[1], [0], [0], [1], [0, 0, 1, 1], [], []>} : vector<8x8xf32>, vector<8x8xf32>, vector<8x8xf32> -> vector<8x8xf32>
    %406 = vector.extract_strided_slice %367 {offsets = [0, 0], sizes = [8, 32], strides = [1, 1]} : vector<32x32xf32> to vector<8x32xf32>
    %cst_186 = arith.constant dense<0.000000e+00> : vector<8x32xf32>
    %407 = tpu.matmul %405, %406, %cst_186 {dimension_numbers = #tpu.dot_dimension_numbers<[1], [0], [0], [1], [0, 0, 1, 1], [], []>} : vector<8x8xf32>, vector<8x32xf32>, vector<8x32xf32> -> vector<8x32xf32>
    %408 = vector.broadcast %369 : vector<1x32xf32> to vector<8x32xf32>
    %409 = arith.addf %408, %407 : vector<8x32xf32>
    %410 = vector.extract_strided_slice %402 {offsets = [8, 0], sizes = [8, 8], strides = [1, 1]} : vector<32x8xf32> to vector<8x8xf32>
    %411 = vector.extract_strided_slice %375 {offsets = [0, 8], sizes = [8, 8], strides = [1, 1]} : vector<8x32xf32> to vector<8x8xf32>
    %cst_187 = arith.constant dense<0.000000e+00> : vector<8x8xf32>
    %412 = tpu.matmul %410, %411, %cst_187 {dimension_numbers = #tpu.dot_dimension_numbers<[1], [0], [0], [1], [0, 0, 1, 1], [], []>} : vector<8x8xf32>, vector<8x8xf32>, vector<8x8xf32> -> vector<8x8xf32>
    %413 = vector.extract_strided_slice %367 {offsets = [8, 0], sizes = [8, 32], strides = [1, 1]} : vector<32x32xf32> to vector<8x32xf32>
    %cst_188 = arith.constant dense<0.000000e+00> : vector<8x32xf32>
    %414 = tpu.matmul %412, %413, %cst_188 {dimension_numbers = #tpu.dot_dimension_numbers<[1], [0], [0], [1], [0, 0, 1, 1], [], []>} : vector<8x8xf32>, vector<8x32xf32>, vector<8x32xf32> -> vector<8x32xf32>
    %415 = arith.addf %409, %414 : vector<8x32xf32>
    %416 = vector.extract_strided_slice %402 {offsets = [16, 0], sizes = [8, 8], strides = [1, 1]} : vector<32x8xf32> to vector<8x8xf32>
    %417 = vector.extract_strided_slice %375 {offsets = [0, 16], sizes = [8, 8], strides = [1, 1]} : vector<8x32xf32> to vector<8x8xf32>
    %cst_189 = arith.constant dense<0.000000e+00> : vector<8x8xf32>
    %418 = tpu.matmul %416, %417, %cst_189 {dimension_numbers = #tpu.dot_dimension_numbers<[1], [0], [0], [1], [0, 0, 1, 1], [], []>} : vector<8x8xf32>, vector<8x8xf32>, vector<8x8xf32> -> vector<8x8xf32>
    %419 = vector.extract_strided_slice %367 {offsets = [16, 0], sizes = [8, 32], strides = [1, 1]} : vector<32x32xf32> to vector<8x32xf32>
    %cst_190 = arith.constant dense<0.000000e+00> : vector<8x32xf32>
    %420 = tpu.matmul %418, %419, %cst_190 {dimension_numbers = #tpu.dot_dimension_numbers<[1], [0], [0], [1], [0, 0, 1, 1], [], []>} : vector<8x8xf32>, vector<8x32xf32>, vector<8x32xf32> -> vector<8x32xf32>
    %421 = arith.addf %415, %420 : vector<8x32xf32>
    %422 = vector.extract_strided_slice %402 {offsets = [24, 0], sizes = [8, 8], strides = [1, 1]} : vector<32x8xf32> to vector<8x8xf32>
    %423 = vector.extract_strided_slice %375 {offsets = [0, 24], sizes = [8, 8], strides = [1, 1]} : vector<8x32xf32> to vector<8x8xf32>
    %cst_191 = arith.constant dense<0.000000e+00> : vector<8x8xf32>
    %424 = tpu.matmul %422, %423, %cst_191 {dimension_numbers = #tpu.dot_dimension_numbers<[1], [0], [0], [1], [0, 0, 1, 1], [], []>} : vector<8x8xf32>, vector<8x8xf32>, vector<8x8xf32> -> vector<8x8xf32>
    %425 = vector.extract_strided_slice %367 {offsets = [24, 0], sizes = [8, 32], strides = [1, 1]} : vector<32x32xf32> to vector<8x32xf32>
    %cst_192 = arith.constant dense<0.000000e+00> : vector<8x32xf32>
    %426 = tpu.matmul %424, %425, %cst_192 {dimension_numbers = #tpu.dot_dimension_numbers<[1], [0], [0], [1], [0, 0, 1, 1], [], []>} : vector<8x8xf32>, vector<8x32xf32>, vector<8x32xf32> -> vector<8x32xf32>
    %427 = arith.addf %421, %426 : vector<8x32xf32>
    %c0_193 = arith.constant 0 : index
    %c0_194 = arith.constant 0 : index
    %c0_195 = arith.constant 0 : index
    %428 = vector.load %arg23[%c0_193, %c0_194, %c0_195] : memref<2x1x32xf32, #tpu.memory_space<vmem>>, vector<1x1x32xf32>
    %429 = vector.shape_cast %428 : vector<1x1x32xf32> to vector<1x32xf32>
    %c0_196 = arith.constant 0 : index
    %c0_197 = arith.constant 0 : index
    %c0_198 = arith.constant 0 : index
    %430 = vector.load %arg24[%c0_196, %c0_197, %c0_198] : memref<2x1x32xf32, #tpu.memory_space<vmem>>, vector<1x1x32xf32>
    %431 = vector.shape_cast %430 : vector<1x1x32xf32> to vector<1x32xf32>
    %432 = arith.addf %427, %363 : vector<8x32xf32>
    %cst_199 = arith.constant dense<0.000000e+00> : vector<8xf32>
    %433 = vector.multi_reduction <add>, %432, %cst_199 [1] : vector<8x32xf32> to vector<8xf32>
    %434 = vector.shape_cast %433 : vector<8xf32> to vector<8x1xf32>
    %cst_200 = arith.constant 3.200000e+01 : f32
    %435 = vector.broadcast %cst_200 : f32 to vector<8x1xf32>
    %436 = arith.divf %434, %435 : vector<8x1xf32>
    %437 = vector.broadcast %436 : vector<8x1xf32> to vector<8x32xf32>
    %438 = arith.subf %432, %437 : vector<8x32xf32>
    %439 = arith.mulf %438, %438 : vector<8x32xf32>
    %cst_201 = arith.constant dense<0.000000e+00> : vector<8xf32>
    %440 = vector.multi_reduction <add>, %439, %cst_201 [1] : vector<8x32xf32> to vector<8xf32>
    %441 = vector.shape_cast %440 : vector<8xf32> to vector<8x1xf32>
    %cst_202 = arith.constant 3.200000e+01 : f32
    %442 = vector.broadcast %cst_202 : f32 to vector<8x1xf32>
    %443 = arith.divf %441, %442 : vector<8x1xf32>
    %444 = vector.broadcast %436 : vector<8x1xf32> to vector<8x32xf32>
    %445 = arith.subf %432, %444 : vector<8x32xf32>
    %cst_203 = arith.constant 9.99999974E-6 : f32
    %446 = vector.broadcast %cst_203 : f32 to vector<8x1xf32>
    %447 = arith.addf %443, %446 : vector<8x1xf32>
    %448 = math.rsqrt %447 : vector<8x1xf32>
    %449 = vector.broadcast %448 : vector<8x1xf32> to vector<8x32xf32>
    %450 = arith.mulf %445, %449 : vector<8x32xf32>
    %451 = vector.broadcast %429 : vector<1x32xf32> to vector<8x32xf32>
    %452 = arith.mulf %450, %451 : vector<8x32xf32>
    %453 = vector.broadcast %431 : vector<1x32xf32> to vector<8x32xf32>
    %454 = arith.addf %452, %453 : vector<8x32xf32>
    %c0_204 = arith.constant 0 : index
    %c0_205 = arith.constant 0 : index
    %c0_206 = arith.constant 0 : index
    %455 = vector.load %arg27[%c0_204, %c0_205, %c0_206] : memref<2x32x128xf32, #tpu.memory_space<vmem>>, vector<1x32x128xf32>
    %456 = vector.shape_cast %455 : vector<1x32x128xf32> to vector<32x128xf32>
    %c0_207 = arith.constant 0 : index
    %c0_208 = arith.constant 0 : index
    %c0_209 = arith.constant 0 : index
    %457 = vector.load %arg28[%c0_207, %c0_208, %c0_209] : memref<2x1x128xf32, #tpu.memory_space<vmem>>, vector<1x1x128xf32>
    %458 = vector.shape_cast %457 : vector<1x1x128xf32> to vector<1x128xf32>
    %c0_210 = arith.constant 0 : index
    %c0_211 = arith.constant 0 : index
    %c0_212 = arith.constant 0 : index
    %459 = vector.load %arg29[%c0_210, %c0_211, %c0_212] : memref<2x128x32xf32, #tpu.memory_space<vmem>>, vector<1x128x32xf32>
    %460 = vector.shape_cast %459 : vector<1x128x32xf32> to vector<128x32xf32>
    %c0_213 = arith.constant 0 : index
    %c0_214 = arith.constant 0 : index
    %c0_215 = arith.constant 0 : index
    %461 = vector.load %arg30[%c0_213, %c0_214, %c0_215] : memref<2x1x32xf32, #tpu.memory_space<vmem>>, vector<1x1x32xf32>
    %462 = vector.shape_cast %461 : vector<1x1x32xf32> to vector<1x32xf32>
    %cst_216 = arith.constant dense<0.000000e+00> : vector<8x128xf32>
    %463 = tpu.matmul %454, %456, %cst_216 {dimension_numbers = #tpu.dot_dimension_numbers<[1], [0], [0], [1], [0, 0, 1, 1], [], []>} : vector<8x32xf32>, vector<32x128xf32>, vector<8x128xf32> -> vector<8x128xf32>
    %464 = vector.broadcast %458 : vector<1x128xf32> to vector<8x128xf32>
    %465 = arith.addf %463, %464 : vector<8x128xf32>
    %cst_217 = arith.constant 0.000000e+00 : f32
    %466 = vector.broadcast %cst_217 : f32 to vector<8x128xf32>
    %467 = arith.maximumf %465, %466 : vector<8x128xf32>
    %cst_218 = arith.constant dense<0.000000e+00> : vector<8x32xf32>
    %468 = tpu.matmul %467, %460, %cst_218 {dimension_numbers = #tpu.dot_dimension_numbers<[1], [0], [0], [1], [0, 0, 1, 1], [], []>} : vector<8x128xf32>, vector<128x32xf32>, vector<8x32xf32> -> vector<8x32xf32>
    %469 = vector.broadcast %462 : vector<1x32xf32> to vector<8x32xf32>
    %470 = arith.addf %468, %469 : vector<8x32xf32>
    %c0_219 = arith.constant 0 : index
    %c0_220 = arith.constant 0 : index
    %c0_221 = arith.constant 0 : index
    %471 = vector.load %arg25[%c0_219, %c0_220, %c0_221] : memref<2x1x32xf32, #tpu.memory_space<vmem>>, vector<1x1x32xf32>
    %472 = vector.shape_cast %471 : vector<1x1x32xf32> to vector<1x32xf32>
    %c0_222 = arith.constant 0 : index
    %c0_223 = arith.constant 0 : index
    %c0_224 = arith.constant 0 : index
    %473 = vector.load %arg26[%c0_222, %c0_223, %c0_224] : memref<2x1x32xf32, #tpu.memory_space<vmem>>, vector<1x1x32xf32>
    %474 = vector.shape_cast %473 : vector<1x1x32xf32> to vector<1x32xf32>
    %475 = arith.addf %470, %454 : vector<8x32xf32>
    %cst_225 = arith.constant dense<0.000000e+00> : vector<8xf32>
    %476 = vector.multi_reduction <add>, %475, %cst_225 [1] : vector<8x32xf32> to vector<8xf32>
    %477 = vector.shape_cast %476 : vector<8xf32> to vector<8x1xf32>
    %cst_226 = arith.constant 3.200000e+01 : f32
    %478 = vector.broadcast %cst_226 : f32 to vector<8x1xf32>
    %479 = arith.divf %477, %478 : vector<8x1xf32>
    %480 = vector.broadcast %479 : vector<8x1xf32> to vector<8x32xf32>
    %481 = arith.subf %475, %480 : vector<8x32xf32>
    %482 = arith.mulf %481, %481 : vector<8x32xf32>
    %cst_227 = arith.constant dense<0.000000e+00> : vector<8xf32>
    %483 = vector.multi_reduction <add>, %482, %cst_227 [1] : vector<8x32xf32> to vector<8xf32>
    %484 = vector.shape_cast %483 : vector<8xf32> to vector<8x1xf32>
    %cst_228 = arith.constant 3.200000e+01 : f32
    %485 = vector.broadcast %cst_228 : f32 to vector<8x1xf32>
    %486 = arith.divf %484, %485 : vector<8x1xf32>
    %487 = vector.broadcast %479 : vector<8x1xf32> to vector<8x32xf32>
    %488 = arith.subf %475, %487 : vector<8x32xf32>
    %cst_229 = arith.constant 9.99999974E-6 : f32
    %489 = vector.broadcast %cst_229 : f32 to vector<8x1xf32>
    %490 = arith.addf %486, %489 : vector<8x1xf32>
    %491 = math.rsqrt %490 : vector<8x1xf32>
    %492 = vector.broadcast %491 : vector<8x1xf32> to vector<8x32xf32>
    %493 = arith.mulf %488, %492 : vector<8x32xf32>
    %494 = vector.broadcast %472 : vector<1x32xf32> to vector<8x32xf32>
    %495 = arith.mulf %493, %494 : vector<8x32xf32>
    %496 = vector.broadcast %474 : vector<1x32xf32> to vector<8x32xf32>
    %497 = arith.addf %495, %496 : vector<8x32xf32>
    %c1_230 = arith.constant 1 : index
    %c0_231 = arith.constant 0 : index
    %c0_232 = arith.constant 0 : index
    %498 = vector.load %arg15[%c1_230, %c0_231, %c0_232] : memref<2x32x96xf32, #tpu.memory_space<vmem>>, vector<1x32x96xf32>
    %499 = vector.shape_cast %498 : vector<1x32x96xf32> to vector<32x96xf32>
    %c1_233 = arith.constant 1 : index
    %c0_234 = arith.constant 0 : index
    %c0_235 = arith.constant 0 : index
    %500 = vector.load %arg16[%c1_233, %c0_234, %c0_235] : memref<2x32x32xf32, #tpu.memory_space<vmem>>, vector<1x32x32xf32>
    %501 = vector.shape_cast %500 : vector<1x32x32xf32> to vector<32x32xf32>
    %c1_236 = arith.constant 1 : index
    %c0_237 = arith.constant 0 : index
    %c0_238 = arith.constant 0 : index
    %502 = vector.load %arg17[%c1_236, %c0_237, %c0_238] : memref<2x1x32xf32, #tpu.memory_space<vmem>>, vector<1x1x32xf32>
    %503 = vector.shape_cast %502 : vector<1x1x32xf32> to vector<1x32xf32>
    %cst_239 = arith.constant dense<0.000000e+00> : vector<8x96xf32>
    %504 = tpu.matmul %497, %499, %cst_239 {dimension_numbers = #tpu.dot_dimension_numbers<[1], [0], [0], [1], [0, 0, 1, 1], [], []>} : vector<8x32xf32>, vector<32x96xf32>, vector<8x96xf32> -> vector<8x96xf32>
    %505 = vector.extract_strided_slice %504 {offsets = [0, 0], sizes = [8, 32], strides = [1, 1]} : vector<8x96xf32> to vector<8x32xf32>
    %506 = vector.extract_strided_slice %504 {offsets = [0, 32], sizes = [8, 32], strides = [1, 1]} : vector<8x96xf32> to vector<8x32xf32>
    %507 = vector.extract_strided_slice %504 {offsets = [0, 64], sizes = [8, 32], strides = [1, 1]} : vector<8x96xf32> to vector<8x32xf32>
    %508 = vector.extract_strided_slice %505 {offsets = [0, 0], sizes = [8, 8], strides = [1, 1]} : vector<8x32xf32> to vector<8x8xf32>
    %509 = vector.extract_strided_slice %506 {offsets = [0, 0], sizes = [8, 8], strides = [1, 1]} : vector<8x32xf32> to vector<8x8xf32>
    %cst_240 = arith.constant dense<0.000000e+00> : vector<8x8xf32>
    %510 = tpu.matmul %508, %509, %cst_240 {dimension_numbers = #tpu.dot_dimension_numbers<[1], [1], [0], [0], [0, 0, 1, 0], [], []>} : vector<8x8xf32>, vector<8x8xf32>, vector<8x8xf32> -> vector<8x8xf32>
    %511 = vector.extract_strided_slice %505 {offsets = [0, 8], sizes = [8, 8], strides = [1, 1]} : vector<8x32xf32> to vector<8x8xf32>
    %512 = vector.extract_strided_slice %506 {offsets = [0, 8], sizes = [8, 8], strides = [1, 1]} : vector<8x32xf32> to vector<8x8xf32>
    %cst_241 = arith.constant dense<0.000000e+00> : vector<8x8xf32>
    %513 = tpu.matmul %511, %512, %cst_241 {dimension_numbers = #tpu.dot_dimension_numbers<[1], [1], [0], [0], [0, 0, 1, 0], [], []>} : vector<8x8xf32>, vector<8x8xf32>, vector<8x8xf32> -> vector<8x8xf32>
    %514 = vector.extract_strided_slice %505 {offsets = [0, 16], sizes = [8, 8], strides = [1, 1]} : vector<8x32xf32> to vector<8x8xf32>
    %515 = vector.extract_strided_slice %506 {offsets = [0, 16], sizes = [8, 8], strides = [1, 1]} : vector<8x32xf32> to vector<8x8xf32>
    %cst_242 = arith.constant dense<0.000000e+00> : vector<8x8xf32>
    %516 = tpu.matmul %514, %515, %cst_242 {dimension_numbers = #tpu.dot_dimension_numbers<[1], [1], [0], [0], [0, 0, 1, 0], [], []>} : vector<8x8xf32>, vector<8x8xf32>, vector<8x8xf32> -> vector<8x8xf32>
    %517 = vector.extract_strided_slice %505 {offsets = [0, 24], sizes = [8, 8], strides = [1, 1]} : vector<8x32xf32> to vector<8x8xf32>
    %518 = vector.extract_strided_slice %506 {offsets = [0, 24], sizes = [8, 8], strides = [1, 1]} : vector<8x32xf32> to vector<8x8xf32>
    %cst_243 = arith.constant dense<0.000000e+00> : vector<8x8xf32>
    %519 = tpu.matmul %517, %518, %cst_243 {dimension_numbers = #tpu.dot_dimension_numbers<[1], [1], [0], [0], [0, 0, 1, 0], [], []>} : vector<8x8xf32>, vector<8x8xf32>, vector<8x8xf32> -> vector<8x8xf32>
    %520 = tpu.concatenate %510, %513, %516, %519 in 0 : vector<8x8xf32>, vector<8x8xf32>, vector<8x8xf32>, vector<8x8xf32> -> vector<32x8xf32>
    %cst_244 = arith.constant -1.000000e+20 : f32
    %521 = vector.broadcast %cst_244 : f32 to vector<32x8xf32>
    %522 = arith.select %276, %520, %521 : vector<32x8xi1>, vector<32x8xf32>
    %cst_245 = arith.constant dense<0xFF800000> : vector<32xf32>
    %523 = vector.multi_reduction <maximumf>, %522, %cst_245 [1] : vector<32x8xf32> to vector<32xf32>
    %524 = vector.shape_cast %523 : vector<32xf32> to vector<32x1xf32>
    %525 = vector.broadcast %524 : vector<32x1xf32> to vector<32x8xf32>
    %526 = arith.subf %522, %525 : vector<32x8xf32>
    %527 = math.exp %526 : vector<32x8xf32>
    %cst_246 = arith.constant dense<0.000000e+00> : vector<32xf32>
    %528 = vector.multi_reduction <add>, %527, %cst_246 [1] : vector<32x8xf32> to vector<32xf32>
    %529 = vector.shape_cast %528 : vector<32xf32> to vector<32x1xf32>
    %530 = tpu.reciprocal %529 {approx = true} : vector<32x1xf32> -> vector<32x1xf32>
    %531 = vector.broadcast %530 : vector<32x1xf32> to vector<32x8xf32>
    %532 = arith.mulf %527, %531 : vector<32x8xf32>
    %533 = vector.extract_strided_slice %532 {offsets = [0, 0], sizes = [8, 8], strides = [1, 1]} : vector<32x8xf32> to vector<8x8xf32>
    %534 = vector.extract_strided_slice %507 {offsets = [0, 0], sizes = [8, 8], strides = [1, 1]} : vector<8x32xf32> to vector<8x8xf32>
    %cst_247 = arith.constant dense<0.000000e+00> : vector<8x8xf32>
    %535 = tpu.matmul %533, %534, %cst_247 {dimension_numbers = #tpu.dot_dimension_numbers<[1], [0], [0], [1], [0, 0, 1, 1], [], []>} : vector<8x8xf32>, vector<8x8xf32>, vector<8x8xf32> -> vector<8x8xf32>
    %536 = vector.extract_strided_slice %501 {offsets = [0, 0], sizes = [8, 32], strides = [1, 1]} : vector<32x32xf32> to vector<8x32xf32>
    %cst_248 = arith.constant dense<0.000000e+00> : vector<8x32xf32>
    %537 = tpu.matmul %535, %536, %cst_248 {dimension_numbers = #tpu.dot_dimension_numbers<[1], [0], [0], [1], [0, 0, 1, 1], [], []>} : vector<8x8xf32>, vector<8x32xf32>, vector<8x32xf32> -> vector<8x32xf32>
    %538 = vector.broadcast %503 : vector<1x32xf32> to vector<8x32xf32>
    %539 = arith.addf %538, %537 : vector<8x32xf32>
    %540 = vector.extract_strided_slice %532 {offsets = [8, 0], sizes = [8, 8], strides = [1, 1]} : vector<32x8xf32> to vector<8x8xf32>
    %541 = vector.extract_strided_slice %507 {offsets = [0, 8], sizes = [8, 8], strides = [1, 1]} : vector<8x32xf32> to vector<8x8xf32>
    %cst_249 = arith.constant dense<0.000000e+00> : vector<8x8xf32>
    %542 = tpu.matmul %540, %541, %cst_249 {dimension_numbers = #tpu.dot_dimension_numbers<[1], [0], [0], [1], [0, 0, 1, 1], [], []>} : vector<8x8xf32>, vector<8x8xf32>, vector<8x8xf32> -> vector<8x8xf32>
    %543 = vector.extract_strided_slice %501 {offsets = [8, 0], sizes = [8, 32], strides = [1, 1]} : vector<32x32xf32> to vector<8x32xf32>
    %cst_250 = arith.constant dense<0.000000e+00> : vector<8x32xf32>
    %544 = tpu.matmul %542, %543, %cst_250 {dimension_numbers = #tpu.dot_dimension_numbers<[1], [0], [0], [1], [0, 0, 1, 1], [], []>} : vector<8x8xf32>, vector<8x32xf32>, vector<8x32xf32> -> vector<8x32xf32>
    %545 = arith.addf %539, %544 : vector<8x32xf32>
    %546 = vector.extract_strided_slice %532 {offsets = [16, 0], sizes = [8, 8], strides = [1, 1]} : vector<32x8xf32> to vector<8x8xf32>
    %547 = vector.extract_strided_slice %507 {offsets = [0, 16], sizes = [8, 8], strides = [1, 1]} : vector<8x32xf32> to vector<8x8xf32>
    %cst_251 = arith.constant dense<0.000000e+00> : vector<8x8xf32>
    %548 = tpu.matmul %546, %547, %cst_251 {dimension_numbers = #tpu.dot_dimension_numbers<[1], [0], [0], [1], [0, 0, 1, 1], [], []>} : vector<8x8xf32>, vector<8x8xf32>, vector<8x8xf32> -> vector<8x8xf32>
    %549 = vector.extract_strided_slice %501 {offsets = [16, 0], sizes = [8, 32], strides = [1, 1]} : vector<32x32xf32> to vector<8x32xf32>
    %cst_252 = arith.constant dense<0.000000e+00> : vector<8x32xf32>
    %550 = tpu.matmul %548, %549, %cst_252 {dimension_numbers = #tpu.dot_dimension_numbers<[1], [0], [0], [1], [0, 0, 1, 1], [], []>} : vector<8x8xf32>, vector<8x32xf32>, vector<8x32xf32> -> vector<8x32xf32>
    %551 = arith.addf %545, %550 : vector<8x32xf32>
    %552 = vector.extract_strided_slice %532 {offsets = [24, 0], sizes = [8, 8], strides = [1, 1]} : vector<32x8xf32> to vector<8x8xf32>
    %553 = vector.extract_strided_slice %507 {offsets = [0, 24], sizes = [8, 8], strides = [1, 1]} : vector<8x32xf32> to vector<8x8xf32>
    %cst_253 = arith.constant dense<0.000000e+00> : vector<8x8xf32>
    %554 = tpu.matmul %552, %553, %cst_253 {dimension_numbers = #tpu.dot_dimension_numbers<[1], [0], [0], [1], [0, 0, 1, 1], [], []>} : vector<8x8xf32>, vector<8x8xf32>, vector<8x8xf32> -> vector<8x8xf32>
    %555 = vector.extract_strided_slice %501 {offsets = [24, 0], sizes = [8, 32], strides = [1, 1]} : vector<32x32xf32> to vector<8x32xf32>
    %cst_254 = arith.constant dense<0.000000e+00> : vector<8x32xf32>
    %556 = tpu.matmul %554, %555, %cst_254 {dimension_numbers = #tpu.dot_dimension_numbers<[1], [0], [0], [1], [0, 0, 1, 1], [], []>} : vector<8x8xf32>, vector<8x32xf32>, vector<8x32xf32> -> vector<8x32xf32>
    %557 = arith.addf %551, %556 : vector<8x32xf32>
    %c1_255 = arith.constant 1 : index
    %c0_256 = arith.constant 0 : index
    %c0_257 = arith.constant 0 : index
    %558 = vector.load %arg18[%c1_255, %c0_256, %c0_257] : memref<2x1x32xf32, #tpu.memory_space<vmem>>, vector<1x1x32xf32>
    %559 = vector.shape_cast %558 : vector<1x1x32xf32> to vector<1x32xf32>
    %c1_258 = arith.constant 1 : index
    %c0_259 = arith.constant 0 : index
    %c0_260 = arith.constant 0 : index
    %560 = vector.load %arg19[%c1_258, %c0_259, %c0_260] : memref<2x1x32xf32, #tpu.memory_space<vmem>>, vector<1x1x32xf32>
    %561 = vector.shape_cast %560 : vector<1x1x32xf32> to vector<1x32xf32>
    %562 = arith.addf %557, %497 : vector<8x32xf32>
    %cst_261 = arith.constant dense<0.000000e+00> : vector<8xf32>
    %563 = vector.multi_reduction <add>, %562, %cst_261 [1] : vector<8x32xf32> to vector<8xf32>
    %564 = vector.shape_cast %563 : vector<8xf32> to vector<8x1xf32>
    %cst_262 = arith.constant 3.200000e+01 : f32
    %565 = vector.broadcast %cst_262 : f32 to vector<8x1xf32>
    %566 = arith.divf %564, %565 : vector<8x1xf32>
    %567 = vector.broadcast %566 : vector<8x1xf32> to vector<8x32xf32>
    %568 = arith.subf %562, %567 : vector<8x32xf32>
    %569 = arith.mulf %568, %568 : vector<8x32xf32>
    %cst_263 = arith.constant dense<0.000000e+00> : vector<8xf32>
    %570 = vector.multi_reduction <add>, %569, %cst_263 [1] : vector<8x32xf32> to vector<8xf32>
    %571 = vector.shape_cast %570 : vector<8xf32> to vector<8x1xf32>
    %cst_264 = arith.constant 3.200000e+01 : f32
    %572 = vector.broadcast %cst_264 : f32 to vector<8x1xf32>
    %573 = arith.divf %571, %572 : vector<8x1xf32>
    %574 = vector.broadcast %566 : vector<8x1xf32> to vector<8x32xf32>
    %575 = arith.subf %562, %574 : vector<8x32xf32>
    %cst_265 = arith.constant 9.99999974E-6 : f32
    %576 = vector.broadcast %cst_265 : f32 to vector<8x1xf32>
    %577 = arith.addf %573, %576 : vector<8x1xf32>
    %578 = math.rsqrt %577 : vector<8x1xf32>
    %579 = vector.broadcast %578 : vector<8x1xf32> to vector<8x32xf32>
    %580 = arith.mulf %575, %579 : vector<8x32xf32>
    %581 = vector.broadcast %559 : vector<1x32xf32> to vector<8x32xf32>
    %582 = arith.mulf %580, %581 : vector<8x32xf32>
    %583 = vector.broadcast %561 : vector<1x32xf32> to vector<8x32xf32>
    %584 = arith.addf %582, %583 : vector<8x32xf32>
    %c1_266 = arith.constant 1 : index
    %c0_267 = arith.constant 0 : index
    %c0_268 = arith.constant 0 : index
    %585 = vector.load %arg20[%c1_266, %c0_267, %c0_268] : memref<2x32x96xf32, #tpu.memory_space<vmem>>, vector<1x32x96xf32>
    %586 = vector.shape_cast %585 : vector<1x32x96xf32> to vector<32x96xf32>
    %c1_269 = arith.constant 1 : index
    %c0_270 = arith.constant 0 : index
    %c0_271 = arith.constant 0 : index
    %587 = vector.load %arg21[%c1_269, %c0_270, %c0_271] : memref<2x32x32xf32, #tpu.memory_space<vmem>>, vector<1x32x32xf32>
    %588 = vector.shape_cast %587 : vector<1x32x32xf32> to vector<32x32xf32>
    %c1_272 = arith.constant 1 : index
    %c0_273 = arith.constant 0 : index
    %c0_274 = arith.constant 0 : index
    %589 = vector.load %arg22[%c1_272, %c0_273, %c0_274] : memref<2x1x32xf32, #tpu.memory_space<vmem>>, vector<1x1x32xf32>
    %590 = vector.shape_cast %589 : vector<1x1x32xf32> to vector<1x32xf32>
    %591 = vector.extract_strided_slice %586 {offsets = [0, 0], sizes = [32, 32], strides = [1, 1]} : vector<32x96xf32> to vector<32x32xf32>
    %cst_275 = arith.constant dense<0.000000e+00> : vector<8x32xf32>
    %592 = tpu.matmul %584, %591, %cst_275 {dimension_numbers = #tpu.dot_dimension_numbers<[1], [0], [0], [1], [0, 0, 1, 1], [], []>} : vector<8x32xf32>, vector<32x32xf32>, vector<8x32xf32> -> vector<8x32xf32>
    %593 = vector.extract_strided_slice %586 {offsets = [0, 32], sizes = [32, 64], strides = [1, 1]} : vector<32x96xf32> to vector<32x64xf32>
    %cst_276 = arith.constant dense<0.000000e+00> : vector<8x64xf32>
    %594 = tpu.matmul %269, %593, %cst_276 {dimension_numbers = #tpu.dot_dimension_numbers<[1], [0], [0], [1], [0, 0, 1, 1], [], []>} : vector<8x32xf32>, vector<32x64xf32>, vector<8x64xf32> -> vector<8x64xf32>
    %595 = vector.extract_strided_slice %594 {offsets = [0, 0], sizes = [8, 32], strides = [1, 1]} : vector<8x64xf32> to vector<8x32xf32>
    %596 = vector.extract_strided_slice %594 {offsets = [0, 32], sizes = [8, 32], strides = [1, 1]} : vector<8x64xf32> to vector<8x32xf32>
    %597 = vector.extract_strided_slice %592 {offsets = [0, 0], sizes = [8, 8], strides = [1, 1]} : vector<8x32xf32> to vector<8x8xf32>
    %598 = vector.extract_strided_slice %595 {offsets = [0, 0], sizes = [8, 8], strides = [1, 1]} : vector<8x32xf32> to vector<8x8xf32>
    %cst_277 = arith.constant dense<0.000000e+00> : vector<8x8xf32>
    %599 = tpu.matmul %597, %598, %cst_277 {dimension_numbers = #tpu.dot_dimension_numbers<[1], [1], [0], [0], [0, 0, 1, 0], [], []>} : vector<8x8xf32>, vector<8x8xf32>, vector<8x8xf32> -> vector<8x8xf32>
    %600 = vector.extract_strided_slice %592 {offsets = [0, 8], sizes = [8, 8], strides = [1, 1]} : vector<8x32xf32> to vector<8x8xf32>
    %601 = vector.extract_strided_slice %595 {offsets = [0, 8], sizes = [8, 8], strides = [1, 1]} : vector<8x32xf32> to vector<8x8xf32>
    %cst_278 = arith.constant dense<0.000000e+00> : vector<8x8xf32>
    %602 = tpu.matmul %600, %601, %cst_278 {dimension_numbers = #tpu.dot_dimension_numbers<[1], [1], [0], [0], [0, 0, 1, 0], [], []>} : vector<8x8xf32>, vector<8x8xf32>, vector<8x8xf32> -> vector<8x8xf32>
    %603 = vector.extract_strided_slice %592 {offsets = [0, 16], sizes = [8, 8], strides = [1, 1]} : vector<8x32xf32> to vector<8x8xf32>
    %604 = vector.extract_strided_slice %595 {offsets = [0, 16], sizes = [8, 8], strides = [1, 1]} : vector<8x32xf32> to vector<8x8xf32>
    %cst_279 = arith.constant dense<0.000000e+00> : vector<8x8xf32>
    %605 = tpu.matmul %603, %604, %cst_279 {dimension_numbers = #tpu.dot_dimension_numbers<[1], [1], [0], [0], [0, 0, 1, 0], [], []>} : vector<8x8xf32>, vector<8x8xf32>, vector<8x8xf32> -> vector<8x8xf32>
    %606 = vector.extract_strided_slice %592 {offsets = [0, 24], sizes = [8, 8], strides = [1, 1]} : vector<8x32xf32> to vector<8x8xf32>
    %607 = vector.extract_strided_slice %595 {offsets = [0, 24], sizes = [8, 8], strides = [1, 1]} : vector<8x32xf32> to vector<8x8xf32>
    %cst_280 = arith.constant dense<0.000000e+00> : vector<8x8xf32>
    %608 = tpu.matmul %606, %607, %cst_280 {dimension_numbers = #tpu.dot_dimension_numbers<[1], [1], [0], [0], [0, 0, 1, 0], [], []>} : vector<8x8xf32>, vector<8x8xf32>, vector<8x8xf32> -> vector<8x8xf32>
    %609 = tpu.concatenate %599, %602, %605, %608 in 0 : vector<8x8xf32>, vector<8x8xf32>, vector<8x8xf32>, vector<8x8xf32> -> vector<32x8xf32>
    %cst_281 = arith.constant -1.000000e+20 : f32
    %610 = vector.shape_cast %3 : vector<1x8xi1> to vector<1x8xi1>
    %611 = vector.broadcast %610 : vector<1x8xi1> to vector<32x8xi1>
    %612 = vector.broadcast %cst_281 : f32 to vector<32x8xf32>
    %613 = arith.select %611, %609, %612 : vector<32x8xi1>, vector<32x8xf32>
    %cst_282 = arith.constant dense<0xFF800000> : vector<32xf32>
    %614 = vector.multi_reduction <maximumf>, %613, %cst_282 [1] : vector<32x8xf32> to vector<32xf32>
    %615 = vector.shape_cast %614 : vector<32xf32> to vector<32x1xf32>
    %616 = vector.broadcast %615 : vector<32x1xf32> to vector<32x8xf32>
    %617 = arith.subf %613, %616 : vector<32x8xf32>
    %618 = math.exp %617 : vector<32x8xf32>
    %cst_283 = arith.constant dense<0.000000e+00> : vector<32xf32>
    %619 = vector.multi_reduction <add>, %618, %cst_283 [1] : vector<32x8xf32> to vector<32xf32>
    %620 = vector.shape_cast %619 : vector<32xf32> to vector<32x1xf32>
    %621 = tpu.reciprocal %620 {approx = true} : vector<32x1xf32> -> vector<32x1xf32>
    %622 = vector.broadcast %621 : vector<32x1xf32> to vector<32x8xf32>
    %623 = arith.mulf %618, %622 : vector<32x8xf32>
    %624 = vector.extract_strided_slice %623 {offsets = [0, 0], sizes = [8, 8], strides = [1, 1]} : vector<32x8xf32> to vector<8x8xf32>
    %625 = vector.extract_strided_slice %596 {offsets = [0, 0], sizes = [8, 8], strides = [1, 1]} : vector<8x32xf32> to vector<8x8xf32>
    %cst_284 = arith.constant dense<0.000000e+00> : vector<8x8xf32>
    %626 = tpu.matmul %624, %625, %cst_284 {dimension_numbers = #tpu.dot_dimension_numbers<[1], [0], [0], [1], [0, 0, 1, 1], [], []>} : vector<8x8xf32>, vector<8x8xf32>, vector<8x8xf32> -> vector<8x8xf32>
    %627 = vector.extract_strided_slice %588 {offsets = [0, 0], sizes = [8, 32], strides = [1, 1]} : vector<32x32xf32> to vector<8x32xf32>
    %cst_285 = arith.constant dense<0.000000e+00> : vector<8x32xf32>
    %628 = tpu.matmul %626, %627, %cst_285 {dimension_numbers = #tpu.dot_dimension_numbers<[1], [0], [0], [1], [0, 0, 1, 1], [], []>} : vector<8x8xf32>, vector<8x32xf32>, vector<8x32xf32> -> vector<8x32xf32>
    %629 = vector.broadcast %590 : vector<1x32xf32> to vector<8x32xf32>
    %630 = arith.addf %629, %628 : vector<8x32xf32>
    %631 = vector.extract_strided_slice %623 {offsets = [8, 0], sizes = [8, 8], strides = [1, 1]} : vector<32x8xf32> to vector<8x8xf32>
    %632 = vector.extract_strided_slice %596 {offsets = [0, 8], sizes = [8, 8], strides = [1, 1]} : vector<8x32xf32> to vector<8x8xf32>
    %cst_286 = arith.constant dense<0.000000e+00> : vector<8x8xf32>
    %633 = tpu.matmul %631, %632, %cst_286 {dimension_numbers = #tpu.dot_dimension_numbers<[1], [0], [0], [1], [0, 0, 1, 1], [], []>} : vector<8x8xf32>, vector<8x8xf32>, vector<8x8xf32> -> vector<8x8xf32>
    %634 = vector.extract_strided_slice %588 {offsets = [8, 0], sizes = [8, 32], strides = [1, 1]} : vector<32x32xf32> to vector<8x32xf32>
    %cst_287 = arith.constant dense<0.000000e+00> : vector<8x32xf32>
    %635 = tpu.matmul %633, %634, %cst_287 {dimension_numbers = #tpu.dot_dimension_numbers<[1], [0], [0], [1], [0, 0, 1, 1], [], []>} : vector<8x8xf32>, vector<8x32xf32>, vector<8x32xf32> -> vector<8x32xf32>
    %636 = arith.addf %630, %635 : vector<8x32xf32>
    %637 = vector.extract_strided_slice %623 {offsets = [16, 0], sizes = [8, 8], strides = [1, 1]} : vector<32x8xf32> to vector<8x8xf32>
    %638 = vector.extract_strided_slice %596 {offsets = [0, 16], sizes = [8, 8], strides = [1, 1]} : vector<8x32xf32> to vector<8x8xf32>
    %cst_288 = arith.constant dense<0.000000e+00> : vector<8x8xf32>
    %639 = tpu.matmul %637, %638, %cst_288 {dimension_numbers = #tpu.dot_dimension_numbers<[1], [0], [0], [1], [0, 0, 1, 1], [], []>} : vector<8x8xf32>, vector<8x8xf32>, vector<8x8xf32> -> vector<8x8xf32>
    %640 = vector.extract_strided_slice %588 {offsets = [16, 0], sizes = [8, 32], strides = [1, 1]} : vector<32x32xf32> to vector<8x32xf32>
    %cst_289 = arith.constant dense<0.000000e+00> : vector<8x32xf32>
    %641 = tpu.matmul %639, %640, %cst_289 {dimension_numbers = #tpu.dot_dimension_numbers<[1], [0], [0], [1], [0, 0, 1, 1], [], []>} : vector<8x8xf32>, vector<8x32xf32>, vector<8x32xf32> -> vector<8x32xf32>
    %642 = arith.addf %636, %641 : vector<8x32xf32>
    %643 = vector.extract_strided_slice %623 {offsets = [24, 0], sizes = [8, 8], strides = [1, 1]} : vector<32x8xf32> to vector<8x8xf32>
    %644 = vector.extract_strided_slice %596 {offsets = [0, 24], sizes = [8, 8], strides = [1, 1]} : vector<8x32xf32> to vector<8x8xf32>
    %cst_290 = arith.constant dense<0.000000e+00> : vector<8x8xf32>
    %645 = tpu.matmul %643, %644, %cst_290 {dimension_numbers = #tpu.dot_dimension_numbers<[1], [0], [0], [1], [0, 0, 1, 1], [], []>} : vector<8x8xf32>, vector<8x8xf32>, vector<8x8xf32> -> vector<8x8xf32>
    %646 = vector.extract_strided_slice %588 {offsets = [24, 0], sizes = [8, 32], strides = [1, 1]} : vector<32x32xf32> to vector<8x32xf32>
    %cst_291 = arith.constant dense<0.000000e+00> : vector<8x32xf32>
    %647 = tpu.matmul %645, %646, %cst_291 {dimension_numbers = #tpu.dot_dimension_numbers<[1], [0], [0], [1], [0, 0, 1, 1], [], []>} : vector<8x8xf32>, vector<8x32xf32>, vector<8x32xf32> -> vector<8x32xf32>
    %648 = arith.addf %642, %647 : vector<8x32xf32>
    %c1_292 = arith.constant 1 : index
    %c0_293 = arith.constant 0 : index
    %c0_294 = arith.constant 0 : index
    %649 = vector.load %arg23[%c1_292, %c0_293, %c0_294] : memref<2x1x32xf32, #tpu.memory_space<vmem>>, vector<1x1x32xf32>
    %650 = vector.shape_cast %649 : vector<1x1x32xf32> to vector<1x32xf32>
    %c1_295 = arith.constant 1 : index
    %c0_296 = arith.constant 0 : index
    %c0_297 = arith.constant 0 : index
    %651 = vector.load %arg24[%c1_295, %c0_296, %c0_297] : memref<2x1x32xf32, #tpu.memory_space<vmem>>, vector<1x1x32xf32>
    %652 = vector.shape_cast %651 : vector<1x1x32xf32> to vector<1x32xf32>
    %653 = arith.addf %648, %584 : vector<8x32xf32>
    %cst_298 = arith.constant dense<0.000000e+00> : vector<8xf32>
    %654 = vector.multi_reduction <add>, %653, %cst_298 [1] : vector<8x32xf32> to vector<8xf32>
    %655 = vector.shape_cast %654 : vector<8xf32> to vector<8x1xf32>
    %cst_299 = arith.constant 3.200000e+01 : f32
    %656 = vector.broadcast %cst_299 : f32 to vector<8x1xf32>
    %657 = arith.divf %655, %656 : vector<8x1xf32>
    %658 = vector.broadcast %657 : vector<8x1xf32> to vector<8x32xf32>
    %659 = arith.subf %653, %658 : vector<8x32xf32>
    %660 = arith.mulf %659, %659 : vector<8x32xf32>
    %cst_300 = arith.constant dense<0.000000e+00> : vector<8xf32>
    %661 = vector.multi_reduction <add>, %660, %cst_300 [1] : vector<8x32xf32> to vector<8xf32>
    %662 = vector.shape_cast %661 : vector<8xf32> to vector<8x1xf32>
    %cst_301 = arith.constant 3.200000e+01 : f32
    %663 = vector.broadcast %cst_301 : f32 to vector<8x1xf32>
    %664 = arith.divf %662, %663 : vector<8x1xf32>
    %665 = vector.broadcast %657 : vector<8x1xf32> to vector<8x32xf32>
    %666 = arith.subf %653, %665 : vector<8x32xf32>
    %cst_302 = arith.constant 9.99999974E-6 : f32
    %667 = vector.broadcast %cst_302 : f32 to vector<8x1xf32>
    %668 = arith.addf %664, %667 : vector<8x1xf32>
    %669 = math.rsqrt %668 : vector<8x1xf32>
    %670 = vector.broadcast %669 : vector<8x1xf32> to vector<8x32xf32>
    %671 = arith.mulf %666, %670 : vector<8x32xf32>
    %672 = vector.broadcast %650 : vector<1x32xf32> to vector<8x32xf32>
    %673 = arith.mulf %671, %672 : vector<8x32xf32>
    %674 = vector.broadcast %652 : vector<1x32xf32> to vector<8x32xf32>
    %675 = arith.addf %673, %674 : vector<8x32xf32>
    %c1_303 = arith.constant 1 : index
    %c0_304 = arith.constant 0 : index
    %c0_305 = arith.constant 0 : index
    %676 = vector.load %arg27[%c1_303, %c0_304, %c0_305] : memref<2x32x128xf32, #tpu.memory_space<vmem>>, vector<1x32x128xf32>
    %677 = vector.shape_cast %676 : vector<1x32x128xf32> to vector<32x128xf32>
    %c1_306 = arith.constant 1 : index
    %c0_307 = arith.constant 0 : index
    %c0_308 = arith.constant 0 : index
    %678 = vector.load %arg28[%c1_306, %c0_307, %c0_308] : memref<2x1x128xf32, #tpu.memory_space<vmem>>, vector<1x1x128xf32>
    %679 = vector.shape_cast %678 : vector<1x1x128xf32> to vector<1x128xf32>
    %c1_309 = arith.constant 1 : index
    %c0_310 = arith.constant 0 : index
    %c0_311 = arith.constant 0 : index
    %680 = vector.load %arg29[%c1_309, %c0_310, %c0_311] : memref<2x128x32xf32, #tpu.memory_space<vmem>>, vector<1x128x32xf32>
    %681 = vector.shape_cast %680 : vector<1x128x32xf32> to vector<128x32xf32>
    %c1_312 = arith.constant 1 : index
    %c0_313 = arith.constant 0 : index
    %c0_314 = arith.constant 0 : index
    %682 = vector.load %arg30[%c1_312, %c0_313, %c0_314] : memref<2x1x32xf32, #tpu.memory_space<vmem>>, vector<1x1x32xf32>
    %683 = vector.shape_cast %682 : vector<1x1x32xf32> to vector<1x32xf32>
    %cst_315 = arith.constant dense<0.000000e+00> : vector<8x128xf32>
    %684 = tpu.matmul %675, %677, %cst_315 {dimension_numbers = #tpu.dot_dimension_numbers<[1], [0], [0], [1], [0, 0, 1, 1], [], []>} : vector<8x32xf32>, vector<32x128xf32>, vector<8x128xf32> -> vector<8x128xf32>
    %685 = vector.broadcast %679 : vector<1x128xf32> to vector<8x128xf32>
    %686 = arith.addf %684, %685 : vector<8x128xf32>
    %cst_316 = arith.constant 0.000000e+00 : f32
    %687 = vector.broadcast %cst_316 : f32 to vector<8x128xf32>
    %688 = arith.maximumf %686, %687 : vector<8x128xf32>
    %cst_317 = arith.constant dense<0.000000e+00> : vector<8x32xf32>
    %689 = tpu.matmul %688, %681, %cst_317 {dimension_numbers = #tpu.dot_dimension_numbers<[1], [0], [0], [1], [0, 0, 1, 1], [], []>} : vector<8x128xf32>, vector<128x32xf32>, vector<8x32xf32> -> vector<8x32xf32>
    %690 = vector.broadcast %683 : vector<1x32xf32> to vector<8x32xf32>
    %691 = arith.addf %689, %690 : vector<8x32xf32>
    %c1_318 = arith.constant 1 : index
    %c0_319 = arith.constant 0 : index
    %c0_320 = arith.constant 0 : index
    %692 = vector.load %arg25[%c1_318, %c0_319, %c0_320] : memref<2x1x32xf32, #tpu.memory_space<vmem>>, vector<1x1x32xf32>
    %693 = vector.shape_cast %692 : vector<1x1x32xf32> to vector<1x32xf32>
    %c1_321 = arith.constant 1 : index
    %c0_322 = arith.constant 0 : index
    %c0_323 = arith.constant 0 : index
    %694 = vector.load %arg26[%c1_321, %c0_322, %c0_323] : memref<2x1x32xf32, #tpu.memory_space<vmem>>, vector<1x1x32xf32>
    %695 = vector.shape_cast %694 : vector<1x1x32xf32> to vector<1x32xf32>
    %696 = arith.addf %691, %675 : vector<8x32xf32>
    %cst_324 = arith.constant dense<0.000000e+00> : vector<8xf32>
    %697 = vector.multi_reduction <add>, %696, %cst_324 [1] : vector<8x32xf32> to vector<8xf32>
    %698 = vector.shape_cast %697 : vector<8xf32> to vector<8x1xf32>
    %cst_325 = arith.constant 3.200000e+01 : f32
    %699 = vector.broadcast %cst_325 : f32 to vector<8x1xf32>
    %700 = arith.divf %698, %699 : vector<8x1xf32>
    %701 = vector.broadcast %700 : vector<8x1xf32> to vector<8x32xf32>
    %702 = arith.subf %696, %701 : vector<8x32xf32>
    %703 = arith.mulf %702, %702 : vector<8x32xf32>
    %cst_326 = arith.constant dense<0.000000e+00> : vector<8xf32>
    %704 = vector.multi_reduction <add>, %703, %cst_326 [1] : vector<8x32xf32> to vector<8xf32>
    %705 = vector.shape_cast %704 : vector<8xf32> to vector<8x1xf32>
    %cst_327 = arith.constant 3.200000e+01 : f32
    %706 = vector.broadcast %cst_327 : f32 to vector<8x1xf32>
    %707 = arith.divf %705, %706 : vector<8x1xf32>
    %708 = vector.broadcast %700 : vector<8x1xf32> to vector<8x32xf32>
    %709 = arith.subf %696, %708 : vector<8x32xf32>
    %cst_328 = arith.constant 9.99999974E-6 : f32
    %710 = vector.broadcast %cst_328 : f32 to vector<8x1xf32>
    %711 = arith.addf %707, %710 : vector<8x1xf32>
    %712 = math.rsqrt %711 : vector<8x1xf32>
    %713 = vector.broadcast %712 : vector<8x1xf32> to vector<8x32xf32>
    %714 = arith.mulf %709, %713 : vector<8x32xf32>
    %715 = vector.broadcast %693 : vector<1x32xf32> to vector<8x32xf32>
    %716 = arith.mulf %714, %715 : vector<8x32xf32>
    %717 = vector.broadcast %695 : vector<1x32xf32> to vector<8x32xf32>
    %718 = arith.addf %716, %717 : vector<8x32xf32>
    %c0_329 = arith.constant 0 : index
    %c0_330 = arith.constant 0 : index
    %719 = vector.load %arg31[%c0_329, %c0_330] : memref<32x128xf32, #tpu.memory_space<vmem>>, vector<32x128xf32>
    %cst_331 = arith.constant dense<0.000000e+00> : vector<8x128xf32>
    %720 = tpu.matmul %718, %719, %cst_331 {dimension_numbers = #tpu.dot_dimension_numbers<[1], [0], [0], [1], [0, 0, 1, 1], [], []>} : vector<8x32xf32>, vector<32x128xf32>, vector<8x128xf32> -> vector<8x128xf32>
    %c0_332 = arith.constant 0 : index
    %c0_333 = arith.constant 0 : index
    %721 = vector.load %arg32[%c0_332, %c0_333] : memref<1x128xf32, #tpu.memory_space<vmem>>, vector<1x128xf32>
    %722 = vector.broadcast %721 : vector<1x128xf32> to vector<8x128xf32>
    %723 = arith.addf %720, %722 : vector<8x128xf32>
    %c0_334 = arith.constant 0 : index
    %c0_335 = arith.constant 0 : index
    %c0_336 = arith.constant 0 : index
    %724 = vector.load %arg33[%c0_334, %c0_335, %c0_336] : memref<1x8x128xf32, #tpu.memory_space<vmem>>, vector<1x8x128xf32>
    %725 = vector.shape_cast %724 : vector<1x8x128xf32> to vector<8x128xf32>
    %726 = vector.shape_cast %723 : vector<8x128xf32> to vector<1x8x128xf32>
    tpu.vector_store %arg33[%c0_334, %c0_335, %c0_336], %726 {strides = array<i32>} : memref<1x8x128xf32, #tpu.memory_space<vmem>>, vector<1x8x128xf32>,
    return
  }
  func.func @transform_0(%arg0: i32) -> (i32, i32, i32) {
    %c0_i32 = arith.constant 0 : i32
    %c0_i32_0 = arith.constant 0 : i32
    %c0_i32_1 = arith.constant 0 : i32
    return %arg0, %c0_i32, %c0_i32_0 : i32, i32, i32
  }
  func.func @transform_1(%arg0: i32) -> (i32, i32, i32) {
    %c0_i32 = arith.constant 0 : i32
    %c0_i32_0 = arith.constant 0 : i32
    %c0_i32_1 = arith.constant 0 : i32
    return %arg0, %c0_i32, %c0_i32_0 : i32, i32, i32
  }
  func.func @transform_2(%arg0: i32) -> (i32, i32, i32) {
    %c0_i32 = arith.constant 0 : i32
    %c0_i32_0 = arith.constant 0 : i32
    %c0_i32_1 = arith.constant 0 : i32
    return %arg0, %c0_i32, %c0_i32_0 : i32, i32, i32
  }
  func.func @transform_3(%arg0: i32) -> (i32, i32, i32) {
    %c0_i32 = arith.constant 0 : i32
    %c0_i32_0 = arith.constant 0 : i32
    %c0_i32_1 = arith.constant 0 : i32
    %c0_i32_2 = arith.constant 0 : i32
    return %c0_i32, %c0_i32_0, %c0_i32_1 : i32, i32, i32
  }
  func.func @transform_4(%arg0: i32) -> (i32, i32, i32) {
    %c0_i32 = arith.constant 0 : i32
    %c0_i32_0 = arith.constant 0 : i32
    %c0_i32_1 = arith.constant 0 : i32
    %c0_i32_2 = arith.constant 0 : i32
    return %c0_i32, %c0_i32_0, %c0_i32_1 : i32, i32, i32
  }
  func.func @transform_5(%arg0: i32) -> (i32, i32, i32) {
    %c0_i32 = arith.constant 0 : i32
    %c0_i32_0 = arith.constant 0 : i32
    %c0_i32_1 = arith.constant 0 : i32
    %c0_i32_2 = arith.constant 0 : i32
    return %c0_i32, %c0_i32_0, %c0_i32_1 : i32, i32, i32
  }
  func.func @transform_6(%arg0: i32) -> (i32, i32, i32) {
    %c0_i32 = arith.constant 0 : i32
    %c0_i32_0 = arith.constant 0 : i32
    %c0_i32_1 = arith.constant 0 : i32
    %c0_i32_2 = arith.constant 0 : i32
    return %c0_i32, %c0_i32_0, %c0_i32_1 : i32, i32, i32
  }
  func.func @transform_7(%arg0: i32) -> (i32, i32, i32) {
    %c0_i32 = arith.constant 0 : i32
    %c0_i32_0 = arith.constant 0 : i32
    %c0_i32_1 = arith.constant 0 : i32
    %c0_i32_2 = arith.constant 0 : i32
    return %c0_i32, %c0_i32_0, %c0_i32_1 : i32, i32, i32
  }
  func.func @transform_8(%arg0: i32) -> (i32, i32, i32) {
    %c0_i32 = arith.constant 0 : i32
    %c0_i32_0 = arith.constant 0 : i32
    %c0_i32_1 = arith.constant 0 : i32
    %c0_i32_2 = arith.constant 0 : i32
    return %c0_i32, %c0_i32_0, %c0_i32_1 : i32, i32, i32
  }
  func.func @transform_9(%arg0: i32) -> (i32, i32, i32) {
    %c0_i32 = arith.constant 0 : i32
    %c0_i32_0 = arith.constant 0 : i32
    %c0_i32_1 = arith.constant 0 : i32
    %c0_i32_2 = arith.constant 0 : i32
    return %c0_i32, %c0_i32_0, %c0_i32_1 : i32, i32, i32
  }
  func.func @transform_10(%arg0: i32) -> (i32, i32, i32) {
    %c0_i32 = arith.constant 0 : i32
    %c0_i32_0 = arith.constant 0 : i32
    %c0_i32_1 = arith.constant 0 : i32
    %c0_i32_2 = arith.constant 0 : i32
    return %c0_i32, %c0_i32_0, %c0_i32_1 : i32, i32, i32
  }
  func.func @transform_11(%arg0: i32) -> (i32, i32, i32) {
    %c0_i32 = arith.constant 0 : i32
    %c0_i32_0 = arith.constant 0 : i32
    %c0_i32_1 = arith.constant 0 : i32
    %c0_i32_2 = arith.constant 0 : i32
    return %c0_i32, %c0_i32_0, %c0_i32_1 : i32, i32, i32
  }
  func.func @transform_12(%arg0: i32) -> (i32, i32, i32) {
    %c0_i32 = arith.constant 0 : i32
    %c0_i32_0 = arith.constant 0 : i32
    %c0_i32_1 = arith.constant 0 : i32
    %c0_i32_2 = arith.constant 0 : i32
    return %c0_i32, %c0_i32_0, %c0_i32_1 : i32, i32, i32
  }
  func.func @transform_13(%arg0: i32) -> (i32, i32, i32) {
    %c0_i32 = arith.constant 0 : i32
    %c0_i32_0 = arith.constant 0 : i32
    %c0_i32_1 = arith.constant 0 : i32
    %c0_i32_2 = arith.constant 0 : i32
    return %c0_i32, %c0_i32_0, %c0_i32_1 : i32, i32, i32
  }
  func.func @transform_14(%arg0: i32) -> (i32, i32, i32) {
    %c0_i32 = arith.constant 0 : i32
    %c0_i32_0 = arith.constant 0 : i32
    %c0_i32_1 = arith.constant 0 : i32
    %c0_i32_2 = arith.constant 0 : i32
    return %c0_i32, %c0_i32_0, %c0_i32_1 : i32, i32, i32
  }
  func.func @transform_15(%arg0: i32) -> (i32, i32, i32) {
    %c0_i32 = arith.constant 0 : i32
    %c0_i32_0 = arith.constant 0 : i32
    %c0_i32_1 = arith.constant 0 : i32
    %c0_i32_2 = arith.constant 0 : i32
    return %c0_i32, %c0_i32_0, %c0_i32_1 : i32, i32, i32
  }
  func.func @transform_16(%arg0: i32) -> (i32, i32, i32) {
    %c0_i32 = arith.constant 0 : i32
    %c0_i32_0 = arith.constant 0 : i32
    %c0_i32_1 = arith.constant 0 : i32
    %c0_i32_2 = arith.constant 0 : i32
    return %c0_i32, %c0_i32_0, %c0_i32_1 : i32, i32, i32
  }
  func.func @transform_17(%arg0: i32) -> (i32, i32, i32) {
    %c0_i32 = arith.constant 0 : i32
    %c0_i32_0 = arith.constant 0 : i32
    %c0_i32_1 = arith.constant 0 : i32
    %c0_i32_2 = arith.constant 0 : i32
    return %c0_i32, %c0_i32_0, %c0_i32_1 : i32, i32, i32
  }
  func.func @transform_18(%arg0: i32) -> (i32, i32, i32) {
    %c0_i32 = arith.constant 0 : i32
    %c0_i32_0 = arith.constant 0 : i32
    %c0_i32_1 = arith.constant 0 : i32
    %c0_i32_2 = arith.constant 0 : i32
    return %c0_i32, %c0_i32_0, %c0_i32_1 : i32, i32, i32
  }
  func.func @transform_19(%arg0: i32) -> (i32, i32, i32) {
    %c0_i32 = arith.constant 0 : i32
    %c0_i32_0 = arith.constant 0 : i32
    %c0_i32_1 = arith.constant 0 : i32
    %c0_i32_2 = arith.constant 0 : i32
    return %c0_i32, %c0_i32_0, %c0_i32_1 : i32, i32, i32
  }
  func.func @transform_20(%arg0: i32) -> (i32, i32, i32) {
    %c0_i32 = arith.constant 0 : i32
    %c0_i32_0 = arith.constant 0 : i32
    %c0_i32_1 = arith.constant 0 : i32
    %c0_i32_2 = arith.constant 0 : i32
    return %c0_i32, %c0_i32_0, %c0_i32_1 : i32, i32, i32
  }
  func.func @transform_21(%arg0: i32) -> (i32, i32, i32) {
    %c0_i32 = arith.constant 0 : i32
    %c0_i32_0 = arith.constant 0 : i32
    %c0_i32_1 = arith.constant 0 : i32
    %c0_i32_2 = arith.constant 0 : i32
    return %c0_i32, %c0_i32_0, %c0_i32_1 : i32, i32, i32
  }
  func.func @transform_22(%arg0: i32) -> (i32, i32, i32) {
    %c0_i32 = arith.constant 0 : i32
    %c0_i32_0 = arith.constant 0 : i32
    %c0_i32_1 = arith.constant 0 : i32
    %c0_i32_2 = arith.constant 0 : i32
    return %c0_i32, %c0_i32_0, %c0_i32_1 : i32, i32, i32
  }
  func.func @transform_23(%arg0: i32) -> (i32, i32, i32) {
    %c0_i32 = arith.constant 0 : i32
    %c0_i32_0 = arith.constant 0 : i32
    %c0_i32_1 = arith.constant 0 : i32
    %c0_i32_2 = arith.constant 0 : i32
    return %c0_i32, %c0_i32_0, %c0_i32_1 : i32, i32, i32
  }
  func.func @transform_24(%arg0: i32) -> (i32, i32, i32) {
    %c0_i32 = arith.constant 0 : i32
    %c0_i32_0 = arith.constant 0 : i32
    %c0_i32_1 = arith.constant 0 : i32
    %c0_i32_2 = arith.constant 0 : i32
    return %c0_i32, %c0_i32_0, %c0_i32_1 : i32, i32, i32
  }
  func.func @transform_25(%arg0: i32) -> (i32, i32, i32) {
    %c0_i32 = arith.constant 0 : i32
    %c0_i32_0 = arith.constant 0 : i32
    %c0_i32_1 = arith.constant 0 : i32
    %c0_i32_2 = arith.constant 0 : i32
    return %c0_i32, %c0_i32_0, %c0_i32_1 : i32, i32, i32
  }
  func.func @transform_26(%arg0: i32) -> (i32, i32, i32) {
    %c0_i32 = arith.constant 0 : i32
    %c0_i32_0 = arith.constant 0 : i32
    %c0_i32_1 = arith.constant 0 : i32
    %c0_i32_2 = arith.constant 0 : i32
    return %c0_i32, %c0_i32_0, %c0_i32_1 : i32, i32, i32
  }
  func.func @transform_27(%arg0: i32) -> (i32, i32, i32) {
    %c0_i32 = arith.constant 0 : i32
    %c0_i32_0 = arith.constant 0 : i32
    %c0_i32_1 = arith.constant 0 : i32
    %c0_i32_2 = arith.constant 0 : i32
    return %c0_i32, %c0_i32_0, %c0_i32_1 : i32, i32, i32
  }
  func.func @transform_28(%arg0: i32) -> (i32, i32, i32) {
    %c0_i32 = arith.constant 0 : i32
    %c0_i32_0 = arith.constant 0 : i32
    %c0_i32_1 = arith.constant 0 : i32
    %c0_i32_2 = arith.constant 0 : i32
    return %c0_i32, %c0_i32_0, %c0_i32_1 : i32, i32, i32
  }
  func.func @transform_29(%arg0: i32) -> (i32, i32, i32) {
    %c0_i32 = arith.constant 0 : i32
    %c0_i32_0 = arith.constant 0 : i32
    %c0_i32_1 = arith.constant 0 : i32
    %c0_i32_2 = arith.constant 0 : i32
    return %c0_i32, %c0_i32_0, %c0_i32_1 : i32, i32, i32
  }
  func.func @transform_30(%arg0: i32) -> (i32, i32) {
    %c0_i32 = arith.constant 0 : i32
    %c0_i32_0 = arith.constant 0 : i32
    %c0_i32_1 = arith.constant 0 : i32
    return %c0_i32, %c0_i32_0 : i32, i32
  }
  func.func @transform_31(%arg0: i32) -> (i32, i32) {
    %c0_i32 = arith.constant 0 : i32
    %c0_i32_0 = arith.constant 0 : i32
    %c0_i32_1 = arith.constant 0 : i32
    return %c0_i32, %c0_i32_0 : i32, i32
  }
  func.func @transform_32(%arg0: i32) -> (i32, i32, i32) {
    %c0_i32 = arith.constant 0 : i32
    %c0_i32_0 = arith.constant 0 : i32
    %c0_i32_1 = arith.constant 0 : i32
    return %arg0, %c0_i32, %c0_i32_0 : i32, i32, i32
  }
}

</mosaic_0001>

<llo_original>
// kernel: transformer_fwd.1
$region0: #{transformer_fwd.1}
  #allocation0 [shape = 'u32[]', space=smem, size = 0x4, offset = 0x4, fixed_abs, tag = 'smem constant byte address 0x4 - core index']
  #allocation1 [shape = 'u32[72,128]{1,0:T(1,128)}', space=vmem, size = 0x9000, scoped, tag = 'internal scratch']
  %s0 = inlined_call_operand.smem [shape: u32[33], index: -1, kind: input, shape index: {}]
  %s1 = sld [smem:[%s0]]
  %s2 = scalar_lea.smem %s0, 1
  %s3 = sld [smem:[%s2]]
  %s4 = scalar_lea.smem %s0, 2
  %s5 = sld [smem:[%s4]]
  %s6 = scalar_lea.smem %s0, 3
  %s7 = sld [smem:[%s6]]
  %s8 = scalar_lea.smem %s0, 4
  %s9 = sld [smem:[%s8]]
  %s10 = scalar_lea.smem %s0, 5
  %s11 = sld [smem:[%s10]]
  %s12 = scalar_lea.smem %s0, 6
  %s13 = sld [smem:[%s12]]
  %s14 = scalar_lea.smem %s0, 7
  %s15 = sld [smem:[%s14]]
  %s16 = scalar_lea.smem %s0, 8
  %s17 = sld [smem:[%s16]]
  %s18 = scalar_lea.smem %s0, 9
  %s19 = sld [smem:[%s18]]
  %s20 = scalar_lea.smem %s0, 10
  %s21 = sld [smem:[%s20]]
  %s22 = scalar_lea.smem %s0, 11
  %s23 = sld [smem:[%s22]]
  %s24 = scalar_lea.smem %s0, 12
  %s25 = sld [smem:[%s24]]
  %s26 = scalar_lea.smem %s0, 13
  %s27 = sld [smem:[%s26]]
  %s28 = scalar_lea.smem %s0, 14
  %s29 = sld [smem:[%s28]]
  %s30 = scalar_lea.smem %s0, 15
  %s31 = sld [smem:[%s30]]
  %s32 = scalar_lea.smem %s0, 16
  %s33 = sld [smem:[%s32]]
  %s34 = scalar_lea.smem %s0, 17
  %s35 = sld [smem:[%s34]]
  %s36 = scalar_lea.smem %s0, 18
  %s37 = sld [smem:[%s36]]
  %s38 = scalar_lea.smem %s0, 19
  %s39 = sld [smem:[%s38]]
  %s40 = scalar_lea.smem %s0, 20
  %s41 = sld [smem:[%s40]]
  %s42 = scalar_lea.smem %s0, 21
  %s43 = sld [smem:[%s42]]
  %s44 = scalar_lea.smem %s0, 22
  %s45 = sld [smem:[%s44]]
  %s46 = scalar_lea.smem %s0, 23
  %s47 = sld [smem:[%s46]]
  %s48 = scalar_lea.smem %s0, 24
  %s49 = sld [smem:[%s48]]
  %s50 = scalar_lea.smem %s0, 25
  %s51 = sld [smem:[%s50]]
  %s52 = scalar_lea.smem %s0, 26
  %s53 = sld [smem:[%s52]]
  %s54 = scalar_lea.smem %s0, 27
  %s55 = sld [smem:[%s54]]
  %s56 = scalar_lea.smem %s0, 28
  %s57 = sld [smem:[%s56]]
  %s58 = scalar_lea.smem %s0, 29
  %s59 = sld [smem:[%s58]]
  %s60 = scalar_lea.smem %s0, 30
  %s61 = sld [smem:[%s60]]
  %s62 = scalar_lea.smem %s0, 31
  %s63 = sld [smem:[%s62]]
  %s64 = scalar_lea.smem %s0, 32
  %s65 = sld [smem:[%s64]]
  %s66 = sld [smem:[#allocation0]]
  $region161: #{transformer_fwd.1} parent=0
    _
  %s68 = ssub.s32 1, %s66
  %s69 = scalar_select 0, %s68, %s66
  $region1: #{transformer_fwd.1} parent=0
    #allocation2 [shape = 'u8[8192]{0}', space=vmem, size = 0x2000, scoped, tag = 'output window, operand 0']
    #allocation3 [shape = 's32[2]{0}', space=sflag, size = 0x8, scoped, tag = 'scoped memory for transformer_fwd.1']
    %70 = vsyncpa [#allocation3], 0
    %s71 = scalar_lea.sflag [#allocation3], 1
    %72 = vsyncpa %s71, 0
    loop: start=0, step=1, limit=4
    $region2: #{transformer_fwd.1} parent=1 // loop_pre_header
      _
    $region3: #{transformer_fwd.1} parent=1 // loop_header
      %s74 = sphi 0, %s78
      %p75 = scmp.ge.s32.totalorder %s74, 4
      %s84 = sphi 0, %s86
      %s87 = sphi 0, %s84
      %s88 = sphi 0, %s87
      %s104 = sphi 0, %s88
      %s110 = sphi 0, %s112
      %s113 = sphi 0, %s110
      %s114 = sphi 0, %s113
      %s130 = sphi 0, %s114
      %s136 = sphi 0, %s138
      %s139 = sphi 0, %s136
      %s140 = sphi 0, %s139
      %s156 = sphi 0, %s140
      %s160 = sphi 0, %s160
      %s162 = sphi 0, %s160
      %s163 = sphi 0, %s162
      %s177 = sphi 0, %s163
      %s181 = sphi 0, %s181
      %s183 = sphi 0, %s181
      %s184 = sphi 0, %s183
      %s198 = sphi 0, %s184
      %s202 = sphi 0, %s202
      %s204 = sphi 0, %s202
      %s205 = sphi 0, %s204
      %s219 = sphi 0, %s205
      %s223 = sphi 0, %s223
      %s225 = sphi 0, %s223
      %s226 = sphi 0, %s225
      %s240 = sphi 0, %s226
      %s244 = sphi 0, %s244
      %s246 = sphi 0, %s244
      %s247 = sphi 0, %s246
      %s261 = sphi 0, %s247
      %s265 = sphi 0, %s265
      %s267 = sphi 0, %s265
      %s268 = sphi 0, %s267
      %s282 = sphi 0, %s268
      %s286 = sphi 0, %s286
      %s288 = sphi 0, %s286
      %s289 = sphi 0, %s288
      %s303 = sphi 0, %s289
      %s307 = sphi 0, %s307
      %s309 = sphi 0, %s307
      %s310 = sphi 0, %s309
      %s324 = sphi 0, %s310
      %s328 = sphi 0, %s328
      %s330 = sphi 0, %s328
      %s331 = sphi 0, %s330
      %s345 = sphi 0, %s331
      %s349 = sphi 0, %s349
      %s351 = sphi 0, %s349
      %s352 = sphi 0, %s351
      %s366 = sphi 0, %s352
      %s370 = sphi 0, %s370
      %s372 = sphi 0, %s370
      %s373 = sphi 0, %s372
      %s387 = sphi 0, %s373
      %s391 = sphi 0, %s391
      %s393 = sphi 0, %s391
      %s394 = sphi 0, %s393
      %s408 = sphi 0, %s394
      %s412 = sphi 0, %s412
      %s414 = sphi 0, %s412
      %s415 = sphi 0, %s414
      %s429 = sphi 0, %s415
      %s433 = sphi 0, %s433
      %s435 = sphi 0, %s433
      %s436 = sphi 0, %s435
      %s450 = sphi 0, %s436
      %s454 = sphi 0, %s454
      %s456 = sphi 0, %s454
      %s457 = sphi 0, %s456
      %s471 = sphi 0, %s457
      %s475 = sphi 0, %s475
      %s477 = sphi 0, %s475
      %s478 = sphi 0, %s477
      %s492 = sphi 0, %s478
      %s496 = sphi 0, %s496
      %s498 = sphi 0, %s496
      %s499 = sphi 0, %s498
      %s513 = sphi 0, %s499
      %s517 = sphi 0, %s517
      %s519 = sphi 0, %s517
      %s520 = sphi 0, %s519
      %s534 = sphi 0, %s520
      %s538 = sphi 0, %s538
      %s540 = sphi 0, %s538
      %s541 = sphi 0, %s540
      %s555 = sphi 0, %s541
      %s559 = sphi 0, %s559
      %s561 = sphi 0, %s559
      %s562 = sphi 0, %s561
      %s576 = sphi 0, %s562
      %s580 = sphi 0, %s580
      %s582 = sphi 0, %s580
      %s583 = sphi 0, %s582
      %s597 = sphi 0, %s583
      %s601 = sphi 0, %s601
      %s603 = sphi 0, %s601
      %s604 = sphi 0, %s603
      %s618 = sphi 0, %s604
      %s622 = sphi 0, %s622
      %s624 = sphi 0, %s622
      %s625 = sphi 0, %s624
      %s639 = sphi 0, %s625
      %s643 = sphi 0, %s643
      %s645 = sphi 0, %s643
      %s646 = sphi 0, %s645
      %s660 = sphi 0, %s646
      %s664 = sphi 0, %s664
      %s666 = sphi 0, %s664
      %s667 = sphi 0, %s666
      %s681 = sphi 0, %s667
      %s685 = sphi 0, %s685
      %s687 = sphi 0, %s685
      %s688 = sphi 0, %s687
      %s702 = sphi 0, %s688
      %s706 = sphi 0, %s706
      %s708 = sphi 0, %s706
      %s709 = sphi 0, %s708
      %s723 = sphi 0, %s709
      %s727 = sphi 0, %s727
      %s729 = sphi 0, %s727
      %s730 = sphi 0, %s729
      %s744 = sphi 0, %s730
      %s748 = sphi 0, %s748
      %s750 = sphi 0, %s748
      %s751 = sphi 0, %s750
      %s765 = sphi 0, %s751
      %s771 = sphi 0, %s773
      %s774 = sphi 0, %s771
      %s775 = sphi 0, %s774
      %s791 = sphi 0, %s775
    $region4: #{transformer_fwd.1} parent=1 // loop_header_branch
      %77 = sbr.rel (%p75) target = $region8
    $region5: #{transformer_fwd.1} parent=1 // loop_body
      %s79 = ssub.s32 %s74, 1
      %s80 = ssub.s32 %s74, 2
      %s81 = sadd.s32 %s74, 1
      %s82 = ssub.s32 %s74, %s81
      %p83 = scmp.eq.s32.totalorder %s82, 0
      %s85 = sadd.s32 %s84, 1
      %s86 = scalar_select %p83, %s84, %s85
      %p89 = pneg %p83
      %p90 = scmp.eq.s32.totalorder %s74, 1
      %p91 = por %p89, %p90
      %p92 = scmp.ne.s32.totalorder %s84, %s87
      %p93 = scmp.eq.s32.totalorder %s74, 0
      %p94 = por %p92, %p93
      %p95 = scmp.ne.s32.totalorder %s84, %s87
      %p96 = scmp.eq.s32.totalorder %s79, 1
      %p97 = por %p95, %p96
      %p98 = scmp.ne.s32.totalorder %s87, %s88
      %p99 = scmp.eq.s32.totalorder %s79, 0
      %p100 = por %p98, %p99
      %p101 = scmp.ne.s32.totalorder %s87, %s88
      %p102 = scmp.eq.s32.totalorder %s80, 1
      %p103 = por %p101, %p102
      %p105 = scmp.ne.s32.totalorder %s88, %s104
      %p106 = scmp.eq.s32.totalorder %s80, 0
      %p107 = por %p105, %p106
      %s108 = ssub.s32 %s74, %s81
      %p109 = scmp.eq.s32.totalorder %s108, 0
      %s111 = sadd.s32 %s110, 1
      %s112 = scalar_select %p109, %s110, %s111
      %p115 = pneg %p109
      %p116 = scmp.eq.s32.totalorder %s74, 1
      %p117 = por %p115, %p116
      %p118 = scmp.ne.s32.totalorder %s110, %s113
      %p119 = scmp.eq.s32.totalorder %s74, 0
      %p120 = por %p118, %p119
      %p121 = scmp.ne.s32.totalorder %s110, %s113
      %p122 = scmp.eq.s32.totalorder %s79, 1
      %p123 = por %p121, %p122
      %p124 = scmp.ne.s32.totalorder %s113, %s114
      %p125 = scmp.eq.s32.totalorder %s79, 0
      %p126 = por %p124, %p125
      %p127 = scmp.ne.s32.totalorder %s113, %s114
      %p128 = scmp.eq.s32.totalorder %s80, 1
      %p129 = por %p127, %p128
      %p131 = scmp.ne.s32.totalorder %s114, %s130
      %p132 = scmp.eq.s32.totalorder %s80, 0
      %p133 = por %p131, %p132
      %s134 = ssub.s32 %s74, %s81
      %p135 = scmp.eq.s32.totalorder %s134, 0
      %s137 = sadd.s32 %s136, 1
      %s138 = scalar_select %p135, %s136, %s137
      %p141 = pneg %p135
      %p142 = scmp.eq.s32.totalorder %s74, 1
      %p143 = por %p141, %p142
      %p144 = scmp.ne.s32.totalorder %s136, %s139
      %p145 = scmp.eq.s32.totalorder %s74, 0
      %p146 = por %p144, %p145
      %p147 = scmp.ne.s32.totalorder %s136, %s139
      %p148 = scmp.eq.s32.totalorder %s79, 1
      %p149 = por %p147, %p148
      %p150 = scmp.ne.s32.totalorder %s139, %s140
      %p151 = scmp.eq.s32.totalorder %s79, 0
      %p152 = por %p150, %p151
      %p153 = scmp.ne.s32.totalorder %s139, %s140
      %p154 = scmp.eq.s32.totalorder %s80, 1
      %p155 = por %p153, %p154
      %p157 = scmp.ne.s32.totalorder %s140, %s156
      %p158 = scmp.eq.s32.totalorder %s80, 0
      %p159 = por %p157, %p158
      %s161 = sadd.s32 %s160, 1
      %p164 = scmp.eq.s32.totalorder %s74, 1
      %p165 = scmp.ne.s32.totalorder %s160, %s162
      %p166 = scmp.eq.s32.totalorder %s74, 0
      %p167 = por %p165, %p166
      %p168 = scmp.ne.s32.totalorder %s160, %s162
      %p169 = scmp.eq.s32.totalorder %s79, 1
      %p170 = por %p168, %p169
      %p171 = scmp.ne.s32.totalorder %s162, %s163
      %p172 = scmp.eq.s32.totalorder %s79, 0
      %p173 = por %p171, %p172
      %p174 = scmp.ne.s32.totalorder %s162, %s163
      %p175 = scmp.eq.s32.totalorder %s80, 1
      %p176 = por %p174, %p175
      %p178 = scmp.ne.s32.totalorder %s163, %s177
      %p179 = scmp.eq.s32.totalorder %s80, 0
      %p180 = por %p178, %p179
      %s182 = sadd.s32 %s181, 1
      %p185 = scmp.eq.s32.totalorder %s74, 1
      %p186 = scmp.ne.s32.totalorder %s181, %s183
      %p187 = scmp.eq.s32.totalorder %s74, 0
      %p188 = por %p186, %p187
      %p189 = scmp.ne.s32.totalorder %s181, %s183
      %p190 = scmp.eq.s32.totalorder %s79, 1
      %p191 = por %p189, %p190
      %p192 = scmp.ne.s32.totalorder %s183, %s184
      %p193 = scmp.eq.s32.totalorder %s79, 0
      %p194 = por %p192, %p193
      %p195 = scmp.ne.s32.totalorder %s183, %s184
      %p196 = scmp.eq.s32.totalorder %s80, 1
      %p197 = por %p195, %p196
      %p199 = scmp.ne.s32.totalorder %s184, %s198
      %p200 = scmp.eq.s32.totalorder %s80, 0
      %p201 = por %p199, %p200
      %s203 = sadd.s32 %s202, 1
      %p206 = scmp.eq.s32.totalorder %s74, 1
      %p207 = scmp.ne.s32.totalorder %s202, %s204
      %p208 = scmp.eq.s32.totalorder %s74, 0
      %p209 = por %p207, %p208
      %p210 = scmp.ne.s32.totalorder %s202, %s204
      %p211 = scmp.eq.s32.totalorder %s79, 1
      %p212 = por %p210, %p211
      %p213 = scmp.ne.s32.totalorder %s204, %s205
      %p214 = scmp.eq.s32.totalorder %s79, 0
      %p215 = por %p213, %p214
      %p216 = scmp.ne.s32.totalorder %s204, %s205
      %p217 = scmp.eq.s32.totalorder %s80, 1
      %p218 = por %p216, %p217
      %p220 = scmp.ne.s32.totalorder %s205, %s219
      %p221 = scmp.eq.s32.totalorder %s80, 0
      %p222 = por %p220, %p221
      %s224 = sadd.s32 %s223, 1
      %p227 = scmp.eq.s32.totalorder %s74, 1
      %p228 = scmp.ne.s32.totalorder %s223, %s225
      %p229 = scmp.eq.s32.totalorder %s74, 0
      %p230 = por %p228, %p229
      %p231 = scmp.ne.s32.totalorder %s223, %s225
      %p232 = scmp.eq.s32.totalorder %s79, 1
      %p233 = por %p231, %p232
      %p234 = scmp.ne.s32.totalorder %s225, %s226
      %p235 = scmp.eq.s32.totalorder %s79, 0
      %p236 = por %p234, %p235
      %p237 = scmp.ne.s32.totalorder %s225, %s226
      %p238 = scmp.eq.s32.totalorder %s80, 1
      %p239 = por %p237, %p238
      %p241 = scmp.ne.s32.totalorder %s226, %s240
      %p242 = scmp.eq.s32.totalorder %s80, 0
      %p243 = por %p241, %p242
      %s245 = sadd.s32 %s244, 1
      %p248 = scmp.eq.s32.totalorder %s74, 1
      %p249 = scmp.ne.s32.totalorder %s244, %s246
      %p250 = scmp.eq.s32.totalorder %s74, 0
      %p251 = por %p249, %p250
      %p252 = scmp.ne.s32.totalorder %s244, %s246
      %p253 = scmp.eq.s32.totalorder %s79, 1
      %p254 = por %p252, %p253
      %p255 = scmp.ne.s32.totalorder %s246, %s247
      %p256 = scmp.eq.s32.totalorder %s79, 0
      %p257 = por %p255, %p256
      %p258 = scmp.ne.s32.totalorder %s246, %s247
      %p259 = scmp.eq.s32.totalorder %s80, 1
      %p260 = por %p258, %p259
      %p262 = scmp.ne.s32.totalorder %s247, %s261
      %p263 = scmp.eq.s32.totalorder %s80, 0
      %p264 = por %p262, %p263
      %s266 = sadd.s32 %s265, 1
      %p269 = scmp.eq.s32.totalorder %s74, 1
      %p270 = scmp.ne.s32.totalorder %s265, %s267
      %p271 = scmp.eq.s32.totalorder %s74, 0
      %p272 = por %p270, %p271
      %p273 = scmp.ne.s32.totalorder %s265, %s267
      %p274 = scmp.eq.s32.totalorder %s79, 1
      %p275 = por %p273, %p274
      %p276 = scmp.ne.s32.totalorder %s267, %s268
      %p277 = scmp.eq.s32.totalorder %s79, 0
      %p278 = por %p276, %p277
      %p279 = scmp.ne.s32.totalorder %s267, %s268
      %p280 = scmp.eq.s32.totalorder %s80, 1
      %p281 = por %p279, %p280
      %p283 = scmp.ne.s32.totalorder %s268, %s282
      %p284 = scmp.eq.s32.totalorder %s80, 0
      %p285 = por %p283, %p284
      %s287 = sadd.s32 %s286, 1
      %p290 = scmp.eq.s32.totalorder %s74, 1
      %p291 = scmp.ne.s32.totalorder %s286, %s288
      %p292 = scmp.eq.s32.totalorder %s74, 0
      %p293 = por %p291, %p292
      %p294 = scmp.ne.s32.totalorder %s286, %s288
      %p295 = scmp.eq.s32.totalorder %s79, 1
      %p296 = por %p294, %p295
      %p297 = scmp.ne.s32.totalorder %s288, %s289
      %p298 = scmp.eq.s32.totalorder %s79, 0
      %p299 = por %p297, %p298
      %p300 = scmp.ne.s32.totalorder %s288, %s289
      %p301 = scmp.eq.s32.totalorder %s80, 1
      %p302 = por %p300, %p301
      %p304 = scmp.ne.s32.totalorder %s289, %s303
      %p305 = scmp.eq.s32.totalorder %s80, 0
      %p306 = por %p304, %p305
      %s308 = sadd.s32 %s307, 1
      %p311 = scmp.eq.s32.totalorder %s74, 1
      %p312 = scmp.ne.s32.totalorder %s307, %s309
      %p313 = scmp.eq.s32.totalorder %s74, 0
      %p314 = por %p312, %p313
      %p315 = scmp.ne.s32.totalorder %s307, %s309
      %p316 = scmp.eq.s32.totalorder %s79, 1
      %p317 = por %p315, %p316
      %p318 = scmp.ne.s32.totalorder %s309, %s310
      %p319 = scmp.eq.s32.totalorder %s79, 0
      %p320 = por %p318, %p319
      %p321 = scmp.ne.s32.totalorder %s309, %s310
      %p322 = scmp.eq.s32.totalorder %s80, 1
      %p323 = por %p321, %p322
      %p325 = scmp.ne.s32.totalorder %s310, %s324
      %p326 = scmp.eq.s32.totalorder %s80, 0
      %p327 = por %p325, %p326
      %s329 = sadd.s32 %s328, 1
      %p332 = scmp.eq.s32.totalorder %s74, 1
      %p333 = scmp.ne.s32.totalorder %s328, %s330
      %p334 = scmp.eq.s32.totalorder %s74, 0
      %p335 = por %p333, %p334
      %p336 = scmp.ne.s32.totalorder %s328, %s330
      %p337 = scmp.eq.s32.totalorder %s79, 1
      %p338 = por %p336, %p337
      %p339 = scmp.ne.s32.totalorder %s330, %s331
      %p340 = scmp.eq.s32.totalorder %s79, 0
      %p341 = por %p339, %p340
      %p342 = scmp.ne.s32.totalorder %s330, %s331
      %p343 = scmp.eq.s32.totalorder %s80, 1
      %p344 = por %p342, %p343
      %p346 = scmp.ne.s32.totalorder %s331, %s345
      %p347 = scmp.eq.s32.totalorder %s80, 0
      %p348 = por %p346, %p347
      %s350 = sadd.s32 %s349, 1
      %p353 = scmp.eq.s32.totalorder %s74, 1
      %p354 = scmp.ne.s32.totalorder %s349, %s351
      %p355 = scmp.eq.s32.totalorder %s74, 0
      %p356 = por %p354, %p355
      %p357 = scmp.ne.s32.totalorder %s349, %s351
      %p358 = scmp.eq.s32.totalorder %s79, 1
      %p359 = por %p357, %p358
      %p360 = scmp.ne.s32.totalorder %s351, %s352
      %p361 = scmp.eq.s32.totalorder %s79, 0
      %p362 = por %p360, %p361
      %p363 = scmp.ne.s32.totalorder %s351, %s352
      %p364 = scmp.eq.s32.totalorder %s80, 1
      %p365 = por %p363, %p364
      %p367 = scmp.ne.s32.totalorder %s352, %s366
      %p368 = scmp.eq.s32.totalorder %s80, 0
      %p369 = por %p367, %p368
      %s371 = sadd.s32 %s370, 1
      %p374 = scmp.eq.s32.totalorder %s74, 1
      %p375 = scmp.ne.s32.totalorder %s370, %s372
      %p376 = scmp.eq.s32.totalorder %s74, 0
      %p377 = por %p375, %p376
      %p378 = scmp.ne.s32.totalorder %s370, %s372
      %p379 = scmp.eq.s32.totalorder %s79, 1
      %p380 = por %p378, %p379
      %p381 = scmp.ne.s32.totalorder %s372, %s373
      %p382 = scmp.eq.s32.totalorder %s79, 0
      %p383 = por %p381, %p382
      %p384 = scmp.ne.s32.totalorder %s372, %s373
      %p385 = scmp.eq.s32.totalorder %s80, 1
      %p386 = por %p384, %p385
      %p388 = scmp.ne.s32.totalorder %s373, %s387
      %p389 = scmp.eq.s32.totalorder %s80, 0
      %p390 = por %p388, %p389
      %s392 = sadd.s32 %s391, 1
      %p395 = scmp.eq.s32.totalorder %s74, 1
      %p396 = scmp.ne.s32.totalorder %s391, %s393
      %p397 = scmp.eq.s32.totalorder %s74, 0
      %p398 = por %p396, %p397
      %p399 = scmp.ne.s32.totalorder %s391, %s393
      %p400 = scmp.eq.s32.totalorder %s79, 1
      %p401 = por %p399, %p400
      %p402 = scmp.ne.s32.totalorder %s393, %s394
      %p403 = scmp.eq.s32.totalorder %s79, 0
      %p404 = por %p402, %p403
      %p405 = scmp.ne.s32.totalorder %s393, %s394
      %p406 = scmp.eq.s32.totalorder %s80, 1
      %p407 = por %p405, %p406
      %p409 = scmp.ne.s32.totalorder %s394, %s408
      %p410 = scmp.eq.s32.totalorder %s80, 0
      %p411 = por %p409, %p410
      %s413 = sadd.s32 %s412, 1
      %p416 = scmp.eq.s32.totalorder %s74, 1
      %p417 = scmp.ne.s32.totalorder %s412, %s414
      %p418 = scmp.eq.s32.totalorder %s74, 0
      %p419 = por %p417, %p418
      %p420 = scmp.ne.s32.totalorder %s412, %s414
      %p421 = scmp.eq.s32.totalorder %s79, 1
      %p422 = por %p420, %p421
      %p423 = scmp.ne.s32.totalorder %s414, %s415
      %p424 = scmp.eq.s32.totalorder %s79, 0
      %p425 = por %p423, %p424
      %p426 = scmp.ne.s32.totalorder %s414, %s415
      %p427 = scmp.eq.s32.totalorder %s80, 1
      %p428 = por %p426, %p427
      %p430 = scmp.ne.s32.totalorder %s415, %s429
      %p431 = scmp.eq.s32.totalorder %s80, 0
      %p432 = por %p430, %p431
      %s434 = sadd.s32 %s433, 1
      %p437 = scmp.eq.s32.totalorder %s74, 1
      %p438 = scmp.ne.s32.totalorder %s433, %s435
      %p439 = scmp.eq.s32.totalorder %s74, 0
      %p440 = por %p438, %p439
      %p441 = scmp.ne.s32.totalorder %s433, %s435
      %p442 = scmp.eq.s32.totalorder %s79, 1
      %p443 = por %p441, %p442
      %p444 = scmp.ne.s32.totalorder %s435, %s436
      %p445 = scmp.eq.s32.totalorder %s79, 0
      %p446 = por %p444, %p445
      %p447 = scmp.ne.s32.totalorder %s435, %s436
      %p448 = scmp.eq.s32.totalorder %s80, 1
      %p449 = por %p447, %p448
      %p451 = scmp.ne.s32.totalorder %s436, %s450
      %p452 = scmp.eq.s32.totalorder %s80, 0
      %p453 = por %p451, %p452
      %s455 = sadd.s32 %s454, 1
      %p458 = scmp.eq.s32.totalorder %s74, 1
      %p459 = scmp.ne.s32.totalorder %s454, %s456
      %p460 = scmp.eq.s32.totalorder %s74, 0
      %p461 = por %p459, %p460
      %p462 = scmp.ne.s32.totalorder %s454, %s456
      %p463 = scmp.eq.s32.totalorder %s79, 1
      %p464 = por %p462, %p463
      %p465 = scmp.ne.s32.totalorder %s456, %s457
      %p466 = scmp.eq.s32.totalorder %s79, 0
      %p467 = por %p465, %p466
      %p468 = scmp.ne.s32.totalorder %s456, %s457
      %p469 = scmp.eq.s32.totalorder %s80, 1
      %p470 = por %p468, %p469
      %p472 = scmp.ne.s32.totalorder %s457, %s471
      %p473 = scmp.eq.s32.totalorder %s80, 0
      %p474 = por %p472, %p473
      %s476 = sadd.s32 %s475, 1
      %p479 = scmp.eq.s32.totalorder %s74, 1
      %p480 = scmp.ne.s32.totalorder %s475, %s477
      %p481 = scmp.eq.s32.totalorder %s74, 0
      %p482 = por %p480, %p481
      %p483 = scmp.ne.s32.totalorder %s475, %s477
      %p484 = scmp.eq.s32.totalorder %s79, 1
      %p485 = por %p483, %p484
      %p486 = scmp.ne.s32.totalorder %s477, %s478
      %p487 = scmp.eq.s32.totalorder %s79, 0
      %p488 = por %p486, %p487
      %p489 = scmp.ne.s32.totalorder %s477, %s478
      %p490 = scmp.eq.s32.totalorder %s80, 1
      %p491 = por %p489, %p490
      %p493 = scmp.ne.s32.totalorder %s478, %s492
      %p494 = scmp.eq.s32.totalorder %s80, 0
      %p495 = por %p493, %p494
      %s497 = sadd.s32 %s496, 1
      %p500 = scmp.eq.s32.totalorder %s74, 1
      %p501 = scmp.ne.s32.totalorder %s496, %s498
      %p502 = scmp.eq.s32.totalorder %s74, 0
      %p503 = por %p501, %p502
      %p504 = scmp.ne.s32.totalorder %s496, %s498
      %p505 = scmp.eq.s32.totalorder %s79, 1
      %p506 = por %p504, %p505
      %p507 = scmp.ne.s32.totalorder %s498, %s499
      %p508 = scmp.eq.s32.totalorder %s79, 0
      %p509 = por %p507, %p508
      %p510 = scmp.ne.s32.totalorder %s498, %s499
      %p511 = scmp.eq.s32.totalorder %s80, 1
      %p512 = por %p510, %p511
      %p514 = scmp.ne.s32.totalorder %s499, %s513
      %p515 = scmp.eq.s32.totalorder %s80, 0
      %p516 = por %p514, %p515
      %s518 = sadd.s32 %s517, 1
      %p521 = scmp.eq.s32.totalorder %s74, 1
      %p522 = scmp.ne.s32.totalorder %s517, %s519
      %p523 = scmp.eq.s32.totalorder %s74, 0
      %p524 = por %p522, %p523
      %p525 = scmp.ne.s32.totalorder %s517, %s519
      %p526 = scmp.eq.s32.totalorder %s79, 1
      %p527 = por %p525, %p526
      %p528 = scmp.ne.s32.totalorder %s519, %s520
      %p529 = scmp.eq.s32.totalorder %s79, 0
      %p530 = por %p528, %p529
      %p531 = scmp.ne.s32.totalorder %s519, %s520
      %p532 = scmp.eq.s32.totalorder %s80, 1
      %p533 = por %p531, %p532
      %p535 = scmp.ne.s32.totalorder %s520, %s534
      %p536 = scmp.eq.s32.totalorder %s80, 0
      %p537 = por %p535, %p536
      %s539 = sadd.s32 %s538, 1
      %p542 = scmp.eq.s32.totalorder %s74, 1
      %p543 = scmp.ne.s32.totalorder %s538, %s540
      %p544 = scmp.eq.s32.totalorder %s74, 0
      %p545 = por %p543, %p544
      %p546 = scmp.ne.s32.totalorder %s538, %s540
      %p547 = scmp.eq.s32.totalorder %s79, 1
      %p548 = por %p546, %p547
      %p549 = scmp.ne.s32.totalorder %s540, %s541
      %p550 = scmp.eq.s32.totalorder %s79, 0
      %p551 = por %p549, %p550
      %p552 = scmp.ne.s32.totalorder %s540, %s541
      %p553 = scmp.eq.s32.totalorder %s80, 1
      %p554 = por %p552, %p553
      %p556 = scmp.ne.s32.totalorder %s541, %s555
      %p557 = scmp.eq.s32.totalorder %s80, 0
      %p558 = por %p556, %p557
      %s560 = sadd.s32 %s559, 1
      %p563 = scmp.eq.s32.totalorder %s74, 1
      %p564 = scmp.ne.s32.totalorder %s559, %s561
      %p565 = scmp.eq.s32.totalorder %s74, 0
      %p566 = por %p564, %p565
      %p567 = scmp.ne.s32.totalorder %s559, %s561
      %p568 = scmp.eq.s32.totalorder %s79, 1
      %p569 = por %p567, %p568
      %p570 = scmp.ne.s32.totalorder %s561, %s562
      %p571 = scmp.eq.s32.totalorder %s79, 0
      %p572 = por %p570, %p571
      %p573 = scmp.ne.s32.totalorder %s561, %s562
      %p574 = scmp.eq.s32.totalorder %s80, 1
      %p575 = por %p573, %p574
      %p577 = scmp.ne.s32.totalorder %s562, %s576
      %p578 = scmp.eq.s32.totalorder %s80, 0
      %p579 = por %p577, %p578
      %s581 = sadd.s32 %s580, 1
      %p584 = scmp.eq.s32.totalorder %s74, 1
      %p585 = scmp.ne.s32.totalorder %s580, %s582
      %p586 = scmp.eq.s32.totalorder %s74, 0
      %p587 = por %p585, %p586
      %p588 = scmp.ne.s32.totalorder %s580, %s582
      %p589 = scmp.eq.s32.totalorder %s79, 1
      %p590 = por %p588, %p589
      %p591 = scmp.ne.s32.totalorder %s582, %s583
      %p592 = scmp.eq.s32.totalorder %s79, 0
      %p593 = por %p591, %p592
      %p594 = scmp.ne.s32.totalorder %s582, %s583
      %p595 = scmp.eq.s32.totalorder %s80, 1
      %p596 = por %p594, %p595
      %p598 = scmp.ne.s32.totalorder %s583, %s597
      %p599 = scmp.eq.s32.totalorder %s80, 0
      %p600 = por %p598, %p599
      %s602 = sadd.s32 %s601, 1
      %p605 = scmp.eq.s32.totalorder %s74, 1
      %p606 = scmp.ne.s32.totalorder %s601, %s603
      %p607 = scmp.eq.s32.totalorder %s74, 0
      %p608 = por %p606, %p607
      %p609 = scmp.ne.s32.totalorder %s601, %s603
      %p610 = scmp.eq.s32.totalorder %s79, 1
      %p611 = por %p609, %p610
      %p612 = scmp.ne.s32.totalorder %s603, %s604
      %p613 = scmp.eq.s32.totalorder %s79, 0
      %p614 = por %p612, %p613
      %p615 = scmp.ne.s32.totalorder %s603, %s604
      %p616 = scmp.eq.s32.totalorder %s80, 1
      %p617 = por %p615, %p616
      %p619 = scmp.ne.s32.totalorder %s604, %s618
      %p620 = scmp.eq.s32.totalorder %s80, 0
      %p621 = por %p619, %p620
      %s623 = sadd.s32 %s622, 1
      %p626 = scmp.eq.s32.totalorder %s74, 1
      %p627 = scmp.ne.s32.totalorder %s622, %s624
      %p628 = scmp.eq.s32.totalorder %s74, 0
      %p629 = por %p627, %p628
      %p630 = scmp.ne.s32.totalorder %s622, %s624
      %p631 = scmp.eq.s32.totalorder %s79, 1
      %p632 = por %p630, %p631
      %p633 = scmp.ne.s32.totalorder %s624, %s625
      %p634 = scmp.eq.s32.totalorder %s79, 0
      %p635 = por %p633, %p634
      %p636 = scmp.ne.s32.totalorder %s624, %s625
      %p637 = scmp.eq.s32.totalorder %s80, 1
      %p638 = por %p636, %p637
      %p640 = scmp.ne.s32.totalorder %s625, %s639
      %p641 = scmp.eq.s32.totalorder %s80, 0
      %p642 = por %p640, %p641
      %s644 = sadd.s32 %s643, 1
      %p647 = scmp.eq.s32.totalorder %s74, 1
      %p648 = scmp.ne.s32.totalorder %s643, %s645
      %p649 = scmp.eq.s32.totalorder %s74, 0
      %p650 = por %p648, %p649
      %p651 = scmp.ne.s32.totalorder %s643, %s645
      %p652 = scmp.eq.s32.totalorder %s79, 1
      %p653 = por %p651, %p652
      %p654 = scmp.ne.s32.totalorder %s645, %s646
      %p655 = scmp.eq.s32.totalorder %s79, 0
      %p656 = por %p654, %p655
      %p657 = scmp.ne.s32.totalorder %s645, %s646
      %p658 = scmp.eq.s32.totalorder %s80, 1
      %p659 = por %p657, %p658
      %p661 = scmp.ne.s32.totalorder %s646, %s660
      %p662 = scmp.eq.s32.totalorder %s80, 0
      %p663 = por %p661, %p662
      %s665 = sadd.s32 %s664, 1
      %p668 = scmp.eq.s32.totalorder %s74, 1
      %p669 = scmp.ne.s32.totalorder %s664, %s666
      %p670 = scmp.eq.s32.totalorder %s74, 0
      %p671 = por %p669, %p670
      %p672 = scmp.ne.s32.totalorder %s664, %s666
      %p673 = scmp.eq.s32.totalorder %s79, 1
      %p674 = por %p672, %p673
      %p675 = scmp.ne.s32.totalorder %s666, %s667
      %p676 = scmp.eq.s32.totalorder %s79, 0
      %p677 = por %p675, %p676
      %p678 = scmp.ne.s32.totalorder %s666, %s667
      %p679 = scmp.eq.s32.totalorder %s80, 1
      %p680 = por %p678, %p679
      %p682 = scmp.ne.s32.totalorder %s667, %s681
      %p683 = scmp.eq.s32.totalorder %s80, 0
      %p684 = por %p682, %p683
      %s686 = sadd.s32 %s685, 1
      %p689 = scmp.eq.s32.totalorder %s74, 1
      %p690 = scmp.ne.s32.totalorder %s685, %s687
      %p691 = scmp.eq.s32.totalorder %s74, 0
      %p692 = por %p690, %p691
      %p693 = scmp.ne.s32.totalorder %s685, %s687
      %p694 = scmp.eq.s32.totalorder %s79, 1
      %p695 = por %p693, %p694
      %p696 = scmp.ne.s32.totalorder %s687, %s688
      %p697 = scmp.eq.s32.totalorder %s79, 0
      %p698 = por %p696, %p697
      %p699 = scmp.ne.s32.totalorder %s687, %s688
      %p700 = scmp.eq.s32.totalorder %s80, 1
      %p701 = por %p699, %p700
      %p703 = scmp.ne.s32.totalorder %s688, %s702
      %p704 = scmp.eq.s32.totalorder %s80, 0
      %p705 = por %p703, %p704
      %s707 = sadd.s32 %s706, 1
      %p710 = scmp.eq.s32.totalorder %s74, 1
      %p711 = scmp.ne.s32.totalorder %s706, %s708
      %p712 = scmp.eq.s32.totalorder %s74, 0
      %p713 = por %p711, %p712
      %p714 = scmp.ne.s32.totalorder %s706, %s708
      %p715 = scmp.eq.s32.totalorder %s79, 1
      %p716 = por %p714, %p715
      %p717 = scmp.ne.s32.totalorder %s708, %s709
      %p718 = scmp.eq.s32.totalorder %s79, 0
      %p719 = por %p717, %p718
      %p720 = scmp.ne.s32.totalorder %s708, %s709
      %p721 = scmp.eq.s32.totalorder %s80, 1
      %p722 = por %p720, %p721
      %p724 = scmp.ne.s32.totalorder %s709, %s723
      %p725 = scmp.eq.s32.totalorder %s80, 0
      %p726 = por %p724, %p725
      %s728 = sadd.s32 %s727, 1
      %p731 = scmp.eq.s32.totalorder %s74, 1
      %p732 = scmp.ne.s32.totalorder %s727, %s729
      %p733 = scmp.eq.s32.totalorder %s74, 0
      %p734 = por %p732, %p733
      %p735 = scmp.ne.s32.totalorder %s727, %s729
      %p736 = scmp.eq.s32.totalorder %s79, 1
      %p737 = por %p735, %p736
      %p738 = scmp.ne.s32.totalorder %s729, %s730
      %p739 = scmp.eq.s32.totalorder %s79, 0
      %p740 = por %p738, %p739
      %p741 = scmp.ne.s32.totalorder %s729, %s730
      %p742 = scmp.eq.s32.totalorder %s80, 1
      %p743 = por %p741, %p742
      %p745 = scmp.ne.s32.totalorder %s730, %s744
      %p746 = scmp.eq.s32.totalorder %s80, 0
      %p747 = por %p745, %p746
      %s749 = sadd.s32 %s748, 1
      %p752 = scmp.eq.s32.totalorder %s74, 1
      %p753 = scmp.ne.s32.totalorder %s748, %s750
      %p754 = scmp.eq.s32.totalorder %s74, 0
      %p755 = por %p753, %p754
      %p756 = scmp.ne.s32.totalorder %s748, %s750
      %p757 = scmp.eq.s32.totalorder %s79, 1
      %p758 = por %p756, %p757
      %p759 = scmp.ne.s32.totalorder %s750, %s751
      %p760 = scmp.eq.s32.totalorder %s79, 0
      %p761 = por %p759, %p760
      %p762 = scmp.ne.s32.totalorder %s750, %s751
      %p763 = scmp.eq.s32.totalorder %s80, 1
      %p764 = por %p762, %p763
      %p766 = scmp.ne.s32.totalorder %s751, %s765
      %p767 = scmp.eq.s32.totalorder %s80, 0
      %p768 = por %p766, %p767
      %s769 = ssub.s32 %s74, %s81
      %p770 = scmp.eq.s32.totalorder %s769, 0
      %s772 = sadd.s32 %s771, 1
      %s773 = scalar_select %p770, %s771, %s772
      %p776 = pneg %p770
      %p777 = scmp.eq.s32.totalorder %s74, 1
      %p778 = por %p776, %p777
      %p779 = scmp.ne.s32.totalorder %s771, %s774
      %p780 = scmp.eq.s32.totalorder %s74, 0
      %p781 = por %p779, %p780
      %p782 = scmp.ne.s32.totalorder %s771, %s774
      %p783 = scmp.eq.s32.totalorder %s79, 1
      %p784 = por %p782, %p783
      %p785 = scmp.ne.s32.totalorder %s774, %s775
      %p786 = scmp.eq.s32.totalorder %s79, 0
      %p787 = por %p785, %p786
      %p788 = scmp.ne.s32.totalorder %s774, %s775
      %p789 = scmp.eq.s32.totalorder %s80, 1
      %p790 = por %p788, %p789
      %p792 = scmp.ne.s32.totalorder %s775, %s791
      %p793 = scmp.eq.s32.totalorder %s80, 0
      %p794 = por %p792, %p793
      %p795 = scmp.le.s32.totalorder 1, %s74
      %p796 = scmp.lt.s32.totalorder %s74, 3
      %p797 = pnand %p795, %p796
      %p798 = pneg %p797
      // Predicated region
      $region9: #{transformer_fwd.1} parent=5 // pred_check
        _
      $region10: #{transformer_fwd.1} parent=5 // pred_check_branch
        %800 = sbr.rel (%p797) target = $region12
      $region11: #{transformer_fwd.1} parent=5 // pred_region
        %s801 = ssub.s32 %s74, 1
        // Predicated region
        $region13: #{transformer_fwd.1} parent=11 // pred_check
          %p802 = pneg %p173
        $region14: #{transformer_fwd.1} parent=11 // pred_check_branch
          %804 = sbr.rel (%p802) target = $region16
        $region15: #{transformer_fwd.1} parent=11 // pred_region
          _
        $region16: #{transformer_fwd.1} parent=11 // pred_fallthru
          _
        // Predicated region
        $region17: #{transformer_fwd.1} parent=11 // pred_check
          %p805 = pneg %p194
        $region18: #{transformer_fwd.1} parent=11 // pred_check_branch
          %807 = sbr.rel (%p805) target = $region20
        $region19: #{transformer_fwd.1} parent=11 // pred_region
          _
        $region20: #{transformer_fwd.1} parent=11 // pred_fallthru
          _
        // Predicated region
        $region21: #{transformer_fwd.1} parent=11 // pred_check
          %p808 = pneg %p215
        $region22: #{transformer_fwd.1} parent=11 // pred_check_branch
          %810 = sbr.rel (%p808) target = $region24
        $region23: #{transformer_fwd.1} parent=11 // pred_region
          _
        $region24: #{transformer_fwd.1} parent=11 // pred_fallthru
          _
        // Predicated region
        $region25: #{transformer_fwd.1} parent=11 // pred_check
          %p811 = pneg %p236
        $region26: #{transformer_fwd.1} parent=11 // pred_check_branch
          %813 = sbr.rel (%p811) target = $region28
        $region27: #{transformer_fwd.1} parent=11 // pred_region
          _
        $region28: #{transformer_fwd.1} parent=11 // pred_fallthru
          _
        // Predicated region
        $region29: #{transformer_fwd.1} parent=11 // pred_check
          %p814 = pneg %p257
        $region30: #{transformer_fwd.1} parent=11 // pred_check_branch
          %816 = sbr.rel (%p814) target = $region32
        $region31: #{transformer_fwd.1} parent=11 // pred_region
          _
        $region32: #{transformer_fwd.1} parent=11 // pred_fallthru
          _
        // Predicated region
        $region33: #{transformer_fwd.1} parent=11 // pred_check
          %p817 = pneg %p278
        $region34: #{transformer_fwd.1} parent=11 // pred_check_branch
          %819 = sbr.rel (%p817) target = $region36
        $region35: #{transformer_fwd.1} parent=11 // pred_region
          _
        $region36: #{transformer_fwd.1} parent=11 // pred_fallthru
          _
        // Predicated region
        $region37: #{transformer_fwd.1} parent=11 // pred_check
          %p820 = pneg %p299
        $region38: #{transformer_fwd.1} parent=11 // pred_check_branch
          %822 = sbr.rel (%p820) target = $region40
        $region39: #{transformer_fwd.1} parent=11 // pred_region
          _
        $region40: #{transformer_fwd.1} parent=11 // pred_fallthru
          _
        // Predicated region
        $region41: #{transformer_fwd.1} parent=11 // pred_check
          %p823 = pneg %p320
        $region42: #{transformer_fwd.1} parent=11 // pred_check_branch
          %825 = sbr.rel (%p823) target = $region44
        $region43: #{transformer_fwd.1} parent=11 // pred_region
          _
        $region44: #{transformer_fwd.1} parent=11 // pred_fallthru
          _
        // Predicated region
        $region45: #{transformer_fwd.1} parent=11 // pred_check
          %p826 = pneg %p341
        $region46: #{transformer_fwd.1} parent=11 // pred_check_branch
          %828 = sbr.rel (%p826) target = $region48
        $region47: #{transformer_fwd.1} parent=11 // pred_region
          _
        $region48: #{transformer_fwd.1} parent=11 // pred_fallthru
          _
        // Predicated region
        $region49: #{transformer_fwd.1} parent=11 // pred_check
          %p829 = pneg %p362
        $region50: #{transformer_fwd.1} parent=11 // pred_check_branch
          %831 = sbr.rel (%p829) target = $region52
        $region51: #{transformer_fwd.1} parent=11 // pred_region
          _
        $region52: #{transformer_fwd.1} parent=11 // pred_fallthru
          _
        // Predicated region
        $region53: #{transformer_fwd.1} parent=11 // pred_check
          %p832 = pneg %p383
        $region54: #{transformer_fwd.1} parent=11 // pred_check_branch
          %834 = sbr.rel (%p832) target = $region56
        $region55: #{transformer_fwd.1} parent=11 // pred_region
          _
        $region56: #{transformer_fwd.1} parent=11 // pred_fallthru
          _
        // Predicated region
        $region57: #{transformer_fwd.1} parent=11 // pred_check
          %p835 = pneg %p404
        $region58: #{transformer_fwd.1} parent=11 // pred_check_branch
          %837 = sbr.rel (%p835) target = $region60
        $region59: #{transformer_fwd.1} parent=11 // pred_region
          _
        $region60: #{transformer_fwd.1} parent=11 // pred_fallthru
          _
        // Predicated region
        $region61: #{transformer_fwd.1} parent=11 // pred_check
          %p838 = pneg %p425
        $region62: #{transformer_fwd.1} parent=11 // pred_check_branch
          %840 = sbr.rel (%p838) target = $region64
        $region63: #{transformer_fwd.1} parent=11 // pred_region
          _
        $region64: #{transformer_fwd.1} parent=11 // pred_fallthru
          _
        // Predicated region
        $region65: #{transformer_fwd.1} parent=11 // pred_check
          %p841 = pneg %p446
        $region66: #{transformer_fwd.1} parent=11 // pred_check_branch
          %843 = sbr.rel (%p841) target = $region68
        $region67: #{transformer_fwd.1} parent=11 // pred_region
          _
        $region68: #{transformer_fwd.1} parent=11 // pred_fallthru
          _
        // Predicated region
        $region69: #{transformer_fwd.1} parent=11 // pred_check
          %p844 = pneg %p467
        $region70: #{transformer_fwd.1} parent=11 // pred_check_branch
          %846 = sbr.rel (%p844) target = $region72
        $region71: #{transformer_fwd.1} parent=11 // pred_region
          _
        $region72: #{transformer_fwd.1} parent=11 // pred_fallthru
          _
        // Predicated region
        $region73: #{transformer_fwd.1} parent=11 // pred_check
          %p847 = pneg %p488
        $region74: #{transformer_fwd.1} parent=11 // pred_check_branch
          %849 = sbr.rel (%p847) target = $region76
        $region75: #{transformer_fwd.1} parent=11 // pred_region
          _
        $region76: #{transformer_fwd.1} parent=11 // pred_fallthru
          _
        // Predicated region
        $region77: #{transformer_fwd.1} parent=11 // pred_check
          %p850 = pneg %p509
        $region78: #{transformer_fwd.1} parent=11 // pred_check_branch
          %852 = sbr.rel (%p850) target = $region80
        $region79: #{transformer_fwd.1} parent=11 // pred_region
          _
        $region80: #{transformer_fwd.1} parent=11 // pred_fallthru
          _
        // Predicated region
        $region81: #{transformer_fwd.1} parent=11 // pred_check
          %p853 = pneg %p530
        $region82: #{transformer_fwd.1} parent=11 // pred_check_branch
          %855 = sbr.rel (%p853) target = $region84
        $region83: #{transformer_fwd.1} parent=11 // pred_region
          _
        $region84: #{transformer_fwd.1} parent=11 // pred_fallthru
          _
        // Predicated region
        $region85: #{transformer_fwd.1} parent=11 // pred_check
          %p856 = pneg %p551
        $region86: #{transformer_fwd.1} parent=11 // pred_check_branch
          %858 = sbr.rel (%p856) target = $region88
        $region87: #{transformer_fwd.1} parent=11 // pred_region
          _
        $region88: #{transformer_fwd.1} parent=11 // pred_fallthru
          _
        // Predicated region
        $region89: #{transformer_fwd.1} parent=11 // pred_check
          %p859 = pneg %p572
        $region90: #{transformer_fwd.1} parent=11 // pred_check_branch
          %861 = sbr.rel (%p859) target = $region92
        $region91: #{transformer_fwd.1} parent=11 // pred_region
          _
        $region92: #{transformer_fwd.1} parent=11 // pred_fallthru
          _
        // Predicated region
        $region93: #{transformer_fwd.1} parent=11 // pred_check
          %p862 = pneg %p593
        $region94: #{transformer_fwd.1} parent=11 // pred_check_branch
          %864 = sbr.rel (%p862) target = $region96
        $region95: #{transformer_fwd.1} parent=11 // pred_region
          _
        $region96: #{transformer_fwd.1} parent=11 // pred_fallthru
          _
        // Predicated region
        $region97: #{transformer_fwd.1} parent=11 // pred_check
          %p865 = pneg %p614
        $region98: #{transformer_fwd.1} parent=11 // pred_check_branch
          %867 = sbr.rel (%p865) target = $region100
        $region99: #{transformer_fwd.1} parent=11 // pred_region
          _
        $region100: #{transformer_fwd.1} parent=11 // pred_fallthru
          _
        // Predicated region
        $region101: #{transformer_fwd.1} parent=11 // pred_check
          %p868 = pneg %p635
        $region102: #{transformer_fwd.1} parent=11 // pred_check_branch
          %870 = sbr.rel (%p868) target = $region104
        $region103: #{transformer_fwd.1} parent=11 // pred_region
          _
        $region104: #{transformer_fwd.1} parent=11 // pred_fallthru
          _
        // Predicated region
        $region105: #{transformer_fwd.1} parent=11 // pred_check
          %p871 = pneg %p656
        $region106: #{transformer_fwd.1} parent=11 // pred_check_branch
          %873 = sbr.rel (%p871) target = $region108
        $region107: #{transformer_fwd.1} parent=11 // pred_region
          _
        $region108: #{transformer_fwd.1} parent=11 // pred_fallthru
          _
        // Predicated region
        $region109: #{transformer_fwd.1} parent=11 // pred_check
          %p874 = pneg %p677
        $region110: #{transformer_fwd.1} parent=11 // pred_check_branch
          %876 = sbr.rel (%p874) target = $region112
        $region111: #{transformer_fwd.1} parent=11 // pred_region
          _
        $region112: #{transformer_fwd.1} parent=11 // pred_fallthru
          _
        // Predicated region
        $region113: #{transformer_fwd.1} parent=11 // pred_check
          %p877 = pneg %p698
        $region114: #{transformer_fwd.1} parent=11 // pred_check_branch
          %879 = sbr.rel (%p877) target = $region116
        $region115: #{transformer_fwd.1} parent=11 // pred_region
          _
        $region116: #{transformer_fwd.1} parent=11 // pred_fallthru
          _
        // Predicated region
        $region117: #{transformer_fwd.1} parent=11 // pred_check
          %p880 = pneg %p719
        $region118: #{transformer_fwd.1} parent=11 // pred_check_branch
          %882 = sbr.rel (%p880) target = $region120
        $region119: #{transformer_fwd.1} parent=11 // pred_region
          _
        $region120: #{transformer_fwd.1} parent=11 // pred_fallthru
          _
        // Predicated region
        $region121: #{transformer_fwd.1} parent=11 // pred_check
          %p883 = pneg %p740
        $region122: #{transformer_fwd.1} parent=11 // pred_check_branch
          %885 = sbr.rel (%p883) target = $region124
        $region123: #{transformer_fwd.1} parent=11 // pred_region
          _
        $region124: #{transformer_fwd.1} parent=11 // pred_fallthru
          _
        // Predicated region
        $region125: #{transformer_fwd.1} parent=11 // pred_check
          %p886 = pneg %p761
        $region126: #{transformer_fwd.1} parent=11 // pred_check_branch
          %888 = sbr.rel (%p886) target = $region128
        $region127: #{transformer_fwd.1} parent=11 // pred_region
          _
        $region128: #{transformer_fwd.1} parent=11 // pred_fallthru
          _
      $region12: #{transformer_fwd.1} parent=5 // pred_fallthru
        _
      %p889 = scmp.lt.s32.totalorder %s74, 2
      // Predicated region
      $region129: #{transformer_fwd.1} parent=5 // pred_check
        %p890 = pneg %p889
      $region130: #{transformer_fwd.1} parent=5 // pred_check_branch
        %892 = sbr.rel (%p890) target = $region132
      $region131: #{transformer_fwd.1} parent=5 // pred_region
        // Predicated region
        $region133: #{transformer_fwd.1} parent=131 // pred_check
          %p893 = pneg %p94
        $region134: #{transformer_fwd.1} parent=131 // pred_check_branch
          %895 = sbr.rel (%p893) target = $region136
        $region135: #{transformer_fwd.1} parent=131 // pred_region
          %p896 = scmp.lt.s32.totalorder %s74, 1
          %s897 = scalar_select %p896, %s74, 1
          %s898 = smul.addr %s897, 8
          %s899 = scalar_lea.vmem %s1, %s898
        $region136: #{transformer_fwd.1} parent=131 // pred_fallthru
          _
        // Predicated region
        $region137: #{transformer_fwd.1} parent=131 // pred_check
          %p900 = pneg %p120
        $region138: #{transformer_fwd.1} parent=131 // pred_check_branch
          %902 = sbr.rel (%p900) target = $region140
        $region139: #{transformer_fwd.1} parent=131 // pred_region
          %p903 = scmp.lt.s32.totalorder %s74, 1
          %s904 = scalar_select %p903, %s74, 1
          %s905 = smul.addr %s904, 8
          %s906 = scalar_lea.vmem %s3, %s905
        $region140: #{transformer_fwd.1} parent=131 // pred_fallthru
          _
        // Predicated region
        $region141: #{transformer_fwd.1} parent=131 // pred_check
          %p907 = pneg %p146
        $region142: #{transformer_fwd.1} parent=131 // pred_check_branch
          %909 = sbr.rel (%p907) target = $region144
        $region143: #{transformer_fwd.1} parent=131 // pred_region
          %p910 = scmp.lt.s32.totalorder %s74, 1
          %s911 = scalar_select %p910, %s74, 1
          %s912 = scalar_lea.vmem %s5, %s911
        $region144: #{transformer_fwd.1} parent=131 // pred_fallthru
          _
      $region132: #{transformer_fwd.1} parent=5 // pred_fallthru
        _
      %p913 = scmp.le.s32.totalorder 1, %s74
      %p914 = scmp.lt.s32.totalorder %s74, 3
      %p915 = pnand %p913, %p914
      %p916 = pneg %p915
      // Predicated region
      $region145: #{transformer_fwd.1} parent=5 // pred_check
        _
      $region146: #{transformer_fwd.1} parent=5 // pred_check_branch
        %918 = sbr.rel (%p915) target = $region148
      $region147: #{transformer_fwd.1} parent=5 // pred_region
        %s919 = ssub.s32 %s74, 1
        %p920 = scmp.lt.s32.totalorder %s79, 1
        %s921 = scalar_select %p920, %s79, 1
        %s922 = smul.addr %s921, 8
        %s923 = scalar_lea.vmem %s1, %s922
        %p924 = pneg %p100
        %p925 = pneg %p97
        %p926 = scmp.lt.s32.totalorder %s79, 1
        %s927 = scalar_select %p926, %s79, 1
        %s928 = smul.addr %s927, 8
        %s929 = scalar_lea.vmem %s3, %s928
        %p930 = pneg %p126
        %p931 = pneg %p123
        %p932 = scmp.lt.s32.totalorder %s79, 1
        %s933 = scalar_select %p932, %s79, 1
        %s934 = scalar_lea.vmem %s5, %s933
        %p935 = pneg %p152
        %p936 = pneg %p149
        %p937 = pneg %p173
        %p938 = pneg %p170
        %p939 = pneg %p194
        %p940 = pneg %p191
        %p941 = pneg %p215
        %p942 = pneg %p212
        %p943 = pneg %p236
        %p944 = pneg %p233
        %p945 = pneg %p257
        %p946 = pneg %p254
        %p947 = pneg %p278
        %p948 = pneg %p275
        %p949 = pneg %p299
        %p950 = pneg %p296
        %p951 = pneg %p320
        %p952 = pneg %p317
        %p953 = pneg %p341
        %p954 = pneg %p338
        %p955 = pneg %p362
        %p956 = pneg %p359
        %p957 = pneg %p383
        %p958 = pneg %p380
        %p959 = pneg %p404
        %p960 = pneg %p401
        %p961 = pneg %p425
        %p962 = pneg %p422
        %p963 = pneg %p446
        %p964 = pneg %p443
        %p965 = pneg %p467
        %p966 = pneg %p464
        %p967 = pneg %p488
        %p968 = pneg %p485
        %p969 = pneg %p509
        %p970 = pneg %p506
        %p971 = pneg %p530
        %p972 = pneg %p527
        %p973 = pneg %p551
        %p974 = pneg %p548
        %p975 = pneg %p572
        %p976 = pneg %p569
        %p977 = pneg %p593
        %p978 = pneg %p590
        %p979 = pneg %p614
        %p980 = pneg %p611
        %p981 = pneg %p635
        %p982 = pneg %p632
        %p983 = pneg %p656
        %p984 = pneg %p653
        %p985 = pneg %p677
        %p986 = pneg %p674
        %p987 = pneg %p698
        %p988 = pneg %p695
        %p989 = pneg %p719
        %p990 = pneg %p716
        %p991 = pneg %p740
        %p992 = pneg %p737
        %p993 = pneg %p761
        %p994 = pneg %p758
        %p995 = pneg %p787
        %p996 = pneg %p784
        %s997 = sand.u32 %s774, 1
        %s998 = scalar_lea.sflag [#allocation3], %s997
        %s999 = sand.u32 %s774, 1
        %s1000 = smul.addr %s999, 8
        %s1001 = scalar_lea.vmem [#allocation2], %s1000
        %p1002 = scmp.lt.s32.totalorder %s79, 1
        %s1003 = scalar_select %p1002, %s79, 1
        %s1004 = smul.addr %s1003, 8
        %s1005 = scalar_lea.vmem %s1, %s1004
        %p1006 = scmp.lt.s32.totalorder %s79, 1
        %s1007 = scalar_select %p1006, %s79, 1
        %s1008 = smul.addr %s1007, 8
        %s1009 = scalar_lea.vmem %s3, %s1008
        %p1010 = scmp.lt.s32.totalorder %s79, 1
        %s1011 = scalar_select %p1010, %s79, 1
        %s1012 = scalar_lea.vmem %s5, %s1011
        %v1013 = vld [vmem:[%s1012] sm:$0x1]
        %vm1014 = vcmp.gt.f32.partialorder %v1013, 0.5
        %v1015 = vld [vmem:[%s1005] sm:$0xff]
        %v1016 = vld [vmem:[%s7] sm:$0xff]
        %v1017 = vld [vmem:[%s7 + $0x8] sm:$0xff]
        %v1018 = vld [vmem:[%s7 + $0x10] sm:$0xff]
        %v1019 = vld [vmem:[%s7 + $0x18] sm:$0xff]
        %v1020 = vld [vmem:[%s9] sm:$0xff]
        %v1021 = vld [vmem:[%s9 + $0x8] sm:$0xff]
        %v1022 = vld [vmem:[%s9 + $0x10] sm:$0xff]
        %v1023 = vld [vmem:[%s9 + $0x18] sm:$0xff]
        %v1024 = vld [vmem:[%s11] sm:$0x1]
        %vm1025 = vcmask 261120
        %v1027 = vsel %vm1025, %v1015, 0
        %1029 = vmatpush.msra.mxu0 0.0
        %1030 = vmatpush.msra.mxu0 0.0
        %1031 = vmatpush.msra.mxu0 0.0
        %1032 = vmatpush.msra.mxu0 0.0
        %1033 = vmatpush.msra.mxu0 0.0
        %1034 = vmatpush.msra.mxu0 0.0
        %1035 = vmatpush.msra.mxu0 0.0
        %1036 = vmatpush.msra.mxu0 0.0
        %1037 = vmatpush.msra.mxu0 0.0
        %1038 = vmatpush.msra.mxu0 0.0
        %1039 = vmatpush.msra.mxu0 0.0
        %1040 = vmatpush.msra.mxu0 0.0
        %1041 = vmatpush.msra.mxu0 %v1019
        %1042 = vmatpush.msra.mxu0 %v1018
        %1043 = vmatpush.msra.mxu0 %v1017
        %1044 = vmatpush.msra.mxu0 %v1016
        %1045 = vmatmul.f32.gmra.mxu0 %v1027
        %v1046 = vpop.f32.mrf.mxu0
        %v1047 = vadd.f32 0.0, %v1046
        %1048 = vdwg.mxu0
        %1050 = vrot.lane.b32.xlu0 %v1047, 96
        %v1051 = vpop.permute.xlu0 %1050
        %vm1052 = vcmask 64512
        %v1053 = vsel %vm1052, %v1047, 0
        %v1055 = vsel %vm1052, %v1051, 0
        %1057 = vmatpush.xpose.msra.mxu0 0.0
        %1058 = vmatpush.xpose.msra.mxu0 0.0
        %1059 = vmatpush.xpose.msra.mxu0 0.0
        %1060 = vmatpush.xpose.msra.mxu0 0.0
        %1061 = vmatpush.xpose.msra.mxu0 0.0
        %1062 = vmatpush.xpose.msra.mxu0 0.0
        %1063 = vmatpush.xpose.msra.mxu0 0.0
        %1064 = vmatpush.xpose.msra.mxu0 0.0
        %1065 = vmatpush.xpose.msra.mxu0 0.0
        %1066 = vmatpush.xpose.msra.mxu0 0.0
        %1067 = vmatpush.xpose.msra.mxu0 0.0
        %1068 = vmatpush.xpose.msra.mxu0 0.0
        %1069 = vmatpush.xpose.msra.mxu0 0.0
        %1070 = vmatpush.xpose.msra.mxu0 0.0
        %1071 = vmatpush.xpose.msra.mxu0 0.0
        %1072 = vmatpush.xpose.msra.mxu0 %v1055
        %1073 = vmatmul.f32.gmra.mxu0 %v1053
        %v1074 = vpop.f32.mrf.mxu0
        %v1075 = vadd.f32 0.0, %v1074
        %1076 = vdwg.mxu0
        %1077 = vrot.lane.b32.xlu0 %v1047, 120
        %v1078 = vpop.permute.xlu0 %1077
        %1079 = vrot.lane.b32.xlu0 %v1047, 88
        %v1080 = vpop.permute.xlu0 %1079
        %v1081 = vsel %vm1052, %v1078, 0
        %v1083 = vsel %vm1052, %v1080, 0
        %1085 = vmatpush.xpose.msra.mxu0 0.0
        %1086 = vmatpush.xpose.msra.mxu0 0.0
        %1087 = vmatpush.xpose.msra.mxu0 0.0
        %1088 = vmatpush.xpose.msra.mxu0 0.0
        %1089 = vmatpush.xpose.msra.mxu0 0.0
        %1090 = vmatpush.xpose.msra.mxu0 0.0
        %1091 = vmatpush.xpose.msra.mxu0 0.0
        %1092 = vmatpush.xpose.msra.mxu0 0.0
        %1093 = vmatpush.xpose.msra.mxu0 0.0
        %1094 = vmatpush.xpose.msra.mxu0 0.0
        %1095 = vmatpush.xpose.msra.mxu0 0.0
        %1096 = vmatpush.xpose.msra.mxu0 0.0
        %1097 = vmatpush.xpose.msra.mxu0 0.0
        %1098 = vmatpush.xpose.msra.mxu0 0.0
        %1099 = vmatpush.xpose.msra.mxu0 0.0
        %1100 = vmatpush.xpose.msra.mxu0 %v1083
        %1101 = vmatmul.f32.gmra.mxu0 %v1081
        %v1102 = vpop.f32.mrf.mxu0
        %v1103 = vadd.f32 0.0, %v1102
        %1104 = vdwg.mxu0
        %1105 = vrot.lane.b32.xlu0 %v1047, 112
        %v1106 = vpop.permute.xlu0 %1105
        %1107 = vrot.lane.b32.xlu0 %v1047, 80
        %v1108 = vpop.permute.xlu0 %1107
        %v1109 = vsel %vm1052, %v1106, 0
        %v1111 = vsel %vm1052, %v1108, 0
        %1113 = vmatpush.xpose.msra.mxu0 0.0
        %1114 = vmatpush.xpose.msra.mxu0 0.0
        %1115 = vmatpush.xpose.msra.mxu0 0.0
        %1116 = vmatpush.xpose.msra.mxu0 0.0
        %1117 = vmatpush.xpose.msra.mxu0 0.0
        %1118 = vmatpush.xpose.msra.mxu0 0.0
        %1119 = vmatpush.xpose.msra.mxu0 0.0
        %1120 = vmatpush.xpose.msra.mxu0 0.0
        %1121 = vmatpush.xpose.msra.mxu0 0.0
        %1122 = vmatpush.xpose.msra.mxu0 0.0
        %1123 = vmatpush.xpose.msra.mxu0 0.0
        %1124 = vmatpush.xpose.msra.mxu0 0.0
        %1125 = vmatpush.xpose.msra.mxu0 0.0
        %1126 = vmatpush.xpose.msra.mxu0 0.0
        %1127 = vmatpush.xpose.msra.mxu0 0.0
        %1128 = vmatpush.xpose.msra.mxu0 %v1111
        %1129 = vmatmul.f32.gmra.mxu0 %v1109
        %v1130 = vpop.f32.mrf.mxu0
        %v1131 = vadd.f32 0.0, %v1130
        %1132 = vdwg.mxu0
        %1133 = vrot.lane.b32.xlu0 %v1047, 104
        %v1134 = vpop.permute.xlu0 %1133
        %1135 = vrot.lane.b32.xlu0 %v1047, 72
        %v1136 = vpop.permute.xlu0 %1135
        %v1137 = vsel %vm1052, %v1134, 0
        %v1139 = vsel %vm1052, %v1136, 0
        %1141 = vmatpush.xpose.msra.mxu0 0.0
        %1142 = vmatpush.xpose.msra.mxu0 0.0
        %1143 = vmatpush.xpose.msra.mxu0 0.0
        %1144 = vmatpush.xpose.msra.mxu0 0.0
        %1145 = vmatpush.xpose.msra.mxu0 0.0
        %1146 = vmatpush.xpose.msra.mxu0 0.0
        %1147 = vmatpush.xpose.msra.mxu0 0.0
        %1148 = vmatpush.xpose.msra.mxu0 0.0
        %1149 = vmatpush.xpose.msra.mxu0 0.0
        %1150 = vmatpush.xpose.msra.mxu0 0.0
        %1151 = vmatpush.xpose.msra.mxu0 0.0
        %1152 = vmatpush.xpose.msra.mxu0 0.0
        %1153 = vmatpush.xpose.msra.mxu0 0.0
        %1154 = vmatpush.xpose.msra.mxu0 0.0
        %1155 = vmatpush.xpose.msra.mxu0 0.0
        %1156 = vmatpush.xpose.msra.mxu0 %v1139
        %1157 = vmatmul.f32.gmra.mxu0 %v1137
        %v1158 = vpop.f32.mrf.mxu0
        %v1159 = vadd.f32 0.0, %v1158
        %1160 = vdwg.mxu0
        %v1161 = vsel %vm1014, 1, 0
        %v1162 = vperm.slane %v1161, 0
        %vm1163 = vcmp.eq.s32.totalorder %v1162, 1
        %v1164 = vsel %vm1163, %v1075, -1e+20
        %v1165 = vsel %vm1163, %v1103, -1e+20
        %v1166 = vsel %vm1163, %v1131, -1e+20
        %v1167 = vsel %vm1163, %v1159, -1e+20
        %v1168 = vsel %vm1052, %v1164, -inf
        %1169 = vmax.xlane.f32.xlu0 %v1168
        %v1170 = vpop.xlane.xlu0 %1169
        %v1171 = vsel %vm1052, %v1165, -inf
        %1172 = vmax.xlane.f32.xlu0 %v1171
        %v1173 = vpop.xlane.xlu0 %1172
        %v1174 = vsel %vm1052, %v1166, -inf
        %1175 = vmax.xlane.f32.xlu0 %v1174
        %v1176 = vpop.xlane.xlu0 %1175
        %v1177 = vsel %vm1052, %v1167, -inf
        %1178 = vmax.xlane.f32.xlu0 %v1177
        %v1179 = vpop.xlane.xlu0 %1178
        %v1180 = vsub.f32 %v1164, %v1170
        %v1181 = vsub.f32 %v1165, %v1173
        %v1182 = vsub.f32 %v1166, %v1176
        %v1183 = vsub.f32 %v1167, %v1179
        %v1184 = vmul.f32 %v1180, 1.442695
        %v1185 = vpow.pop %v1184
        %v1186 = vmul.f32 %v1181, 1.442695
        %v1187 = vpow.pop %v1186
        %v1188 = vmul.f32 %v1182, 1.442695
        %v1189 = vpow.pop %v1188
        %v1190 = vmul.f32 %v1183, 1.442695
        %v1191 = vpow.pop %v1190
        %v1192 = vsel %vm1052, %v1185, 0.0
        %1193 = vadd.xlane.f32.xlu0 %v1192
        %v1194 = vpop.xlane.xlu0 %1193
        %v1195 = vsel %vm1052, %v1187, 0.0
        %1196 = vadd.xlane.f32.xlu0 %v1195
        %v1197 = vpop.xlane.xlu0 %1196
        %v1198 = vsel %vm1052, %v1189, 0.0
        %1199 = vadd.xlane.f32.xlu0 %v1198
        %v1200 = vpop.xlane.xlu0 %1199
        %v1201 = vsel %vm1052, %v1191, 0.0
        %1202 = vadd.xlane.f32.xlu0 %v1201
        %v1203 = vpop.xlane.xlu0 %1202
        %v1204 = vrcp.pop %v1194
        %v1205 = vrcp.pop %v1197
        %v1206 = vrcp.pop %v1200
        %v1207 = vrcp.pop %v1203
        %v1208 = vmul.f32 %v1185, %v1204
        %v1209 = vmul.f32 %v1187, %v1205
        %v1210 = vmul.f32 %v1189, %v1206
        %v1211 = vmul.f32 %v1191, %v1207
        %1212 = vrot.lane.b32.xlu0 %v1047, 64
        %v1213 = vpop.permute.xlu0 %1212
        %v1216 = vsel %vm1052, %v1208, 0
        %1218 = vmatpush.msra.mxu0 0.0
        %1219 = vmatpush.msra.mxu0 0.0
        %1220 = vmatpush.msra.mxu0 0.0
        %1221 = vmatpush.msra.mxu0 0.0
        %1222 = vmatpush.msra.mxu0 0.0
        %1223 = vmatpush.msra.mxu0 0.0
        %1224 = vmatpush.msra.mxu0 0.0
        %1225 = vmatpush.msra.mxu0 0.0
        %1226 = vmatpush.msra.mxu0 0.0
        %1227 = vmatpush.msra.mxu0 0.0
        %1228 = vmatpush.msra.mxu0 0.0
        %1229 = vmatpush.msra.mxu0 0.0
        %1230 = vmatpush.msra.mxu0 0.0
        %1231 = vmatpush.msra.mxu0 0.0
        %1232 = vmatpush.msra.mxu0 0.0
        %1233 = vmatpush.msra.mxu0 %v1213
        %1234 = vmatmul.f32.gmra.mxu0 %v1216
        %v1235 = vpop.f32.mrf.mxu0
        %v1236 = vadd.f32 0.0, %v1235
        %1237 = vdwg.mxu0
        %v1239 = vsel %vm1052, %v1236, 0
        %1241 = vmatpush.msra.mxu0 0.0
        %1242 = vmatpush.msra.mxu0 0.0
        %1243 = vmatpush.msra.mxu0 0.0
        %1244 = vmatpush.msra.mxu0 0.0
        %1245 = vmatpush.msra.mxu0 0.0
        %1246 = vmatpush.msra.mxu0 0.0
        %1247 = vmatpush.msra.mxu0 0.0
        %1248 = vmatpush.msra.mxu0 0.0
        %1249 = vmatpush.msra.mxu0 0.0
        %1250 = vmatpush.msra.mxu0 0.0
        %1251 = vmatpush.msra.mxu0 0.0
        %1252 = vmatpush.msra.mxu0 0.0
        %1253 = vmatpush.msra.mxu0 0.0
        %1254 = vmatpush.msra.mxu0 0.0
        %1255 = vmatpush.msra.mxu0 0.0
        %1256 = vmatpush.msra.mxu0 %v1020
        %1257 = vmatmul.f32.gmra.mxu0 %v1239
        %v1258 = vpop.f32.mrf.mxu0
        %v1259 = vadd.f32 0.0, %v1258
        %1260 = vdwg.mxu0
        %v1262 = vperm.slane %v1024, 0
        %v1264 = vadd.f32 %v1262, %v1259
        %1265 = vrot.lane.b32.xlu0 %v1047, 56
        %v1266 = vpop.permute.xlu0 %1265
        %v1269 = vsel %vm1052, %v1209, 0
        %1271 = vmatpush.msra.mxu0 0.0
        %1272 = vmatpush.msra.mxu0 0.0
        %1273 = vmatpush.msra.mxu0 0.0
        %1274 = vmatpush.msra.mxu0 0.0
        %1275 = vmatpush.msra.mxu0 0.0
        %1276 = vmatpush.msra.mxu0 0.0
        %1277 = vmatpush.msra.mxu0 0.0
        %1278 = vmatpush.msra.mxu0 0.0
        %1279 = vmatpush.msra.mxu0 0.0
        %1280 = vmatpush.msra.mxu0 0.0
        %1281 = vmatpush.msra.mxu0 0.0
        %1282 = vmatpush.msra.mxu0 0.0
        %1283 = vmatpush.msra.mxu0 0.0
        %1284 = vmatpush.msra.mxu0 0.0
        %1285 = vmatpush.msra.mxu0 0.0
        %1286 = vmatpush.msra.mxu0 %v1266
        %1287 = vmatmul.f32.gmra.mxu0 %v1269
        %v1288 = vpop.f32.mrf.mxu0
        %v1289 = vadd.f32 0.0, %v1288
        %1290 = vdwg.mxu0
        %v1292 = vsel %vm1052, %v1289, 0
        %1294 = vmatpush.msra.mxu0 0.0
        %1295 = vmatpush.msra.mxu0 0.0
        %1296 = vmatpush.msra.mxu0 0.0
        %1297 = vmatpush.msra.mxu0 0.0
        %1298 = vmatpush.msra.mxu0 0.0
        %1299 = vmatpush.msra.mxu0 0.0
        %1300 = vmatpush.msra.mxu0 0.0
        %1301 = vmatpush.msra.mxu0 0.0
        %1302 = vmatpush.msra.mxu0 0.0
        %1303 = vmatpush.msra.mxu0 0.0
        %1304 = vmatpush.msra.mxu0 0.0
        %1305 = vmatpush.msra.mxu0 0.0
        %1306 = vmatpush.msra.mxu0 0.0
        %1307 = vmatpush.msra.mxu0 0.0
        %1308 = vmatpush.msra.mxu0 0.0
        %1309 = vmatpush.msra.mxu0 %v1021
        %1310 = vmatmul.f32.gmra.mxu0 %v1292
        %v1311 = vpop.f32.mrf.mxu0
        %v1312 = vadd.f32 0.0, %v1311
        %1313 = vdwg.mxu0
        %v1314 = vadd.f32 %v1264, %v1312
        %1315 = vrot.lane.b32.xlu0 %v1047, 48
        %v1316 = vpop.permute.xlu0 %1315
        %v1319 = vsel %vm1052, %v1210, 0
        %1321 = vmatpush.msra.mxu0 0.0
        %1322 = vmatpush.msra.mxu0 0.0
        %1323 = vmatpush.msra.mxu0 0.0
        %1324 = vmatpush.msra.mxu0 0.0
        %1325 = vmatpush.msra.mxu0 0.0
        %1326 = vmatpush.msra.mxu0 0.0
        %1327 = vmatpush.msra.mxu0 0.0
        %1328 = vmatpush.msra.mxu0 0.0
        %1329 = vmatpush.msra.mxu0 0.0
        %1330 = vmatpush.msra.mxu0 0.0
        %1331 = vmatpush.msra.mxu0 0.0
        %1332 = vmatpush.msra.mxu0 0.0
        %1333 = vmatpush.msra.mxu0 0.0
        %1334 = vmatpush.msra.mxu0 0.0
        %1335 = vmatpush.msra.mxu0 0.0
        %1336 = vmatpush.msra.mxu0 %v1316
        %1337 = vmatmul.f32.gmra.mxu0 %v1319
        %v1338 = vpop.f32.mrf.mxu0
        %v1339 = vadd.f32 0.0, %v1338
        %1340 = vdwg.mxu0
        %v1342 = vsel %vm1052, %v1339, 0
        %1344 = vmatpush.msra.mxu0 0.0
        %1345 = vmatpush.msra.mxu0 0.0
        %1346 = vmatpush.msra.mxu0 0.0
        %1347 = vmatpush.msra.mxu0 0.0
        %1348 = vmatpush.msra.mxu0 0.0
        %1349 = vmatpush.msra.mxu0 0.0
        %1350 = vmatpush.msra.mxu0 0.0
        %1351 = vmatpush.msra.mxu0 0.0
        %1352 = vmatpush.msra.mxu0 0.0
        %1353 = vmatpush.msra.mxu0 0.0
        %1354 = vmatpush.msra.mxu0 0.0
        %1355 = vmatpush.msra.mxu0 0.0
        %1356 = vmatpush.msra.mxu0 0.0
        %1357 = vmatpush.msra.mxu0 0.0
        %1358 = vmatpush.msra.mxu0 0.0
        %1359 = vmatpush.msra.mxu0 %v1022
        %1360 = vmatmul.f32.gmra.mxu0 %v1342
        %v1361 = vpop.f32.mrf.mxu0
        %v1362 = vadd.f32 0.0, %v1361
        %1363 = vdwg.mxu0
        %v1364 = vadd.f32 %v1314, %v1362
        %1365 = vrot.lane.b32.xlu0 %v1047, 40
        %v1366 = vpop.permute.xlu0 %1365
        %v1369 = vsel %vm1052, %v1211, 0
        %1371 = vmatpush.msra.mxu0 0.0
        %1372 = vmatpush.msra.mxu0 0.0
        %1373 = vmatpush.msra.mxu0 0.0
        %1374 = vmatpush.msra.mxu0 0.0
        %1375 = vmatpush.msra.mxu0 0.0
        %1376 = vmatpush.msra.mxu0 0.0
        %1377 = vmatpush.msra.mxu0 0.0
        %1378 = vmatpush.msra.mxu0 0.0
        %1379 = vmatpush.msra.mxu0 0.0
        %1380 = vmatpush.msra.mxu0 0.0
        %1381 = vmatpush.msra.mxu0 0.0
        %1382 = vmatpush.msra.mxu0 0.0
        %1383 = vmatpush.msra.mxu0 0.0
        %1384 = vmatpush.msra.mxu0 0.0
        %1385 = vmatpush.msra.mxu0 0.0
        %1386 = vmatpush.msra.mxu0 %v1366
        %1387 = vmatmul.f32.gmra.mxu0 %v1369
        %v1388 = vpop.f32.mrf.mxu0
        %v1389 = vadd.f32 0.0, %v1388
        %1390 = vdwg.mxu0
        %v1392 = vsel %vm1052, %v1389, 0
        %1394 = vmatpush.msra.mxu0 0.0
        %1395 = vmatpush.msra.mxu0 0.0
        %1396 = vmatpush.msra.mxu0 0.0
        %1397 = vmatpush.msra.mxu0 0.0
        %1398 = vmatpush.msra.mxu0 0.0
        %1399 = vmatpush.msra.mxu0 0.0
        %1400 = vmatpush.msra.mxu0 0.0
        %1401 = vmatpush.msra.mxu0 0.0
        %1402 = vmatpush.msra.mxu0 0.0
        %1403 = vmatpush.msra.mxu0 0.0
        %1404 = vmatpush.msra.mxu0 0.0
        %1405 = vmatpush.msra.mxu0 0.0
        %1406 = vmatpush.msra.mxu0 0.0
        %1407 = vmatpush.msra.mxu0 0.0
        %1408 = vmatpush.msra.mxu0 0.0
        %1409 = vmatpush.msra.mxu0 %v1023
        %1410 = vmatmul.f32.gmra.mxu0 %v1392
        %v1411 = vpop.f32.mrf.mxu0
        %v1412 = vadd.f32 0.0, %v1411
        %1413 = vdwg.mxu0
        %v1414 = vadd.f32 %v1364, %v1412
        %v1415 = vld [vmem:[%s13] sm:$0x1]
        %v1416 = vld [vmem:[%s15] sm:$0x1]
        %v1417 = vadd.f32 %v1414, %v1015
        %v1418 = vsel %vm1025, %v1417, 0.0
        %1419 = vadd.xlane.f32.xlu0 %v1418
        %v1420 = vpop.xlane.xlu0 %1419
        %v1421 = vrcp.pop 32.0
        %v1422 = vmul.f32 32.0, %v1421
        %v1423 = vsub.f32 1.0, %v1422
        %v1424 = vmul.f32 %v1421, %v1423
        %v1425 = vadd.f32 %v1421, %v1424
        %vm1426 = vweird.f32 %v1421
        %v1427 = vsel %vm1426, %v1421, %v1425
        %v1428 = vmul.f32 %v1420, %v1427
        %v1429 = vsub.f32 %v1417, %v1428
        %v1430 = vmul.f32 %v1429, %v1429
        %v1431 = vsel %vm1025, %v1430, 0.0
        %1432 = vadd.xlane.f32.xlu0 %v1431
        %v1433 = vpop.xlane.xlu0 %1432
        %v1434 = vmul.f32 %v1433, %v1427
        %v1435 = vadd.f32 %v1434, 1e-05
        %v1436 = vrsqrt.pop %v1435
        %v1437 = vmul.f32 %v1436, %v1435
        %v1438 = vmul.f32 %v1437, %v1436
        %v1439 = vmul.f32 0.5, %v1438
        %v1440 = vsub.f32 1.5, %v1439
        %v1441 = vmul.f32 %v1436, %v1440
        %vm1442 = vweird.f32 %v1435
        %vm1443 = vweird.f32 %v1436
        %vm1444 = vmor %vm1442, %vm1443
        %v1445 = vsel %vm1444, %v1436, %v1441
        %v1446 = vmul.f32 %v1429, %v1445
        %v1448 = vperm.slane %v1415, 0
        %v1450 = vmul.f32 %v1446, %v1448
        %v1452 = vperm.slane %v1416, 0
        %v1454 = vadd.f32 %v1450, %v1452
        %v1455 = vld [vmem:[%s21] sm:$0xff]
        %v1456 = vld [vmem:[%s21 + $0x8] sm:$0xff]
        %v1457 = vld [vmem:[%s21 + $0x10] sm:$0xff]
        %v1458 = vld [vmem:[%s21 + $0x18] sm:$0xff]
        %v1459 = vld [vmem:[%s23] sm:$0x1]
        %v1460 = vld [vmem:[%s25] sm:$0xff]
        %v1461 = vld [vmem:[%s25 + $0x8] sm:$0xff]
        %v1462 = vld [vmem:[%s25 + $0x10] sm:$0xff]
        %v1463 = vld [vmem:[%s25 + $0x18] sm:$0xff]
        %v1464 = vld [vmem:[%s25 + $0x20] sm:$0xff]
        %v1465 = vld [vmem:[%s25 + $0x28] sm:$0xff]
        %v1466 = vld [vmem:[%s25 + $0x30] sm:$0xff]
        %v1467 = vld [vmem:[%s25 + $0x38] sm:$0xff]
        %v1468 = vld [vmem:[%s25 + $0x40] sm:$0xff]
        %v1469 = vld [vmem:[%s25 + $0x48] sm:$0xff]
        %v1470 = vld [vmem:[%s25 + $0x50] sm:$0xff]
        %v1471 = vld [vmem:[%s25 + $0x58] sm:$0xff]
        %v1472 = vld [vmem:[%s25 + $0x60] sm:$0xff]
        %v1473 = vld [vmem:[%s25 + $0x68] sm:$0xff]
        %v1474 = vld [vmem:[%s25 + $0x70] sm:$0xff]
        %v1475 = vld [vmem:[%s25 + $0x78] sm:$0xff]
        %v1476 = vld [vmem:[%s27] sm:$0x1]
        %v1478 = vperm.slane %v1459, 0
        %v1481 = vsel %vm1025, %v1454, 0
        %1483 = vmatpush.msra.mxu0 0.0
        %1484 = vmatpush.msra.mxu0 0.0
        %1485 = vmatpush.msra.mxu0 0.0
        %1486 = vmatpush.msra.mxu0 0.0
        %1487 = vmatpush.msra.mxu0 0.0
        %1488 = vmatpush.msra.mxu0 0.0
        %1489 = vmatpush.msra.mxu0 0.0
        %1490 = vmatpush.msra.mxu0 0.0
        %1491 = vmatpush.msra.mxu0 0.0
        %1492 = vmatpush.msra.mxu0 0.0
        %1493 = vmatpush.msra.mxu0 0.0
        %1494 = vmatpush.msra.mxu0 0.0
        %1495 = vmatpush.msra.mxu0 %v1458
        %1496 = vmatpush.msra.mxu0 %v1457
        %1497 = vmatpush.msra.mxu0 %v1456
        %1498 = vmatpush.msra.mxu0 %v1455
        %1499 = vmatmul.f32.gmra.mxu0 %v1481
        %v1500 = vpop.f32.mrf.mxu0
        %v1501 = vadd.f32 %v1478, %v1500
        %1502 = vdwg.mxu0
        %v1503 = vmax.f32 %v1501, 0.0
        %v1505 = vperm.slane %v1476, 0
        %1507 = vmatpush.msra.mxu0 %v1475
        %1508 = vmatpush.msra.mxu0 %v1474
        %1509 = vmatpush.msra.mxu0 %v1473
        %1510 = vmatpush.msra.mxu0 %v1472
        %1511 = vmatpush.msra.mxu0 %v1471
        %1512 = vmatpush.msra.mxu0 %v1470
        %1513 = vmatpush.msra.mxu0 %v1469
        %1514 = vmatpush.msra.mxu0 %v1468
        %1515 = vmatpush.msra.mxu0 %v1467
        %1516 = vmatpush.msra.mxu0 %v1466
        %1517 = vmatpush.msra.mxu0 %v1465
        %1518 = vmatpush.msra.mxu0 %v1464
        %1519 = vmatpush.msra.mxu0 %v1463
        %1520 = vmatpush.msra.mxu0 %v1462
        %1521 = vmatpush.msra.mxu0 %v1461
        %1522 = vmatpush.msra.mxu0 %v1460
        %1523 = vmatmul.f32.gmra.mxu0 %v1503
        %v1524 = vpop.f32.mrf.mxu0
        %v1525 = vadd.f32 %v1505, %v1524
        %1526 = vdwg.mxu0
        %v1527 = vld [vmem:[%s17] sm:$0x1]
        %v1528 = vld [vmem:[%s19] sm:$0x1]
        %v1529 = vadd.f32 %v1525, %v1454
        %v1530 = vsel %vm1025, %v1529, 0.0
        %1531 = vadd.xlane.f32.xlu0 %v1530
        %v1532 = vpop.xlane.xlu0 %1531
        %v1533 = vmul.f32 %v1532, %v1427
        %v1534 = vsub.f32 %v1529, %v1533
        %v1535 = vmul.f32 %v1534, %v1534
        %v1536 = vsel %vm1025, %v1535, 0.0
        %1537 = vadd.xlane.f32.xlu0 %v1536
        %v1538 = vpop.xlane.xlu0 %1537
        %v1539 = vmul.f32 %v1538, %v1427
        %v1540 = vadd.f32 %v1539, 1e-05
        %v1541 = vrsqrt.pop %v1540
        %v1542 = vmul.f32 %v1541, %v1540
        %v1543 = vmul.f32 %v1542, %v1541
        %v1544 = vmul.f32 0.5, %v1543
        %v1545 = vsub.f32 1.5, %v1544
        %v1546 = vmul.f32 %v1541, %v1545
        %vm1547 = vweird.f32 %v1540
        %vm1548 = vweird.f32 %v1541
        %vm1549 = vmor %vm1547, %vm1548
        %v1550 = vsel %vm1549, %v1541, %v1546
        %v1551 = vmul.f32 %v1534, %v1550
        %v1553 = vperm.slane %v1527, 0
        %v1555 = vmul.f32 %v1551, %v1553
        %v1557 = vperm.slane %v1528, 0
        %v1559 = vadd.f32 %v1555, %v1557
        %s1560 = scalar_lea.vmem %s7, 32
        %v1561 = vld [vmem:[%s1560] sm:$0xff]
        %v1562 = vld [vmem:[%s1560 + $0x8] sm:$0xff]
        %v1563 = vld [vmem:[%s1560 + $0x10] sm:$0xff]
        %v1564 = vld [vmem:[%s1560 + $0x18] sm:$0xff]
        %s1565 = scalar_lea.vmem %s9, 32
        %v1566 = vld [vmem:[%s1565] sm:$0xff]
        %v1567 = vld [vmem:[%s1565 + $0x8] sm:$0xff]
        %v1568 = vld [vmem:[%s1565 + $0x10] sm:$0xff]
        %v1569 = vld [vmem:[%s1565 + $0x18] sm:$0xff]
        %s1570 = scalar_lea.vmem %s11, 1
        %v1571 = vld [vmem:[%s1570] sm:$0x1]
        %v1573 = vsel %vm1025, %v1559, 0
        %1575 = vmatpush.msra.mxu0 0.0
        %1576 = vmatpush.msra.mxu0 0.0
        %1577 = vmatpush.msra.mxu0 0.0
        %1578 = vmatpush.msra.mxu0 0.0
        %1579 = vmatpush.msra.mxu0 0.0
        %1580 = vmatpush.msra.mxu0 0.0
        %1581 = vmatpush.msra.mxu0 0.0
        %1582 = vmatpush.msra.mxu0 0.0
        %1583 = vmatpush.msra.mxu0 0.0
        %1584 = vmatpush.msra.mxu0 0.0
        %1585 = vmatpush.msra.mxu0 0.0
        %1586 = vmatpush.msra.mxu0 0.0
        %1587 = vmatpush.msra.mxu0 %v1564
        %1588 = vmatpush.msra.mxu0 %v1563
        %1589 = vmatpush.msra.mxu0 %v1562
        %1590 = vmatpush.msra.mxu0 %v1561
        %1591 = vmatmul.f32.gmra.mxu0 %v1573
        %v1592 = vpop.f32.mrf.mxu0
        %v1593 = vadd.f32 0.0, %v1592
        %1594 = vdwg.mxu0
        %1596 = vrot.lane.b32.xlu0 %v1593, 96
        %v1597 = vpop.permute.xlu0 %1596
        %v1598 = vsel %vm1052, %v1593, 0
        %v1600 = vsel %vm1052, %v1597, 0
        %1602 = vmatpush.xpose.msra.mxu0 0.0
        %1603 = vmatpush.xpose.msra.mxu0 0.0
        %1604 = vmatpush.xpose.msra.mxu0 0.0
        %1605 = vmatpush.xpose.msra.mxu0 0.0
        %1606 = vmatpush.xpose.msra.mxu0 0.0
        %1607 = vmatpush.xpose.msra.mxu0 0.0
        %1608 = vmatpush.xpose.msra.mxu0 0.0
        %1609 = vmatpush.xpose.msra.mxu0 0.0
        %1610 = vmatpush.xpose.msra.mxu0 0.0
        %1611 = vmatpush.xpose.msra.mxu0 0.0
        %1612 = vmatpush.xpose.msra.mxu0 0.0
        %1613 = vmatpush.xpose.msra.mxu0 0.0
        %1614 = vmatpush.xpose.msra.mxu0 0.0
        %1615 = vmatpush.xpose.msra.mxu0 0.0
        %1616 = vmatpush.xpose.msra.mxu0 0.0
        %1617 = vmatpush.xpose.msra.mxu0 %v1600
        %1618 = vmatmul.f32.gmra.mxu0 %v1598
        %v1619 = vpop.f32.mrf.mxu0
        %v1620 = vadd.f32 0.0, %v1619
        %1621 = vdwg.mxu0
        %1622 = vrot.lane.b32.xlu0 %v1593, 120
        %v1623 = vpop.permute.xlu0 %1622
        %1624 = vrot.lane.b32.xlu0 %v1593, 88
        %v1625 = vpop.permute.xlu0 %1624
        %v1626 = vsel %vm1052, %v1623, 0
        %v1628 = vsel %vm1052, %v1625, 0
        %1630 = vmatpush.xpose.msra.mxu0 0.0
        %1631 = vmatpush.xpose.msra.mxu0 0.0
        %1632 = vmatpush.xpose.msra.mxu0 0.0
        %1633 = vmatpush.xpose.msra.mxu0 0.0
        %1634 = vmatpush.xpose.msra.mxu0 0.0
        %1635 = vmatpush.xpose.msra.mxu0 0.0
        %1636 = vmatpush.xpose.msra.mxu0 0.0
        %1637 = vmatpush.xpose.msra.mxu0 0.0
        %1638 = vmatpush.xpose.msra.mxu0 0.0
        %1639 = vmatpush.xpose.msra.mxu0 0.0
        %1640 = vmatpush.xpose.msra.mxu0 0.0
        %1641 = vmatpush.xpose.msra.mxu0 0.0
        %1642 = vmatpush.xpose.msra.mxu0 0.0
        %1643 = vmatpush.xpose.msra.mxu0 0.0
        %1644 = vmatpush.xpose.msra.mxu0 0.0
        %1645 = vmatpush.xpose.msra.mxu0 %v1628
        %1646 = vmatmul.f32.gmra.mxu0 %v1626
        %v1647 = vpop.f32.mrf.mxu0
        %v1648 = vadd.f32 0.0, %v1647
        %1649 = vdwg.mxu0
        %1650 = vrot.lane.b32.xlu0 %v1593, 112
        %v1651 = vpop.permute.xlu0 %1650
        %1652 = vrot.lane.b32.xlu0 %v1593, 80
        %v1653 = vpop.permute.xlu0 %1652
        %v1654 = vsel %vm1052, %v1651, 0
        %v1656 = vsel %vm1052, %v1653, 0
        %1658 = vmatpush.xpose.msra.mxu0 0.0
        %1659 = vmatpush.xpose.msra.mxu0 0.0
        %1660 = vmatpush.xpose.msra.mxu0 0.0
        %1661 = vmatpush.xpose.msra.mxu0 0.0
        %1662 = vmatpush.xpose.msra.mxu0 0.0
        %1663 = vmatpush.xpose.msra.mxu0 0.0
        %1664 = vmatpush.xpose.msra.mxu0 0.0
        %1665 = vmatpush.xpose.msra.mxu0 0.0
        %1666 = vmatpush.xpose.msra.mxu0 0.0
        %1667 = vmatpush.xpose.msra.mxu0 0.0
        %1668 = vmatpush.xpose.msra.mxu0 0.0
        %1669 = vmatpush.xpose.msra.mxu0 0.0
        %1670 = vmatpush.xpose.msra.mxu0 0.0
        %1671 = vmatpush.xpose.msra.mxu0 0.0
        %1672 = vmatpush.xpose.msra.mxu0 0.0
        %1673 = vmatpush.xpose.msra.mxu0 %v1656
        %1674 = vmatmul.f32.gmra.mxu0 %v1654
        %v1675 = vpop.f32.mrf.mxu0
        %v1676 = vadd.f32 0.0, %v1675
        %1677 = vdwg.mxu0
        %1678 = vrot.lane.b32.xlu0 %v1593, 104
        %v1679 = vpop.permute.xlu0 %1678
        %1680 = vrot.lane.b32.xlu0 %v1593, 72
        %v1681 = vpop.permute.xlu0 %1680
        %v1682 = vsel %vm1052, %v1679, 0
        %v1684 = vsel %vm1052, %v1681, 0
        %1686 = vmatpush.xpose.msra.mxu0 0.0
        %1687 = vmatpush.xpose.msra.mxu0 0.0
        %1688 = vmatpush.xpose.msra.mxu0 0.0
        %1689 = vmatpush.xpose.msra.mxu0 0.0
        %1690 = vmatpush.xpose.msra.mxu0 0.0
        %1691 = vmatpush.xpose.msra.mxu0 0.0
        %1692 = vmatpush.xpose.msra.mxu0 0.0
        %1693 = vmatpush.xpose.msra.mxu0 0.0
        %1694 = vmatpush.xpose.msra.mxu0 0.0
        %1695 = vmatpush.xpose.msra.mxu0 0.0
        %1696 = vmatpush.xpose.msra.mxu0 0.0
        %1697 = vmatpush.xpose.msra.mxu0 0.0
        %1698 = vmatpush.xpose.msra.mxu0 0.0
        %1699 = vmatpush.xpose.msra.mxu0 0.0
        %1700 = vmatpush.xpose.msra.mxu0 0.0
        %1701 = vmatpush.xpose.msra.mxu0 %v1684
        %1702 = vmatmul.f32.gmra.mxu0 %v1682
        %v1703 = vpop.f32.mrf.mxu0
        %v1704 = vadd.f32 0.0, %v1703
        %1705 = vdwg.mxu0
        %v1706 = vsel %vm1163, %v1620, -1e+20
        %v1707 = vsel %vm1163, %v1648, -1e+20
        %v1708 = vsel %vm1163, %v1676, -1e+20
        %v1709 = vsel %vm1163, %v1704, -1e+20
        %v1710 = vsel %vm1052, %v1706, -inf
        %1711 = vmax.xlane.f32.xlu0 %v1710
        %v1712 = vpop.xlane.xlu0 %1711
        %v1713 = vsel %vm1052, %v1707, -inf
        %1714 = vmax.xlane.f32.xlu0 %v1713
        %v1715 = vpop.xlane.xlu0 %1714
        %v1716 = vsel %vm1052, %v1708, -inf
        %1717 = vmax.xlane.f32.xlu0 %v1716
        %v1718 = vpop.xlane.xlu0 %1717
        %v1719 = vsel %vm1052, %v1709, -inf
        %1720 = vmax.xlane.f32.xlu0 %v1719
        %v1721 = vpop.xlane.xlu0 %1720
        %v1722 = vsub.f32 %v1706, %v1712
        %v1723 = vsub.f32 %v1707, %v1715
        %v1724 = vsub.f32 %v1708, %v1718
        %v1725 = vsub.f32 %v1709, %v1721
        %v1726 = vmul.f32 %v1722, 1.442695
        %v1727 = vpow.pop %v1726
        %v1728 = vmul.f32 %v1723, 1.442695
        %v1729 = vpow.pop %v1728
        %v1730 = vmul.f32 %v1724, 1.442695
        %v1731 = vpow.pop %v1730
        %v1732 = vmul.f32 %v1725, 1.442695
        %v1733 = vpow.pop %v1732
        %v1734 = vsel %vm1052, %v1727, 0.0
        %1735 = vadd.xlane.f32.xlu0 %v1734
        %v1736 = vpop.xlane.xlu0 %1735
        %v1737 = vsel %vm1052, %v1729, 0.0
        %1738 = vadd.xlane.f32.xlu0 %v1737
        %v1739 = vpop.xlane.xlu0 %1738
        %v1740 = vsel %vm1052, %v1731, 0.0
        %1741 = vadd.xlane.f32.xlu0 %v1740
        %v1742 = vpop.xlane.xlu0 %1741
        %v1743 = vsel %vm1052, %v1733, 0.0
        %1744 = vadd.xlane.f32.xlu0 %v1743
        %v1745 = vpop.xlane.xlu0 %1744
        %v1746 = vrcp.pop %v1736
        %v1747 = vrcp.pop %v1739
        %v1748 = vrcp.pop %v1742
        %v1749 = vrcp.pop %v1745
        %v1750 = vmul.f32 %v1727, %v1746
        %v1751 = vmul.f32 %v1729, %v1747
        %v1752 = vmul.f32 %v1731, %v1748
        %v1753 = vmul.f32 %v1733, %v1749
        %1754 = vrot.lane.b32.xlu0 %v1593, 64
        %v1755 = vpop.permute.xlu0 %1754
        %v1758 = vsel %vm1052, %v1750, 0
        %1760 = vmatpush.msra.mxu0 0.0
        %1761 = vmatpush.msra.mxu0 0.0
        %1762 = vmatpush.msra.mxu0 0.0
        %1763 = vmatpush.msra.mxu0 0.0
        %1764 = vmatpush.msra.mxu0 0.0
        %1765 = vmatpush.msra.mxu0 0.0
        %1766 = vmatpush.msra.mxu0 0.0
        %1767 = vmatpush.msra.mxu0 0.0
        %1768 = vmatpush.msra.mxu0 0.0
        %1769 = vmatpush.msra.mxu0 0.0
        %1770 = vmatpush.msra.mxu0 0.0
        %1771 = vmatpush.msra.mxu0 0.0
        %1772 = vmatpush.msra.mxu0 0.0
        %1773 = vmatpush.msra.mxu0 0.0
        %1774 = vmatpush.msra.mxu0 0.0
        %1775 = vmatpush.msra.mxu0 %v1755
        %1776 = vmatmul.f32.gmra.mxu0 %v1758
        %v1777 = vpop.f32.mrf.mxu0
        %v1778 = vadd.f32 0.0, %v1777
        %1779 = vdwg.mxu0
        %v1781 = vsel %vm1052, %v1778, 0
        %1783 = vmatpush.msra.mxu0 0.0
        %1784 = vmatpush.msra.mxu0 0.0
        %1785 = vmatpush.msra.mxu0 0.0
        %1786 = vmatpush.msra.mxu0 0.0
        %1787 = vmatpush.msra.mxu0 0.0
        %1788 = vmatpush.msra.mxu0 0.0
        %1789 = vmatpush.msra.mxu0 0.0
        %1790 = vmatpush.msra.mxu0 0.0
        %1791 = vmatpush.msra.mxu0 0.0
        %1792 = vmatpush.msra.mxu0 0.0
        %1793 = vmatpush.msra.mxu0 0.0
        %1794 = vmatpush.msra.mxu0 0.0
        %1795 = vmatpush.msra.mxu0 0.0
        %1796 = vmatpush.msra.mxu0 0.0
        %1797 = vmatpush.msra.mxu0 0.0
        %1798 = vmatpush.msra.mxu0 %v1566
        %1799 = vmatmul.f32.gmra.mxu0 %v1781
        %v1800 = vpop.f32.mrf.mxu0
        %v1801 = vadd.f32 0.0, %v1800
        %1802 = vdwg.mxu0
        %v1804 = vperm.slane %v1571, 0
        %v1806 = vadd.f32 %v1804, %v1801
        %1807 = vrot.lane.b32.xlu0 %v1593, 56
        %v1808 = vpop.permute.xlu0 %1807
        %v1811 = vsel %vm1052, %v1751, 0
        %1813 = vmatpush.msra.mxu0 0.0
        %1814 = vmatpush.msra.mxu0 0.0
        %1815 = vmatpush.msra.mxu0 0.0
        %1816 = vmatpush.msra.mxu0 0.0
        %1817 = vmatpush.msra.mxu0 0.0
        %1818 = vmatpush.msra.mxu0 0.0
        %1819 = vmatpush.msra.mxu0 0.0
        %1820 = vmatpush.msra.mxu0 0.0
        %1821 = vmatpush.msra.mxu0 0.0
        %1822 = vmatpush.msra.mxu0 0.0
        %1823 = vmatpush.msra.mxu0 0.0
        %1824 = vmatpush.msra.mxu0 0.0
        %1825 = vmatpush.msra.mxu0 0.0
        %1826 = vmatpush.msra.mxu0 0.0
        %1827 = vmatpush.msra.mxu0 0.0
        %1828 = vmatpush.msra.mxu0 %v1808
        %1829 = vmatmul.f32.gmra.mxu0 %v1811
        %v1830 = vpop.f32.mrf.mxu0
        %v1831 = vadd.f32 0.0, %v1830
        %1832 = vdwg.mxu0
        %v1834 = vsel %vm1052, %v1831, 0
        %1836 = vmatpush.msra.mxu0 0.0
        %1837 = vmatpush.msra.mxu0 0.0
        %1838 = vmatpush.msra.mxu0 0.0
        %1839 = vmatpush.msra.mxu0 0.0
        %1840 = vmatpush.msra.mxu0 0.0
        %1841 = vmatpush.msra.mxu0 0.0
        %1842 = vmatpush.msra.mxu0 0.0
        %1843 = vmatpush.msra.mxu0 0.0
        %1844 = vmatpush.msra.mxu0 0.0
        %1845 = vmatpush.msra.mxu0 0.0
        %1846 = vmatpush.msra.mxu0 0.0
        %1847 = vmatpush.msra.mxu0 0.0
        %1848 = vmatpush.msra.mxu0 0.0
        %1849 = vmatpush.msra.mxu0 0.0
        %1850 = vmatpush.msra.mxu0 0.0
        %1851 = vmatpush.msra.mxu0 %v1567
        %1852 = vmatmul.f32.gmra.mxu0 %v1834
        %v1853 = vpop.f32.mrf.mxu0
        %v1854 = vadd.f32 0.0, %v1853
        %1855 = vdwg.mxu0
        %v1856 = vadd.f32 %v1806, %v1854
        %1857 = vrot.lane.b32.xlu0 %v1593, 48
        %v1858 = vpop.permute.xlu0 %1857
        %v1861 = vsel %vm1052, %v1752, 0
        %1863 = vmatpush.msra.mxu0 0.0
        %1864 = vmatpush.msra.mxu0 0.0
        %1865 = vmatpush.msra.mxu0 0.0
        %1866 = vmatpush.msra.mxu0 0.0
        %1867 = vmatpush.msra.mxu0 0.0
        %1868 = vmatpush.msra.mxu0 0.0
        %1869 = vmatpush.msra.mxu0 0.0
        %1870 = vmatpush.msra.mxu0 0.0
        %1871 = vmatpush.msra.mxu0 0.0
        %1872 = vmatpush.msra.mxu0 0.0
        %1873 = vmatpush.msra.mxu0 0.0
        %1874 = vmatpush.msra.mxu0 0.0
        %1875 = vmatpush.msra.mxu0 0.0
        %1876 = vmatpush.msra.mxu0 0.0
        %1877 = vmatpush.msra.mxu0 0.0
        %1878 = vmatpush.msra.mxu0 %v1858
        %1879 = vmatmul.f32.gmra.mxu0 %v1861
        %v1880 = vpop.f32.mrf.mxu0
        %v1881 = vadd.f32 0.0, %v1880
        %1882 = vdwg.mxu0
        %v1884 = vsel %vm1052, %v1881, 0
        %1886 = vmatpush.msra.mxu0 0.0
        %1887 = vmatpush.msra.mxu0 0.0
        %1888 = vmatpush.msra.mxu0 0.0
        %1889 = vmatpush.msra.mxu0 0.0
        %1890 = vmatpush.msra.mxu0 0.0
        %1891 = vmatpush.msra.mxu0 0.0
        %1892 = vmatpush.msra.mxu0 0.0
        %1893 = vmatpush.msra.mxu0 0.0
        %1894 = vmatpush.msra.mxu0 0.0
        %1895 = vmatpush.msra.mxu0 0.0
        %1896 = vmatpush.msra.mxu0 0.0
        %1897 = vmatpush.msra.mxu0 0.0
        %1898 = vmatpush.msra.mxu0 0.0
        %1899 = vmatpush.msra.mxu0 0.0
        %1900 = vmatpush.msra.mxu0 0.0
        %1901 = vmatpush.msra.mxu0 %v1568
        %1902 = vmatmul.f32.gmra.mxu0 %v1884
        %v1903 = vpop.f32.mrf.mxu0
        %v1904 = vadd.f32 0.0, %v1903
        %1905 = vdwg.mxu0
        %v1906 = vadd.f32 %v1856, %v1904
        %1907 = vrot.lane.b32.xlu0 %v1593, 40
        %v1908 = vpop.permute.xlu0 %1907
        %v1911 = vsel %vm1052, %v1753, 0
        %1913 = vmatpush.msra.mxu0 0.0
        %1914 = vmatpush.msra.mxu0 0.0
        %1915 = vmatpush.msra.mxu0 0.0
        %1916 = vmatpush.msra.mxu0 0.0
        %1917 = vmatpush.msra.mxu0 0.0
        %1918 = vmatpush.msra.mxu0 0.0
        %1919 = vmatpush.msra.mxu0 0.0
        %1920 = vmatpush.msra.mxu0 0.0
        %1921 = vmatpush.msra.mxu0 0.0
        %1922 = vmatpush.msra.mxu0 0.0
        %1923 = vmatpush.msra.mxu0 0.0
        %1924 = vmatpush.msra.mxu0 0.0
        %1925 = vmatpush.msra.mxu0 0.0
        %1926 = vmatpush.msra.mxu0 0.0
        %1927 = vmatpush.msra.mxu0 0.0
        %1928 = vmatpush.msra.mxu0 %v1908
        %1929 = vmatmul.f32.gmra.mxu0 %v1911
        %v1930 = vpop.f32.mrf.mxu0
        %v1931 = vadd.f32 0.0, %v1930
        %1932 = vdwg.mxu0
        %v1934 = vsel %vm1052, %v1931, 0
        %1936 = vmatpush.msra.mxu0 0.0
        %1937 = vmatpush.msra.mxu0 0.0
        %1938 = vmatpush.msra.mxu0 0.0
        %1939 = vmatpush.msra.mxu0 0.0
        %1940 = vmatpush.msra.mxu0 0.0
        %1941 = vmatpush.msra.mxu0 0.0
        %1942 = vmatpush.msra.mxu0 0.0
        %1943 = vmatpush.msra.mxu0 0.0
        %1944 = vmatpush.msra.mxu0 0.0
        %1945 = vmatpush.msra.mxu0 0.0
        %1946 = vmatpush.msra.mxu0 0.0
        %1947 = vmatpush.msra.mxu0 0.0
        %1948 = vmatpush.msra.mxu0 0.0
        %1949 = vmatpush.msra.mxu0 0.0
        %1950 = vmatpush.msra.mxu0 0.0
        %1951 = vmatpush.msra.mxu0 %v1569
        %1952 = vmatmul.f32.gmra.mxu0 %v1934
        %v1953 = vpop.f32.mrf.mxu0
        %v1954 = vadd.f32 0.0, %v1953
        %1955 = vdwg.mxu0
        %v1956 = vadd.f32 %v1906, %v1954
        %s1957 = scalar_lea.vmem %s13, 1
        %v1958 = vld [vmem:[%s1957] sm:$0x1]
        %s1959 = scalar_lea.vmem %s15, 1
        %v1960 = vld [vmem:[%s1959] sm:$0x1]
        %v1961 = vadd.f32 %v1956, %v1559
        %v1962 = vsel %vm1025, %v1961, 0.0
        %1963 = vadd.xlane.f32.xlu0 %v1962
        %v1964 = vpop.xlane.xlu0 %1963
        %v1965 = vmul.f32 %v1964, %v1427
        %v1966 = vsub.f32 %v1961, %v1965
        %v1967 = vmul.f32 %v1966, %v1966
        %v1968 = vsel %vm1025, %v1967, 0.0
        %1969 = vadd.xlane.f32.xlu0 %v1968
        %v1970 = vpop.xlane.xlu0 %1969
        %v1971 = vmul.f32 %v1970, %v1427
        %v1972 = vadd.f32 %v1971, 1e-05
        %v1973 = vrsqrt.pop %v1972
        %v1974 = vmul.f32 %v1973, %v1972
        %v1975 = vmul.f32 %v1974, %v1973
        %v1976 = vmul.f32 0.5, %v1975
        %v1977 = vsub.f32 1.5, %v1976
        %v1978 = vmul.f32 %v1973, %v1977
        %vm1979 = vweird.f32 %v1972
        %vm1980 = vweird.f32 %v1973
        %vm1981 = vmor %vm1979, %vm1980
        %v1982 = vsel %vm1981, %v1973, %v1978
        %v1983 = vmul.f32 %v1966, %v1982
        %v1985 = vperm.slane %v1958, 0
        %v1987 = vmul.f32 %v1983, %v1985
        %v1989 = vperm.slane %v1960, 0
        %v1991 = vadd.f32 %v1987, %v1989
        %s1992 = scalar_lea.vmem %s21, 32
        %v1993 = vld [vmem:[%s1992] sm:$0xff]
        %v1994 = vld [vmem:[%s1992 + $0x8] sm:$0xff]
        %v1995 = vld [vmem:[%s1992 + $0x10] sm:$0xff]
        %v1996 = vld [vmem:[%s1992 + $0x18] sm:$0xff]
        %s1997 = scalar_lea.vmem %s23, 1
        %v1998 = vld [vmem:[%s1997] sm:$0x1]
        %s1999 = scalar_lea.vmem %s25, 128
        %v2000 = vld [vmem:[%s1999] sm:$0xff]
        %v2001 = vld [vmem:[%s1999 + $0x8] sm:$0xff]
        %v2002 = vld [vmem:[%s1999 + $0x10] sm:$0xff]
        %v2003 = vld [vmem:[%s1999 + $0x18] sm:$0xff]
        %v2004 = vld [vmem:[%s1999 + $0x20] sm:$0xff]
        %v2005 = vld [vmem:[%s1999 + $0x28] sm:$0xff]
        %v2006 = vld [vmem:[%s1999 + $0x30] sm:$0xff]
        %v2007 = vld [vmem:[%s1999 + $0x38] sm:$0xff]
        %v2008 = vld [vmem:[%s1999 + $0x40] sm:$0xff]
        %v2009 = vld [vmem:[%s1999 + $0x48] sm:$0xff]
        %v2010 = vld [vmem:[%s1999 + $0x50] sm:$0xff]
        %v2011 = vld [vmem:[%s1999 + $0x58] sm:$0xff]
        %v2012 = vld [vmem:[%s1999 + $0x60] sm:$0xff]
        %v2013 = vld [vmem:[%s1999 + $0x68] sm:$0xff]
        %v2014 = vld [vmem:[%s1999 + $0x70] sm:$0xff]
        %v2015 = vld [vmem:[%s1999 + $0x78] sm:$0xff]
        %s2016 = scalar_lea.vmem %s27, 1
        %v2017 = vld [vmem:[%s2016] sm:$0x1]
        %v2019 = vperm.slane %v1998, 0
        %v2022 = vsel %vm1025, %v1991, 0
        %2024 = vmatpush.msra.mxu0 0.0
        %2025 = vmatpush.msra.mxu0 0.0
        %2026 = vmatpush.msra.mxu0 0.0
        %2027 = vmatpush.msra.mxu0 0.0
        %2028 = vmatpush.msra.mxu0 0.0
        %2029 = vmatpush.msra.mxu0 0.0
        %2030 = vmatpush.msra.mxu0 0.0
        %2031 = vmatpush.msra.mxu0 0.0
        %2032 = vmatpush.msra.mxu0 0.0
        %2033 = vmatpush.msra.mxu0 0.0
        %2034 = vmatpush.msra.mxu0 0.0
        %2035 = vmatpush.msra.mxu0 0.0
        %2036 = vmatpush.msra.mxu0 %v1996
        %2037 = vmatpush.msra.mxu0 %v1995
        %2038 = vmatpush.msra.mxu0 %v1994
        %2039 = vmatpush.msra.mxu0 %v1993
        %2040 = vmatmul.f32.gmra.mxu0 %v2022
        %v2041 = vpop.f32.mrf.mxu0
        %v2042 = vadd.f32 %v2019, %v2041
        %2043 = vdwg.mxu0
        %v2044 = vmax.f32 %v2042, 0.0
        %v2046 = vperm.slane %v2017, 0
        %2048 = vmatpush.msra.mxu0 %v2015
        %2049 = vmatpush.msra.mxu0 %v2014
        %2050 = vmatpush.msra.mxu0 %v2013
        %2051 = vmatpush.msra.mxu0 %v2012
        %2052 = vmatpush.msra.mxu0 %v2011
        %2053 = vmatpush.msra.mxu0 %v2010
        %2054 = vmatpush.msra.mxu0 %v2009
        %2055 = vmatpush.msra.mxu0 %v2008
        %2056 = vmatpush.msra.mxu0 %v2007
        %2057 = vmatpush.msra.mxu0 %v2006
        %2058 = vmatpush.msra.mxu0 %v2005
        %2059 = vmatpush.msra.mxu0 %v2004
        %2060 = vmatpush.msra.mxu0 %v2003
        %2061 = vmatpush.msra.mxu0 %v2002
        %2062 = vmatpush.msra.mxu0 %v2001
        %2063 = vmatpush.msra.mxu0 %v2000
        %2064 = vmatmul.f32.gmra.mxu0 %v2044
        %v2065 = vpop.f32.mrf.mxu0
        %v2066 = vadd.f32 %v2046, %v2065
        %2067 = vdwg.mxu0
        %s2068 = scalar_lea.vmem %s17, 1
        %v2069 = vld [vmem:[%s2068] sm:$0x1]
        %s2070 = scalar_lea.vmem %s19, 1
        %v2071 = vld [vmem:[%s2070] sm:$0x1]
        %v2072 = vadd.f32 %v2066, %v1991
        %v2073 = vsel %vm1025, %v2072, 0.0
        %2074 = vadd.xlane.f32.xlu0 %v2073
        %v2075 = vpop.xlane.xlu0 %2074
        %v2076 = vmul.f32 %v2075, %v1427
        %v2077 = vsub.f32 %v2072, %v2076
        %v2078 = vmul.f32 %v2077, %v2077
        %v2079 = vsel %vm1025, %v2078, 0.0
        %2080 = vadd.xlane.f32.xlu0 %v2079
        %v2081 = vpop.xlane.xlu0 %2080
        %v2082 = vmul.f32 %v2081, %v1427
        %v2083 = vadd.f32 %v2082, 1e-05
        %v2084 = vrsqrt.pop %v2083
        %v2085 = vmul.f32 %v2084, %v2083
        %v2086 = vmul.f32 %v2085, %v2084
        %v2087 = vmul.f32 0.5, %v2086
        %v2088 = vsub.f32 1.5, %v2087
        %v2089 = vmul.f32 %v2084, %v2088
        %vm2090 = vweird.f32 %v2083
        %vm2091 = vweird.f32 %v2084
        %vm2092 = vmor %vm2090, %vm2091
        %v2093 = vsel %vm2092, %v2084, %v2089
        %v2094 = vmul.f32 %v2077, %v2093
        %v2096 = vperm.slane %v2069, 0
        %v2098 = vmul.f32 %v2094, %v2096
        %v2100 = vperm.slane %v2071, 0
        %v2102 = vadd.f32 %v2098, %v2100
        %v2103 = vld [vmem:[%s1009] sm:$0xff]
        %v2104 = vlaneseq
        %v2105 = vshrl.u32 %v2104, 7
        %v2106 = vlaneseq
        %v2107 = vand.u32 %v2106, 127
        %vm2108 = vcmp.le.s32.totalorder %v2107, %v2105
        %v2109 = vld [vmem:[%s29] sm:$0xff]
        %v2110 = vld [vmem:[%s29 + $0x8] sm:$0xff]
        %v2111 = vld [vmem:[%s29 + $0x10] sm:$0xff]
        %v2112 = vld [vmem:[%s29 + $0x18] sm:$0xff]
        %v2113 = vld [vmem:[%s31] sm:$0xff]
        %v2114 = vld [vmem:[%s31 + $0x8] sm:$0xff]
        %v2115 = vld [vmem:[%s31 + $0x10] sm:$0xff]
        %v2116 = vld [vmem:[%s31 + $0x18] sm:$0xff]
        %v2117 = vld [vmem:[%s33] sm:$0x1]
        %v2119 = vsel %vm1025, %v2103, 0
        %2121 = vmatpush.msra.mxu0 0.0
        %2122 = vmatpush.msra.mxu0 0.0
        %2123 = vmatpush.msra.mxu0 0.0
        %2124 = vmatpush.msra.mxu0 0.0
        %2125 = vmatpush.msra.mxu0 0.0
        %2126 = vmatpush.msra.mxu0 0.0
        %2127 = vmatpush.msra.mxu0 0.0
        %2128 = vmatpush.msra.mxu0 0.0
        %2129 = vmatpush.msra.mxu0 0.0
        %2130 = vmatpush.msra.mxu0 0.0
        %2131 = vmatpush.msra.mxu0 0.0
        %2132 = vmatpush.msra.mxu0 0.0
        %2133 = vmatpush.msra.mxu0 %v2112
        %2134 = vmatpush.msra.mxu0 %v2111
        %2135 = vmatpush.msra.mxu0 %v2110
        %2136 = vmatpush.msra.mxu0 %v2109
        %2137 = vmatmul.f32.gmra.mxu0 %v2119
        %v2138 = vpop.f32.mrf.mxu0
        %v2139 = vadd.f32 0.0, %v2138
        %2140 = vdwg.mxu0
        %2142 = vrot.lane.b32.xlu0 %v2139, 96
        %v2143 = vpop.permute.xlu0 %2142
        %v2144 = vsel %vm1052, %v2139, 0
        %v2146 = vsel %vm1052, %v2143, 0
        %2148 = vmatpush.xpose.msra.mxu0 0.0
        %2149 = vmatpush.xpose.msra.mxu0 0.0
        %2150 = vmatpush.xpose.msra.mxu0 0.0
        %2151 = vmatpush.xpose.msra.mxu0 0.0
        %2152 = vmatpush.xpose.msra.mxu0 0.0
        %2153 = vmatpush.xpose.msra.mxu0 0.0
        %2154 = vmatpush.xpose.msra.mxu0 0.0
        %2155 = vmatpush.xpose.msra.mxu0 0.0
        %2156 = vmatpush.xpose.msra.mxu0 0.0
        %2157 = vmatpush.xpose.msra.mxu0 0.0
        %2158 = vmatpush.xpose.msra.mxu0 0.0
        %2159 = vmatpush.xpose.msra.mxu0 0.0
        %2160 = vmatpush.xpose.msra.mxu0 0.0
        %2161 = vmatpush.xpose.msra.mxu0 0.0
        %2162 = vmatpush.xpose.msra.mxu0 0.0
        %2163 = vmatpush.xpose.msra.mxu0 %v2146
        %2164 = vmatmul.f32.gmra.mxu0 %v2144
        %v2165 = vpop.f32.mrf.mxu0
        %v2166 = vadd.f32 0.0, %v2165
        %2167 = vdwg.mxu0
        %2168 = vrot.lane.b32.xlu0 %v2139, 120
        %v2169 = vpop.permute.xlu0 %2168
        %2170 = vrot.lane.b32.xlu0 %v2139, 88
        %v2171 = vpop.permute.xlu0 %2170
        %v2172 = vsel %vm1052, %v2169, 0
        %v2174 = vsel %vm1052, %v2171, 0
        %2176 = vmatpush.xpose.msra.mxu0 0.0
        %2177 = vmatpush.xpose.msra.mxu0 0.0
        %2178 = vmatpush.xpose.msra.mxu0 0.0
        %2179 = vmatpush.xpose.msra.mxu0 0.0
        %2180 = vmatpush.xpose.msra.mxu0 0.0
        %2181 = vmatpush.xpose.msra.mxu0 0.0
        %2182 = vmatpush.xpose.msra.mxu0 0.0
        %2183 = vmatpush.xpose.msra.mxu0 0.0
        %2184 = vmatpush.xpose.msra.mxu0 0.0
        %2185 = vmatpush.xpose.msra.mxu0 0.0
        %2186 = vmatpush.xpose.msra.mxu0 0.0
        %2187 = vmatpush.xpose.msra.mxu0 0.0
        %2188 = vmatpush.xpose.msra.mxu0 0.0
        %2189 = vmatpush.xpose.msra.mxu0 0.0
        %2190 = vmatpush.xpose.msra.mxu0 0.0
        %2191 = vmatpush.xpose.msra.mxu0 %v2174
        %2192 = vmatmul.f32.gmra.mxu0 %v2172
        %v2193 = vpop.f32.mrf.mxu0
        %v2194 = vadd.f32 0.0, %v2193
        %2195 = vdwg.mxu0
        %2196 = vrot.lane.b32.xlu0 %v2139, 112
        %v2197 = vpop.permute.xlu0 %2196
        %2198 = vrot.lane.b32.xlu0 %v2139, 80
        %v2199 = vpop.permute.xlu0 %2198
        %v2200 = vsel %vm1052, %v2197, 0
        %v2202 = vsel %vm1052, %v2199, 0
        %2204 = vmatpush.xpose.msra.mxu0 0.0
        %2205 = vmatpush.xpose.msra.mxu0 0.0
        %2206 = vmatpush.xpose.msra.mxu0 0.0
        %2207 = vmatpush.xpose.msra.mxu0 0.0
        %2208 = vmatpush.xpose.msra.mxu0 0.0
        %2209 = vmatpush.xpose.msra.mxu0 0.0
        %2210 = vmatpush.xpose.msra.mxu0 0.0
        %2211 = vmatpush.xpose.msra.mxu0 0.0
        %2212 = vmatpush.xpose.msra.mxu0 0.0
        %2213 = vmatpush.xpose.msra.mxu0 0.0
        %2214 = vmatpush.xpose.msra.mxu0 0.0
        %2215 = vmatpush.xpose.msra.mxu0 0.0
        %2216 = vmatpush.xpose.msra.mxu0 0.0
        %2217 = vmatpush.xpose.msra.mxu0 0.0
        %2218 = vmatpush.xpose.msra.mxu0 0.0
        %2219 = vmatpush.xpose.msra.mxu0 %v2202
        %2220 = vmatmul.f32.gmra.mxu0 %v2200
        %v2221 = vpop.f32.mrf.mxu0
        %v2222 = vadd.f32 0.0, %v2221
        %2223 = vdwg.mxu0
        %2224 = vrot.lane.b32.xlu0 %v2139, 104
        %v2225 = vpop.permute.xlu0 %2224
        %2226 = vrot.lane.b32.xlu0 %v2139, 72
        %v2227 = vpop.permute.xlu0 %2226
        %v2228 = vsel %vm1052, %v2225, 0
        %v2230 = vsel %vm1052, %v2227, 0
        %2232 = vmatpush.xpose.msra.mxu0 0.0
        %2233 = vmatpush.xpose.msra.mxu0 0.0
        %2234 = vmatpush.xpose.msra.mxu0 0.0
        %2235 = vmatpush.xpose.msra.mxu0 0.0
        %2236 = vmatpush.xpose.msra.mxu0 0.0
        %2237 = vmatpush.xpose.msra.mxu0 0.0
        %2238 = vmatpush.xpose.msra.mxu0 0.0
        %2239 = vmatpush.xpose.msra.mxu0 0.0
        %2240 = vmatpush.xpose.msra.mxu0 0.0
        %2241 = vmatpush.xpose.msra.mxu0 0.0
        %2242 = vmatpush.xpose.msra.mxu0 0.0
        %2243 = vmatpush.xpose.msra.mxu0 0.0
        %2244 = vmatpush.xpose.msra.mxu0 0.0
        %2245 = vmatpush.xpose.msra.mxu0 0.0
        %2246 = vmatpush.xpose.msra.mxu0 0.0
        %2247 = vmatpush.xpose.msra.mxu0 %v2230
        %2248 = vmatmul.f32.gmra.mxu0 %v2228
        %v2249 = vpop.f32.mrf.mxu0
        %v2250 = vadd.f32 0.0, %v2249
        %2251 = vdwg.mxu0
        %v2252 = vsel %vm2108, %v2166, -1e+20
        %v2253 = vsel %vm2108, %v2194, -1e+20
        %v2254 = vsel %vm2108, %v2222, -1e+20
        %v2255 = vsel %vm2108, %v2250, -1e+20
        %v2256 = vsel %vm1052, %v2252, -inf
        %2257 = vmax.xlane.f32.xlu0 %v2256
        %v2258 = vpop.xlane.xlu0 %2257
        %v2259 = vsel %vm1052, %v2253, -inf
        %2260 = vmax.xlane.f32.xlu0 %v2259
        %v2261 = vpop.xlane.xlu0 %2260
        %v2262 = vsel %vm1052, %v2254, -inf
        %2263 = vmax.xlane.f32.xlu0 %v2262
        %v2264 = vpop.xlane.xlu0 %2263
        %v2265 = vsel %vm1052, %v2255, -inf
        %2266 = vmax.xlane.f32.xlu0 %v2265
        %v2267 = vpop.xlane.xlu0 %2266
        %v2268 = vsub.f32 %v2252, %v2258
        %v2269 = vsub.f32 %v2253, %v2261
        %v2270 = vsub.f32 %v2254, %v2264
        %v2271 = vsub.f32 %v2255, %v2267
        %v2272 = vmul.f32 %v2268, 1.442695
        %v2273 = vpow.pop %v2272
        %v2274 = vmul.f32 %v2269, 1.442695
        %v2275 = vpow.pop %v2274
        %v2276 = vmul.f32 %v2270, 1.442695
        %v2277 = vpow.pop %v2276
        %v2278 = vmul.f32 %v2271, 1.442695
        %v2279 = vpow.pop %v2278
        %v2280 = vsel %vm1052, %v2273, 0.0
        %2281 = vadd.xlane.f32.xlu0 %v2280
        %v2282 = vpop.xlane.xlu0 %2281
        %v2283 = vsel %vm1052, %v2275, 0.0
        %2284 = vadd.xlane.f32.xlu0 %v2283
        %v2285 = vpop.xlane.xlu0 %2284
        %v2286 = vsel %vm1052, %v2277, 0.0
        %2287 = vadd.xlane.f32.xlu0 %v2286
        %v2288 = vpop.xlane.xlu0 %2287
        %v2289 = vsel %vm1052, %v2279, 0.0
        %2290 = vadd.xlane.f32.xlu0 %v2289
        %v2291 = vpop.xlane.xlu0 %2290
        %v2292 = vrcp.pop %v2282
        %v2293 = vrcp.pop %v2285
        %v2294 = vrcp.pop %v2288
        %v2295 = vrcp.pop %v2291
        %v2296 = vmul.f32 %v2273, %v2292
        %v2297 = vmul.f32 %v2275, %v2293
        %v2298 = vmul.f32 %v2277, %v2294
        %v2299 = vmul.f32 %v2279, %v2295
        %2300 = vrot.lane.b32.xlu0 %v2139, 64
        %v2301 = vpop.permute.xlu0 %2300
        %v2304 = vsel %vm1052, %v2296, 0
        %2306 = vmatpush.msra.mxu0 0.0
        %2307 = vmatpush.msra.mxu0 0.0
        %2308 = vmatpush.msra.mxu0 0.0
        %2309 = vmatpush.msra.mxu0 0.0
        %2310 = vmatpush.msra.mxu0 0.0
        %2311 = vmatpush.msra.mxu0 0.0
        %2312 = vmatpush.msra.mxu0 0.0
        %2313 = vmatpush.msra.mxu0 0.0
        %2314 = vmatpush.msra.mxu0 0.0
        %2315 = vmatpush.msra.mxu0 0.0
        %2316 = vmatpush.msra.mxu0 0.0
        %2317 = vmatpush.msra.mxu0 0.0
        %2318 = vmatpush.msra.mxu0 0.0
        %2319 = vmatpush.msra.mxu0 0.0
        %2320 = vmatpush.msra.mxu0 0.0
        %2321 = vmatpush.msra.mxu0 %v2301
        %2322 = vmatmul.f32.gmra.mxu0 %v2304
        %v2323 = vpop.f32.mrf.mxu0
        %v2324 = vadd.f32 0.0, %v2323
        %2325 = vdwg.mxu0
        %v2327 = vsel %vm1052, %v2324, 0
        %2329 = vmatpush.msra.mxu0 0.0
        %2330 = vmatpush.msra.mxu0 0.0
        %2331 = vmatpush.msra.mxu0 0.0
        %2332 = vmatpush.msra.mxu0 0.0
        %2333 = vmatpush.msra.mxu0 0.0
        %2334 = vmatpush.msra.mxu0 0.0
        %2335 = vmatpush.msra.mxu0 0.0
        %2336 = vmatpush.msra.mxu0 0.0
        %2337 = vmatpush.msra.mxu0 0.0
        %2338 = vmatpush.msra.mxu0 0.0
        %2339 = vmatpush.msra.mxu0 0.0
        %2340 = vmatpush.msra.mxu0 0.0
        %2341 = vmatpush.msra.mxu0 0.0
        %2342 = vmatpush.msra.mxu0 0.0
        %2343 = vmatpush.msra.mxu0 0.0
        %2344 = vmatpush.msra.mxu0 %v2113
        %2345 = vmatmul.f32.gmra.mxu0 %v2327
        %v2346 = vpop.f32.mrf.mxu0
        %v2347 = vadd.f32 0.0, %v2346
        %2348 = vdwg.mxu0
        %v2350 = vperm.slane %v2117, 0
        %v2352 = vadd.f32 %v2350, %v2347
        %2353 = vrot.lane.b32.xlu0 %v2139, 56
        %v2354 = vpop.permute.xlu0 %2353
        %v2357 = vsel %vm1052, %v2297, 0
        %2359 = vmatpush.msra.mxu0 0.0
        %2360 = vmatpush.msra.mxu0 0.0
        %2361 = vmatpush.msra.mxu0 0.0
        %2362 = vmatpush.msra.mxu0 0.0
        %2363 = vmatpush.msra.mxu0 0.0
        %2364 = vmatpush.msra.mxu0 0.0
        %2365 = vmatpush.msra.mxu0 0.0
        %2366 = vmatpush.msra.mxu0 0.0
        %2367 = vmatpush.msra.mxu0 0.0
        %2368 = vmatpush.msra.mxu0 0.0
        %2369 = vmatpush.msra.mxu0 0.0
        %2370 = vmatpush.msra.mxu0 0.0
        %2371 = vmatpush.msra.mxu0 0.0
        %2372 = vmatpush.msra.mxu0 0.0
        %2373 = vmatpush.msra.mxu0 0.0
        %2374 = vmatpush.msra.mxu0 %v2354
        %2375 = vmatmul.f32.gmra.mxu0 %v2357
        %v2376 = vpop.f32.mrf.mxu0
        %v2377 = vadd.f32 0.0, %v2376
        %2378 = vdwg.mxu0
        %v2380 = vsel %vm1052, %v2377, 0
        %2382 = vmatpush.msra.mxu0 0.0
        %2383 = vmatpush.msra.mxu0 0.0
        %2384 = vmatpush.msra.mxu0 0.0
        %2385 = vmatpush.msra.mxu0 0.0
        %2386 = vmatpush.msra.mxu0 0.0
        %2387 = vmatpush.msra.mxu0 0.0
        %2388 = vmatpush.msra.mxu0 0.0
        %2389 = vmatpush.msra.mxu0 0.0
        %2390 = vmatpush.msra.mxu0 0.0
        %2391 = vmatpush.msra.mxu0 0.0
        %2392 = vmatpush.msra.mxu0 0.0
        %2393 = vmatpush.msra.mxu0 0.0
        %2394 = vmatpush.msra.mxu0 0.0
        %2395 = vmatpush.msra.mxu0 0.0
        %2396 = vmatpush.msra.mxu0 0.0
        %2397 = vmatpush.msra.mxu0 %v2114
        %2398 = vmatmul.f32.gmra.mxu0 %v2380
        %v2399 = vpop.f32.mrf.mxu0
        %v2400 = vadd.f32 0.0, %v2399
        %2401 = vdwg.mxu0
        %v2402 = vadd.f32 %v2352, %v2400
        %2403 = vrot.lane.b32.xlu0 %v2139, 48
        %v2404 = vpop.permute.xlu0 %2403
        %v2407 = vsel %vm1052, %v2298, 0
        %2409 = vmatpush.msra.mxu0 0.0
        %2410 = vmatpush.msra.mxu0 0.0
        %2411 = vmatpush.msra.mxu0 0.0
        %2412 = vmatpush.msra.mxu0 0.0
        %2413 = vmatpush.msra.mxu0 0.0
        %2414 = vmatpush.msra.mxu0 0.0
        %2415 = vmatpush.msra.mxu0 0.0
        %2416 = vmatpush.msra.mxu0 0.0
        %2417 = vmatpush.msra.mxu0 0.0
        %2418 = vmatpush.msra.mxu0 0.0
        %2419 = vmatpush.msra.mxu0 0.0
        %2420 = vmatpush.msra.mxu0 0.0
        %2421 = vmatpush.msra.mxu0 0.0
        %2422 = vmatpush.msra.mxu0 0.0
        %2423 = vmatpush.msra.mxu0 0.0
        %2424 = vmatpush.msra.mxu0 %v2404
        %2425 = vmatmul.f32.gmra.mxu0 %v2407
        %v2426 = vpop.f32.mrf.mxu0
        %v2427 = vadd.f32 0.0, %v2426
        %2428 = vdwg.mxu0
        %v2430 = vsel %vm1052, %v2427, 0
        %2432 = vmatpush.msra.mxu0 0.0
        %2433 = vmatpush.msra.mxu0 0.0
        %2434 = vmatpush.msra.mxu0 0.0
        %2435 = vmatpush.msra.mxu0 0.0
        %2436 = vmatpush.msra.mxu0 0.0
        %2437 = vmatpush.msra.mxu0 0.0
        %2438 = vmatpush.msra.mxu0 0.0
        %2439 = vmatpush.msra.mxu0 0.0
        %2440 = vmatpush.msra.mxu0 0.0
        %2441 = vmatpush.msra.mxu0 0.0
        %2442 = vmatpush.msra.mxu0 0.0
        %2443 = vmatpush.msra.mxu0 0.0
        %2444 = vmatpush.msra.mxu0 0.0
        %2445 = vmatpush.msra.mxu0 0.0
        %2446 = vmatpush.msra.mxu0 0.0
        %2447 = vmatpush.msra.mxu0 %v2115
        %2448 = vmatmul.f32.gmra.mxu0 %v2430
        %v2449 = vpop.f32.mrf.mxu0
        %v2450 = vadd.f32 0.0, %v2449
        %2451 = vdwg.mxu0
        %v2452 = vadd.f32 %v2402, %v2450
        %2453 = vrot.lane.b32.xlu0 %v2139, 40
        %v2454 = vpop.permute.xlu0 %2453
        %v2457 = vsel %vm1052, %v2299, 0
        %2459 = vmatpush.msra.mxu0 0.0
        %2460 = vmatpush.msra.mxu0 0.0
        %2461 = vmatpush.msra.mxu0 0.0
        %2462 = vmatpush.msra.mxu0 0.0
        %2463 = vmatpush.msra.mxu0 0.0
        %2464 = vmatpush.msra.mxu0 0.0
        %2465 = vmatpush.msra.mxu0 0.0
        %2466 = vmatpush.msra.mxu0 0.0
        %2467 = vmatpush.msra.mxu0 0.0
        %2468 = vmatpush.msra.mxu0 0.0
        %2469 = vmatpush.msra.mxu0 0.0
        %2470 = vmatpush.msra.mxu0 0.0
        %2471 = vmatpush.msra.mxu0 0.0
        %2472 = vmatpush.msra.mxu0 0.0
        %2473 = vmatpush.msra.mxu0 0.0
        %2474 = vmatpush.msra.mxu0 %v2454
        %2475 = vmatmul.f32.gmra.mxu0 %v2457
        %v2476 = vpop.f32.mrf.mxu0
        %v2477 = vadd.f32 0.0, %v2476
        %2478 = vdwg.mxu0
        %v2480 = vsel %vm1052, %v2477, 0
        %2482 = vmatpush.msra.mxu0 0.0
        %2483 = vmatpush.msra.mxu0 0.0
        %2484 = vmatpush.msra.mxu0 0.0
        %2485 = vmatpush.msra.mxu0 0.0
        %2486 = vmatpush.msra.mxu0 0.0
        %2487 = vmatpush.msra.mxu0 0.0
        %2488 = vmatpush.msra.mxu0 0.0
        %2489 = vmatpush.msra.mxu0 0.0
        %2490 = vmatpush.msra.mxu0 0.0
        %2491 = vmatpush.msra.mxu0 0.0
        %2492 = vmatpush.msra.mxu0 0.0
        %2493 = vmatpush.msra.mxu0 0.0
        %2494 = vmatpush.msra.mxu0 0.0
        %2495 = vmatpush.msra.mxu0 0.0
        %2496 = vmatpush.msra.mxu0 0.0
        %2497 = vmatpush.msra.mxu0 %v2116
        %2498 = vmatmul.f32.gmra.mxu0 %v2480
        %v2499 = vpop.f32.mrf.mxu0
        %v2500 = vadd.f32 0.0, %v2499
        %2501 = vdwg.mxu0
        %v2502 = vadd.f32 %v2452, %v2500
        %v2503 = vld [vmem:[%s35] sm:$0x1]
        %v2504 = vld [vmem:[%s37] sm:$0x1]
        %v2505 = vadd.f32 %v2502, %v2103
        %v2506 = vsel %vm1025, %v2505, 0.0
        %2507 = vadd.xlane.f32.xlu0 %v2506
        %v2508 = vpop.xlane.xlu0 %2507
        %v2509 = vmul.f32 %v2508, %v1427
        %v2510 = vsub.f32 %v2505, %v2509
        %v2511 = vmul.f32 %v2510, %v2510
        %v2512 = vsel %vm1025, %v2511, 0.0
        %2513 = vadd.xlane.f32.xlu0 %v2512
        %v2514 = vpop.xlane.xlu0 %2513
        %v2515 = vmul.f32 %v2514, %v1427
        %v2516 = vadd.f32 %v2515, 1e-05
        %v2517 = vrsqrt.pop %v2516
        %v2518 = vmul.f32 %v2517, %v2516
        %v2519 = vmul.f32 %v2518, %v2517
        %v2520 = vmul.f32 0.5, %v2519
        %v2521 = vsub.f32 1.5, %v2520
        %v2522 = vmul.f32 %v2517, %v2521
        %vm2523 = vweird.f32 %v2516
        %vm2524 = vweird.f32 %v2517
        %vm2525 = vmor %vm2523, %vm2524
        %v2526 = vsel %vm2525, %v2517, %v2522
        %v2527 = vmul.f32 %v2510, %v2526
        %v2529 = vperm.slane %v2503, 0
        %v2531 = vmul.f32 %v2527, %v2529
        %v2533 = vperm.slane %v2504, 0
        %v2535 = vadd.f32 %v2531, %v2533
        %v2536 = vld [vmem:[%s39] sm:$0xff]
        %v2537 = vld [vmem:[%s39 + $0x8] sm:$0xff]
        %v2538 = vld [vmem:[%s39 + $0x10] sm:$0xff]
        %v2539 = vld [vmem:[%s39 + $0x18] sm:$0xff]
        %v2540 = vld [vmem:[%s41] sm:$0xff]
        %v2541 = vld [vmem:[%s41 + $0x8] sm:$0xff]
        %v2542 = vld [vmem:[%s41 + $0x10] sm:$0xff]
        %v2543 = vld [vmem:[%s41 + $0x18] sm:$0xff]
        %v2544 = vld [vmem:[%s43] sm:$0x1]
        %v2546 = vsel %vm1025, %v2535, 0
        %2548 = vmatpush.msra.mxu0 0.0
        %2549 = vmatpush.msra.mxu0 0.0
        %2550 = vmatpush.msra.mxu0 0.0
        %2551 = vmatpush.msra.mxu0 0.0
        %2552 = vmatpush.msra.mxu0 0.0
        %2553 = vmatpush.msra.mxu0 0.0
        %2554 = vmatpush.msra.mxu0 0.0
        %2555 = vmatpush.msra.mxu0 0.0
        %2556 = vmatpush.msra.mxu0 0.0
        %2557 = vmatpush.msra.mxu0 0.0
        %2558 = vmatpush.msra.mxu0 0.0
        %2559 = vmatpush.msra.mxu0 0.0
        %2560 = vmatpush.msra.mxu0 %v2539
        %2561 = vmatpush.msra.mxu0 %v2538
        %2562 = vmatpush.msra.mxu0 %v2537
        %2563 = vmatpush.msra.mxu0 %v2536
        %2564 = vmatmul.f32.gmra.mxu0 %v2546
        %v2565 = vpop.f32.mrf.mxu0
        %v2566 = vadd.f32 0.0, %v2565
        %2567 = vdwg.mxu0
        %2572 = vrot.lane.b32.xlu0 %v2536, 96
        %v2573 = vpop.permute.xlu0 %2572
        %2574 = vrot.lane.b32.xlu0 %v2537, 96
        %v2575 = vpop.permute.xlu0 %2574
        %2576 = vrot.lane.b32.xlu0 %v2538, 96
        %v2577 = vpop.permute.xlu0 %2576
        %2578 = vrot.lane.b32.xlu0 %v2539, 96
        %v2579 = vpop.permute.xlu0 %2578
        %v2585 = vsel %vm1025, %v2102, 0
        %2587 = vmatpush.msra.mxu0 0.0
        %2588 = vmatpush.msra.mxu0 0.0
        %2589 = vmatpush.msra.mxu0 0.0
        %2590 = vmatpush.msra.mxu0 0.0
        %2591 = vmatpush.msra.mxu0 0.0
        %2592 = vmatpush.msra.mxu0 0.0
        %2593 = vmatpush.msra.mxu0 0.0
        %2594 = vmatpush.msra.mxu0 0.0
        %2595 = vmatpush.msra.mxu0 0.0
        %2596 = vmatpush.msra.mxu0 0.0
        %2597 = vmatpush.msra.mxu0 0.0
        %2598 = vmatpush.msra.mxu0 0.0
        %2599 = vmatpush.msra.mxu0 %v2579
        %2600 = vmatpush.msra.mxu0 %v2577
        %2601 = vmatpush.msra.mxu0 %v2575
        %2602 = vmatpush.msra.mxu0 %v2573
        %2603 = vmatmul.f32.gmra.mxu0 %v2585
        %v2604 = vpop.f32.mrf.mxu0
        %v2605 = vadd.f32 0.0, %v2604
        %2606 = vdwg.mxu0
        %v2608 = vsel %vm1052, %v2566, 0
        %v2611 = vsel %vm1052, %v2605, 0
        %2613 = vmatpush.xpose.msra.mxu0 0.0
        %2614 = vmatpush.xpose.msra.mxu0 0.0
        %2615 = vmatpush.xpose.msra.mxu0 0.0
        %2616 = vmatpush.xpose.msra.mxu0 0.0
        %2617 = vmatpush.xpose.msra.mxu0 0.0
        %2618 = vmatpush.xpose.msra.mxu0 0.0
        %2619 = vmatpush.xpose.msra.mxu0 0.0
        %2620 = vmatpush.xpose.msra.mxu0 0.0
        %2621 = vmatpush.xpose.msra.mxu0 0.0
        %2622 = vmatpush.xpose.msra.mxu0 0.0
        %2623 = vmatpush.xpose.msra.mxu0 0.0
        %2624 = vmatpush.xpose.msra.mxu0 0.0
        %2625 = vmatpush.xpose.msra.mxu0 0.0
        %2626 = vmatpush.xpose.msra.mxu0 0.0
        %2627 = vmatpush.xpose.msra.mxu0 0.0
        %2628 = vmatpush.xpose.msra.mxu0 %v2611
        %2629 = vmatmul.f32.gmra.mxu0 %v2608
        %v2630 = vpop.f32.mrf.mxu0
        %v2631 = vadd.f32 0.0, %v2630
        %2632 = vdwg.mxu0
        %2633 = vrot.lane.b32.xlu0 %v2566, 120
        %v2634 = vpop.permute.xlu0 %2633
        %2635 = vrot.lane.b32.xlu0 %v2605, 120
        %v2636 = vpop.permute.xlu0 %2635
        %v2637 = vsel %vm1052, %v2634, 0
        %v2639 = vsel %vm1052, %v2636, 0
        %2641 = vmatpush.xpose.msra.mxu0 0.0
        %2642 = vmatpush.xpose.msra.mxu0 0.0
        %2643 = vmatpush.xpose.msra.mxu0 0.0
        %2644 = vmatpush.xpose.msra.mxu0 0.0
        %2645 = vmatpush.xpose.msra.mxu0 0.0
        %2646 = vmatpush.xpose.msra.mxu0 0.0
        %2647 = vmatpush.xpose.msra.mxu0 0.0
        %2648 = vmatpush.xpose.msra.mxu0 0.0
        %2649 = vmatpush.xpose.msra.mxu0 0.0
        %2650 = vmatpush.xpose.msra.mxu0 0.0
        %2651 = vmatpush.xpose.msra.mxu0 0.0
        %2652 = vmatpush.xpose.msra.mxu0 0.0
        %2653 = vmatpush.xpose.msra.mxu0 0.0
        %2654 = vmatpush.xpose.msra.mxu0 0.0
        %2655 = vmatpush.xpose.msra.mxu0 0.0
        %2656 = vmatpush.xpose.msra.mxu0 %v2639
        %2657 = vmatmul.f32.gmra.mxu0 %v2637
        %v2658 = vpop.f32.mrf.mxu0
        %v2659 = vadd.f32 0.0, %v2658
        %2660 = vdwg.mxu0
        %2661 = vrot.lane.b32.xlu0 %v2566, 112
        %v2662 = vpop.permute.xlu0 %2661
        %2663 = vrot.lane.b32.xlu0 %v2605, 112
        %v2664 = vpop.permute.xlu0 %2663
        %v2665 = vsel %vm1052, %v2662, 0
        %v2667 = vsel %vm1052, %v2664, 0
        %2669 = vmatpush.xpose.msra.mxu0 0.0
        %2670 = vmatpush.xpose.msra.mxu0 0.0
        %2671 = vmatpush.xpose.msra.mxu0 0.0
        %2672 = vmatpush.xpose.msra.mxu0 0.0
        %2673 = vmatpush.xpose.msra.mxu0 0.0
        %2674 = vmatpush.xpose.msra.mxu0 0.0
        %2675 = vmatpush.xpose.msra.mxu0 0.0
        %2676 = vmatpush.xpose.msra.mxu0 0.0
        %2677 = vmatpush.xpose.msra.mxu0 0.0
        %2678 = vmatpush.xpose.msra.mxu0 0.0
        %2679 = vmatpush.xpose.msra.mxu0 0.0
        %2680 = vmatpush.xpose.msra.mxu0 0.0
        %2681 = vmatpush.xpose.msra.mxu0 0.0
        %2682 = vmatpush.xpose.msra.mxu0 0.0
        %2683 = vmatpush.xpose.msra.mxu0 0.0
        %2684 = vmatpush.xpose.msra.mxu0 %v2667
        %2685 = vmatmul.f32.gmra.mxu0 %v2665
        %v2686 = vpop.f32.mrf.mxu0
        %v2687 = vadd.f32 0.0, %v2686
        %2688 = vdwg.mxu0
        %2689 = vrot.lane.b32.xlu0 %v2566, 104
        %v2690 = vpop.permute.xlu0 %2689
        %2691 = vrot.lane.b32.xlu0 %v2605, 104
        %v2692 = vpop.permute.xlu0 %2691
        %v2693 = vsel %vm1052, %v2690, 0
        %v2695 = vsel %vm1052, %v2692, 0
        %2697 = vmatpush.xpose.msra.mxu0 0.0
        %2698 = vmatpush.xpose.msra.mxu0 0.0
        %2699 = vmatpush.xpose.msra.mxu0 0.0
        %2700 = vmatpush.xpose.msra.mxu0 0.0
        %2701 = vmatpush.xpose.msra.mxu0 0.0
        %2702 = vmatpush.xpose.msra.mxu0 0.0
        %2703 = vmatpush.xpose.msra.mxu0 0.0
        %2704 = vmatpush.xpose.msra.mxu0 0.0
        %2705 = vmatpush.xpose.msra.mxu0 0.0
        %2706 = vmatpush.xpose.msra.mxu0 0.0
        %2707 = vmatpush.xpose.msra.mxu0 0.0
        %2708 = vmatpush.xpose.msra.mxu0 0.0
        %2709 = vmatpush.xpose.msra.mxu0 0.0
        %2710 = vmatpush.xpose.msra.mxu0 0.0
        %2711 = vmatpush.xpose.msra.mxu0 0.0
        %2712 = vmatpush.xpose.msra.mxu0 %v2695
        %2713 = vmatmul.f32.gmra.mxu0 %v2693
        %v2714 = vpop.f32.mrf.mxu0
        %v2715 = vadd.f32 0.0, %v2714
        %2716 = vdwg.mxu0
        %v2717 = vsel %vm1163, %v2631, -1e+20
        %v2718 = vsel %vm1163, %v2659, -1e+20
        %v2719 = vsel %vm1163, %v2687, -1e+20
        %v2720 = vsel %vm1163, %v2715, -1e+20
        %v2721 = vsel %vm1052, %v2717, -inf
        %2722 = vmax.xlane.f32.xlu0 %v2721
        %v2723 = vpop.xlane.xlu0 %2722
        %v2724 = vsel %vm1052, %v2718, -inf
        %2725 = vmax.xlane.f32.xlu0 %v2724
        %v2726 = vpop.xlane.xlu0 %2725
        %v2727 = vsel %vm1052, %v2719, -inf
        %2728 = vmax.xlane.f32.xlu0 %v2727
        %v2729 = vpop.xlane.xlu0 %2728
        %v2730 = vsel %vm1052, %v2720, -inf
        %2731 = vmax.xlane.f32.xlu0 %v2730
        %v2732 = vpop.xlane.xlu0 %2731
        %v2733 = vsub.f32 %v2717, %v2723
        %v2734 = vsub.f32 %v2718, %v2726
        %v2735 = vsub.f32 %v2719, %v2729
        %v2736 = vsub.f32 %v2720, %v2732
        %v2737 = vmul.f32 %v2733, 1.442695
        %v2738 = vpow.pop %v2737
        %v2739 = vmul.f32 %v2734, 1.442695
        %v2740 = vpow.pop %v2739
        %v2741 = vmul.f32 %v2735, 1.442695
        %v2742 = vpow.pop %v2741
        %v2743 = vmul.f32 %v2736, 1.442695
        %v2744 = vpow.pop %v2743
        %v2745 = vsel %vm1052, %v2738, 0.0
        %2746 = vadd.xlane.f32.xlu0 %v2745
        %v2747 = vpop.xlane.xlu0 %2746
        %v2748 = vsel %vm1052, %v2740, 0.0
        %2749 = vadd.xlane.f32.xlu0 %v2748
        %v2750 = vpop.xlane.xlu0 %2749
        %v2751 = vsel %vm1052, %v2742, 0.0
        %2752 = vadd.xlane.f32.xlu0 %v2751
        %v2753 = vpop.xlane.xlu0 %2752
        %v2754 = vsel %vm1052, %v2744, 0.0
        %2755 = vadd.xlane.f32.xlu0 %v2754
        %v2756 = vpop.xlane.xlu0 %2755
        %v2757 = vrcp.pop %v2747
        %v2758 = vrcp.pop %v2750
        %v2759 = vrcp.pop %v2753
        %v2760 = vrcp.pop %v2756
        %v2761 = vmul.f32 %v2738, %v2757
        %v2762 = vmul.f32 %v2740, %v2758
        %v2763 = vmul.f32 %v2742, %v2759
        %v2764 = vmul.f32 %v2744, %v2760
        %2765 = vrot.lane.b32.xlu0 %v2605, 96
        %v2766 = vpop.permute.xlu0 %2765
        %v2769 = vsel %vm1052, %v2761, 0
        %2771 = vmatpush.msra.mxu0 0.0
        %2772 = vmatpush.msra.mxu0 0.0
        %2773 = vmatpush.msra.mxu0 0.0
        %2774 = vmatpush.msra.mxu0 0.0
        %2775 = vmatpush.msra.mxu0 0.0
        %2776 = vmatpush.msra.mxu0 0.0
        %2777 = vmatpush.msra.mxu0 0.0
        %2778 = vmatpush.msra.mxu0 0.0
        %2779 = vmatpush.msra.mxu0 0.0
        %2780 = vmatpush.msra.mxu0 0.0
        %2781 = vmatpush.msra.mxu0 0.0
        %2782 = vmatpush.msra.mxu0 0.0
        %2783 = vmatpush.msra.mxu0 0.0
        %2784 = vmatpush.msra.mxu0 0.0
        %2785 = vmatpush.msra.mxu0 0.0
        %2786 = vmatpush.msra.mxu0 %v2766
        %2787 = vmatmul.f32.gmra.mxu0 %v2769
        %v2788 = vpop.f32.mrf.mxu0
        %v2789 = vadd.f32 0.0, %v2788
        %2790 = vdwg.mxu0
        %v2792 = vsel %vm1052, %v2789, 0
        %2794 = vmatpush.msra.mxu0 0.0
        %2795 = vmatpush.msra.mxu0 0.0
        %2796 = vmatpush.msra.mxu0 0.0
        %2797 = vmatpush.msra.mxu0 0.0
        %2798 = vmatpush.msra.mxu0 0.0
        %2799 = vmatpush.msra.mxu0 0.0
        %2800 = vmatpush.msra.mxu0 0.0
        %2801 = vmatpush.msra.mxu0 0.0
        %2802 = vmatpush.msra.mxu0 0.0
        %2803 = vmatpush.msra.mxu0 0.0
        %2804 = vmatpush.msra.mxu0 0.0
        %2805 = vmatpush.msra.mxu0 0.0
        %2806 = vmatpush.msra.mxu0 0.0
        %2807 = vmatpush.msra.mxu0 0.0
        %2808 = vmatpush.msra.mxu0 0.0
        %2809 = vmatpush.msra.mxu0 %v2540
        %2810 = vmatmul.f32.gmra.mxu0 %v2792
        %v2811 = vpop.f32.mrf.mxu0
        %v2812 = vadd.f32 0.0, %v2811
        %2813 = vdwg.mxu0
        %v2815 = vperm.slane %v2544, 0
        %v2817 = vadd.f32 %v2815, %v2812
        %2818 = vrot.lane.b32.xlu0 %v2605, 88
        %v2819 = vpop.permute.xlu0 %2818
        %v2822 = vsel %vm1052, %v2762, 0
        %2824 = vmatpush.msra.mxu0 0.0
        %2825 = vmatpush.msra.mxu0 0.0
        %2826 = vmatpush.msra.mxu0 0.0
        %2827 = vmatpush.msra.mxu0 0.0
        %2828 = vmatpush.msra.mxu0 0.0
        %2829 = vmatpush.msra.mxu0 0.0
        %2830 = vmatpush.msra.mxu0 0.0
        %2831 = vmatpush.msra.mxu0 0.0
        %2832 = vmatpush.msra.mxu0 0.0
        %2833 = vmatpush.msra.mxu0 0.0
        %2834 = vmatpush.msra.mxu0 0.0
        %2835 = vmatpush.msra.mxu0 0.0
        %2836 = vmatpush.msra.mxu0 0.0
        %2837 = vmatpush.msra.mxu0 0.0
        %2838 = vmatpush.msra.mxu0 0.0
        %2839 = vmatpush.msra.mxu0 %v2819
        %2840 = vmatmul.f32.gmra.mxu0 %v2822
        %v2841 = vpop.f32.mrf.mxu0
        %v2842 = vadd.f32 0.0, %v2841
        %2843 = vdwg.mxu0
        %v2845 = vsel %vm1052, %v2842, 0
        %2847 = vmatpush.msra.mxu0 0.0
        %2848 = vmatpush.msra.mxu0 0.0
        %2849 = vmatpush.msra.mxu0 0.0
        %2850 = vmatpush.msra.mxu0 0.0
        %2851 = vmatpush.msra.mxu0 0.0
        %2852 = vmatpush.msra.mxu0 0.0
        %2853 = vmatpush.msra.mxu0 0.0
        %2854 = vmatpush.msra.mxu0 0.0
        %2855 = vmatpush.msra.mxu0 0.0
        %2856 = vmatpush.msra.mxu0 0.0
        %2857 = vmatpush.msra.mxu0 0.0
        %2858 = vmatpush.msra.mxu0 0.0
        %2859 = vmatpush.msra.mxu0 0.0
        %2860 = vmatpush.msra.mxu0 0.0
        %2861 = vmatpush.msra.mxu0 0.0
        %2862 = vmatpush.msra.mxu0 %v2541
        %2863 = vmatmul.f32.gmra.mxu0 %v2845
        %v2864 = vpop.f32.mrf.mxu0
        %v2865 = vadd.f32 0.0, %v2864
        %2866 = vdwg.mxu0
        %v2867 = vadd.f32 %v2817, %v2865
        %2868 = vrot.lane.b32.xlu0 %v2605, 80
        %v2869 = vpop.permute.xlu0 %2868
        %v2872 = vsel %vm1052, %v2763, 0
        %2874 = vmatpush.msra.mxu0 0.0
        %2875 = vmatpush.msra.mxu0 0.0
        %2876 = vmatpush.msra.mxu0 0.0
        %2877 = vmatpush.msra.mxu0 0.0
        %2878 = vmatpush.msra.mxu0 0.0
        %2879 = vmatpush.msra.mxu0 0.0
        %2880 = vmatpush.msra.mxu0 0.0
        %2881 = vmatpush.msra.mxu0 0.0
        %2882 = vmatpush.msra.mxu0 0.0
        %2883 = vmatpush.msra.mxu0 0.0
        %2884 = vmatpush.msra.mxu0 0.0
        %2885 = vmatpush.msra.mxu0 0.0
        %2886 = vmatpush.msra.mxu0 0.0
        %2887 = vmatpush.msra.mxu0 0.0
        %2888 = vmatpush.msra.mxu0 0.0
        %2889 = vmatpush.msra.mxu0 %v2869
        %2890 = vmatmul.f32.gmra.mxu0 %v2872
        %v2891 = vpop.f32.mrf.mxu0
        %v2892 = vadd.f32 0.0, %v2891
        %2893 = vdwg.mxu0
        %v2895 = vsel %vm1052, %v2892, 0
        %2897 = vmatpush.msra.mxu0 0.0
        %2898 = vmatpush.msra.mxu0 0.0
        %2899 = vmatpush.msra.mxu0 0.0
        %2900 = vmatpush.msra.mxu0 0.0
        %2901 = vmatpush.msra.mxu0 0.0
        %2902 = vmatpush.msra.mxu0 0.0
        %2903 = vmatpush.msra.mxu0 0.0
        %2904 = vmatpush.msra.mxu0 0.0
        %2905 = vmatpush.msra.mxu0 0.0
        %2906 = vmatpush.msra.mxu0 0.0
        %2907 = vmatpush.msra.mxu0 0.0
        %2908 = vmatpush.msra.mxu0 0.0
        %2909 = vmatpush.msra.mxu0 0.0
        %2910 = vmatpush.msra.mxu0 0.0
        %2911 = vmatpush.msra.mxu0 0.0
        %2912 = vmatpush.msra.mxu0 %v2542
        %2913 = vmatmul.f32.gmra.mxu0 %v2895
        %v2914 = vpop.f32.mrf.mxu0
        %v2915 = vadd.f32 0.0, %v2914
        %2916 = vdwg.mxu0
        %v2917 = vadd.f32 %v2867, %v2915
        %2918 = vrot.lane.b32.xlu0 %v2605, 72
        %v2919 = vpop.permute.xlu0 %2918
        %v2922 = vsel %vm1052, %v2764, 0
        %2924 = vmatpush.msra.mxu0 0.0
        %2925 = vmatpush.msra.mxu0 0.0
        %2926 = vmatpush.msra.mxu0 0.0
        %2927 = vmatpush.msra.mxu0 0.0
        %2928 = vmatpush.msra.mxu0 0.0
        %2929 = vmatpush.msra.mxu0 0.0
        %2930 = vmatpush.msra.mxu0 0.0
        %2931 = vmatpush.msra.mxu0 0.0
        %2932 = vmatpush.msra.mxu0 0.0
        %2933 = vmatpush.msra.mxu0 0.0
        %2934 = vmatpush.msra.mxu0 0.0
        %2935 = vmatpush.msra.mxu0 0.0
        %2936 = vmatpush.msra.mxu0 0.0
        %2937 = vmatpush.msra.mxu0 0.0
        %2938 = vmatpush.msra.mxu0 0.0
        %2939 = vmatpush.msra.mxu0 %v2919
        %2940 = vmatmul.f32.gmra.mxu0 %v2922
        %v2941 = vpop.f32.mrf.mxu0
        %v2942 = vadd.f32 0.0, %v2941
        %2943 = vdwg.mxu0
        %v2945 = vsel %vm1052, %v2942, 0
        %2947 = vmatpush.msra.mxu0 0.0
        %2948 = vmatpush.msra.mxu0 0.0
        %2949 = vmatpush.msra.mxu0 0.0
        %2950 = vmatpush.msra.mxu0 0.0
        %2951 = vmatpush.msra.mxu0 0.0
        %2952 = vmatpush.msra.mxu0 0.0
        %2953 = vmatpush.msra.mxu0 0.0
        %2954 = vmatpush.msra.mxu0 0.0
        %2955 = vmatpush.msra.mxu0 0.0
        %2956 = vmatpush.msra.mxu0 0.0
        %2957 = vmatpush.msra.mxu0 0.0
        %2958 = vmatpush.msra.mxu0 0.0
        %2959 = vmatpush.msra.mxu0 0.0
        %2960 = vmatpush.msra.mxu0 0.0
        %2961 = vmatpush.msra.mxu0 0.0
        %2962 = vmatpush.msra.mxu0 %v2543
        %2963 = vmatmul.f32.gmra.mxu0 %v2945
        %v2964 = vpop.f32.mrf.mxu0
        %v2965 = vadd.f32 0.0, %v2964
        %2966 = vdwg.mxu0
        %v2967 = vadd.f32 %v2917, %v2965
        %v2968 = vld [vmem:[%s45] sm:$0x1]
        %v2969 = vld [vmem:[%s47] sm:$0x1]
        %v2970 = vadd.f32 %v2967, %v2535
        %v2971 = vsel %vm1025, %v2970, 0.0
        %2972 = vadd.xlane.f32.xlu0 %v2971
        %v2973 = vpop.xlane.xlu0 %2972
        %v2974 = vmul.f32 %v2973, %v1427
        %v2975 = vsub.f32 %v2970, %v2974
        %v2976 = vmul.f32 %v2975, %v2975
        %v2977 = vsel %vm1025, %v2976, 0.0
        %2978 = vadd.xlane.f32.xlu0 %v2977
        %v2979 = vpop.xlane.xlu0 %2978
        %v2980 = vmul.f32 %v2979, %v1427
        %v2981 = vadd.f32 %v2980, 1e-05
        %v2982 = vrsqrt.pop %v2981
        %v2983 = vmul.f32 %v2982, %v2981
        %v2984 = vmul.f32 %v2983, %v2982
        %v2985 = vmul.f32 0.5, %v2984
        %v2986 = vsub.f32 1.5, %v2985
        %v2987 = vmul.f32 %v2982, %v2986
        %vm2988 = vweird.f32 %v2981
        %vm2989 = vweird.f32 %v2982
        %vm2990 = vmor %vm2988, %vm2989
        %v2991 = vsel %vm2990, %v2982, %v2987
        %v2992 = vmul.f32 %v2975, %v2991
        %v2994 = vperm.slane %v2968, 0
        %v2996 = vmul.f32 %v2992, %v2994
        %v2998 = vperm.slane %v2969, 0
        %v3000 = vadd.f32 %v2996, %v2998
        %v3001 = vld [vmem:[%s53] sm:$0xff]
        %v3002 = vld [vmem:[%s53 + $0x8] sm:$0xff]
        %v3003 = vld [vmem:[%s53 + $0x10] sm:$0xff]
        %v3004 = vld [vmem:[%s53 + $0x18] sm:$0xff]
        %v3005 = vld [vmem:[%s55] sm:$0x1]
        %v3006 = vld [vmem:[%s57] sm:$0xff]
        %v3007 = vld [vmem:[%s57 + $0x8] sm:$0xff]
        %v3008 = vld [vmem:[%s57 + $0x10] sm:$0xff]
        %v3009 = vld [vmem:[%s57 + $0x18] sm:$0xff]
        %v3010 = vld [vmem:[%s57 + $0x20] sm:$0xff]
        %v3011 = vld [vmem:[%s57 + $0x28] sm:$0xff]
        %v3012 = vld [vmem:[%s57 + $0x30] sm:$0xff]
        %v3013 = vld [vmem:[%s57 + $0x38] sm:$0xff]
        %v3014 = vld [vmem:[%s57 + $0x40] sm:$0xff]
        %v3015 = vld [vmem:[%s57 + $0x48] sm:$0xff]
        %v3016 = vld [vmem:[%s57 + $0x50] sm:$0xff]
        %v3017 = vld [vmem:[%s57 + $0x58] sm:$0xff]
        %v3018 = vld [vmem:[%s57 + $0x60] sm:$0xff]
        %v3019 = vld [vmem:[%s57 + $0x68] sm:$0xff]
        %v3020 = vld [vmem:[%s57 + $0x70] sm:$0xff]
        %v3021 = vld [vmem:[%s57 + $0x78] sm:$0xff]
        %v3022 = vld [vmem:[%s59] sm:$0x1]
        %v3024 = vperm.slane %v3005, 0
        %v3027 = vsel %vm1025, %v3000, 0
        %3029 = vmatpush.msra.mxu0 0.0
        %3030 = vmatpush.msra.mxu0 0.0
        %3031 = vmatpush.msra.mxu0 0.0
        %3032 = vmatpush.msra.mxu0 0.0
        %3033 = vmatpush.msra.mxu0 0.0
        %3034 = vmatpush.msra.mxu0 0.0
        %3035 = vmatpush.msra.mxu0 0.0
        %3036 = vmatpush.msra.mxu0 0.0
        %3037 = vmatpush.msra.mxu0 0.0
        %3038 = vmatpush.msra.mxu0 0.0
        %3039 = vmatpush.msra.mxu0 0.0
        %3040 = vmatpush.msra.mxu0 0.0
        %3041 = vmatpush.msra.mxu0 %v3004
        %3042 = vmatpush.msra.mxu0 %v3003
        %3043 = vmatpush.msra.mxu0 %v3002
        %3044 = vmatpush.msra.mxu0 %v3001
        %3045 = vmatmul.f32.gmra.mxu0 %v3027
        %v3046 = vpop.f32.mrf.mxu0
        %v3047 = vadd.f32 %v3024, %v3046
        %3048 = vdwg.mxu0
        %v3049 = vmax.f32 %v3047, 0.0
        %v3051 = vperm.slane %v3022, 0
        %3053 = vmatpush.msra.mxu0 %v3021
        %3054 = vmatpush.msra.mxu0 %v3020
        %3055 = vmatpush.msra.mxu0 %v3019
        %3056 = vmatpush.msra.mxu0 %v3018
        %3057 = vmatpush.msra.mxu0 %v3017
        %3058 = vmatpush.msra.mxu0 %v3016
        %3059 = vmatpush.msra.mxu0 %v3015
        %3060 = vmatpush.msra.mxu0 %v3014
        %3061 = vmatpush.msra.mxu0 %v3013
        %3062 = vmatpush.msra.mxu0 %v3012
        %3063 = vmatpush.msra.mxu0 %v3011
        %3064 = vmatpush.msra.mxu0 %v3010
        %3065 = vmatpush.msra.mxu0 %v3009
        %3066 = vmatpush.msra.mxu0 %v3008
        %3067 = vmatpush.msra.mxu0 %v3007
        %3068 = vmatpush.msra.mxu0 %v3006
        %3069 = vmatmul.f32.gmra.mxu0 %v3049
        %v3070 = vpop.f32.mrf.mxu0
        %v3071 = vadd.f32 %v3051, %v3070
        %3072 = vdwg.mxu0
        %v3073 = vld [vmem:[%s49] sm:$0x1]
        %v3074 = vld [vmem:[%s51] sm:$0x1]
        %v3075 = vadd.f32 %v3071, %v3000
        %v3076 = vsel %vm1025, %v3075, 0.0
        %3077 = vadd.xlane.f32.xlu0 %v3076
        %v3078 = vpop.xlane.xlu0 %3077
        %v3079 = vmul.f32 %v3078, %v1427
        %v3080 = vsub.f32 %v3075, %v3079
        %v3081 = vmul.f32 %v3080, %v3080
        %v3082 = vsel %vm1025, %v3081, 0.0
        %3083 = vadd.xlane.f32.xlu0 %v3082
        %v3084 = vpop.xlane.xlu0 %3083
        %v3085 = vmul.f32 %v3084, %v1427
        %v3086 = vadd.f32 %v3085, 1e-05
        %v3087 = vrsqrt.pop %v3086
        %v3088 = vmul.f32 %v3087, %v3086
        %v3089 = vmul.f32 %v3088, %v3087
        %v3090 = vmul.f32 0.5, %v3089
        %v3091 = vsub.f32 1.5, %v3090
        %v3092 = vmul.f32 %v3087, %v3091
        %vm3093 = vweird.f32 %v3086
        %vm3094 = vweird.f32 %v3087
        %vm3095 = vmor %vm3093, %vm3094
        %v3096 = vsel %vm3095, %v3087, %v3092
        %v3097 = vmul.f32 %v3080, %v3096
        %v3099 = vperm.slane %v3073, 0
        %v3101 = vmul.f32 %v3097, %v3099
        %v3103 = vperm.slane %v3074, 0
        %v3105 = vadd.f32 %v3101, %v3103
        %s3106 = scalar_lea.vmem %s29, 32
        %v3107 = vld [vmem:[%s3106] sm:$0xff]
        %v3108 = vld [vmem:[%s3106 + $0x8] sm:$0xff]
        %v3109 = vld [vmem:[%s3106 + $0x10] sm:$0xff]
        %v3110 = vld [vmem:[%s3106 + $0x18] sm:$0xff]
        %s3111 = scalar_lea.vmem %s31, 32
        %v3112 = vld [vmem:[%s3111] sm:$0xff]
        %v3113 = vld [vmem:[%s3111 + $0x8] sm:$0xff]
        %v3114 = vld [vmem:[%s3111 + $0x10] sm:$0xff]
        %v3115 = vld [vmem:[%s3111 + $0x18] sm:$0xff]
        %s3116 = scalar_lea.vmem %s33, 1
        %v3117 = vld [vmem:[%s3116] sm:$0x1]
        %v3119 = vsel %vm1025, %v3105, 0
        %3121 = vmatpush.msra.mxu0 0.0
        %3122 = vmatpush.msra.mxu0 0.0
        %3123 = vmatpush.msra.mxu0 0.0
        %3124 = vmatpush.msra.mxu0 0.0
        %3125 = vmatpush.msra.mxu0 0.0
        %3126 = vmatpush.msra.mxu0 0.0
        %3127 = vmatpush.msra.mxu0 0.0
        %3128 = vmatpush.msra.mxu0 0.0
        %3129 = vmatpush.msra.mxu0 0.0
        %3130 = vmatpush.msra.mxu0 0.0
        %3131 = vmatpush.msra.mxu0 0.0
        %3132 = vmatpush.msra.mxu0 0.0
        %3133 = vmatpush.msra.mxu0 %v3110
        %3134 = vmatpush.msra.mxu0 %v3109
        %3135 = vmatpush.msra.mxu0 %v3108
        %3136 = vmatpush.msra.mxu0 %v3107
        %3137 = vmatmul.f32.gmra.mxu0 %v3119
        %v3138 = vpop.f32.mrf.mxu0
        %v3139 = vadd.f32 0.0, %v3138
        %3140 = vdwg.mxu0
        %3142 = vrot.lane.b32.xlu0 %v3139, 96
        %v3143 = vpop.permute.xlu0 %3142
        %v3144 = vsel %vm1052, %v3139, 0
        %v3146 = vsel %vm1052, %v3143, 0
        %3148 = vmatpush.xpose.msra.mxu0 0.0
        %3149 = vmatpush.xpose.msra.mxu0 0.0
        %3150 = vmatpush.xpose.msra.mxu0 0.0
        %3151 = vmatpush.xpose.msra.mxu0 0.0
        %3152 = vmatpush.xpose.msra.mxu0 0.0
        %3153 = vmatpush.xpose.msra.mxu0 0.0
        %3154 = vmatpush.xpose.msra.mxu0 0.0
        %3155 = vmatpush.xpose.msra.mxu0 0.0
        %3156 = vmatpush.xpose.msra.mxu0 0.0
        %3157 = vmatpush.xpose.msra.mxu0 0.0
        %3158 = vmatpush.xpose.msra.mxu0 0.0
        %3159 = vmatpush.xpose.msra.mxu0 0.0
        %3160 = vmatpush.xpose.msra.mxu0 0.0
        %3161 = vmatpush.xpose.msra.mxu0 0.0
        %3162 = vmatpush.xpose.msra.mxu0 0.0
        %3163 = vmatpush.xpose.msra.mxu0 %v3146
        %3164 = vmatmul.f32.gmra.mxu0 %v3144
        %v3165 = vpop.f32.mrf.mxu0
        %v3166 = vadd.f32 0.0, %v3165
        %3167 = vdwg.mxu0
        %3168 = vrot.lane.b32.xlu0 %v3139, 120
        %v3169 = vpop.permute.xlu0 %3168
        %3170 = vrot.lane.b32.xlu0 %v3139, 88
        %v3171 = vpop.permute.xlu0 %3170
        %v3172 = vsel %vm1052, %v3169, 0
        %v3174 = vsel %vm1052, %v3171, 0
        %3176 = vmatpush.xpose.msra.mxu0 0.0
        %3177 = vmatpush.xpose.msra.mxu0 0.0
        %3178 = vmatpush.xpose.msra.mxu0 0.0
        %3179 = vmatpush.xpose.msra.mxu0 0.0
        %3180 = vmatpush.xpose.msra.mxu0 0.0
        %3181 = vmatpush.xpose.msra.mxu0 0.0
        %3182 = vmatpush.xpose.msra.mxu0 0.0
        %3183 = vmatpush.xpose.msra.mxu0 0.0
        %3184 = vmatpush.xpose.msra.mxu0 0.0
        %3185 = vmatpush.xpose.msra.mxu0 0.0
        %3186 = vmatpush.xpose.msra.mxu0 0.0
        %3187 = vmatpush.xpose.msra.mxu0 0.0
        %3188 = vmatpush.xpose.msra.mxu0 0.0
        %3189 = vmatpush.xpose.msra.mxu0 0.0
        %3190 = vmatpush.xpose.msra.mxu0 0.0
        %3191 = vmatpush.xpose.msra.mxu0 %v3174
        %3192 = vmatmul.f32.gmra.mxu0 %v3172
        %v3193 = vpop.f32.mrf.mxu0
        %v3194 = vadd.f32 0.0, %v3193
        %3195 = vdwg.mxu0
        %3196 = vrot.lane.b32.xlu0 %v3139, 112
        %v3197 = vpop.permute.xlu0 %3196
        %3198 = vrot.lane.b32.xlu0 %v3139, 80
        %v3199 = vpop.permute.xlu0 %3198
        %v3200 = vsel %vm1052, %v3197, 0
        %v3202 = vsel %vm1052, %v3199, 0
        %3204 = vmatpush.xpose.msra.mxu0 0.0
        %3205 = vmatpush.xpose.msra.mxu0 0.0
        %3206 = vmatpush.xpose.msra.mxu0 0.0
        %3207 = vmatpush.xpose.msra.mxu0 0.0
        %3208 = vmatpush.xpose.msra.mxu0 0.0
        %3209 = vmatpush.xpose.msra.mxu0 0.0
        %3210 = vmatpush.xpose.msra.mxu0 0.0
        %3211 = vmatpush.xpose.msra.mxu0 0.0
        %3212 = vmatpush.xpose.msra.mxu0 0.0
        %3213 = vmatpush.xpose.msra.mxu0 0.0
        %3214 = vmatpush.xpose.msra.mxu0 0.0
        %3215 = vmatpush.xpose.msra.mxu0 0.0
        %3216 = vmatpush.xpose.msra.mxu0 0.0
        %3217 = vmatpush.xpose.msra.mxu0 0.0
        %3218 = vmatpush.xpose.msra.mxu0 0.0
        %3219 = vmatpush.xpose.msra.mxu0 %v3202
        %3220 = vmatmul.f32.gmra.mxu0 %v3200
        %v3221 = vpop.f32.mrf.mxu0
        %v3222 = vadd.f32 0.0, %v3221
        %3223 = vdwg.mxu0
        %3224 = vrot.lane.b32.xlu0 %v3139, 104
        %v3225 = vpop.permute.xlu0 %3224
        %3226 = vrot.lane.b32.xlu0 %v3139, 72
        %v3227 = vpop.permute.xlu0 %3226
        %v3228 = vsel %vm1052, %v3225, 0
        %v3230 = vsel %vm1052, %v3227, 0
        %3232 = vmatpush.xpose.msra.mxu0 0.0
        %3233 = vmatpush.xpose.msra.mxu0 0.0
        %3234 = vmatpush.xpose.msra.mxu0 0.0
        %3235 = vmatpush.xpose.msra.mxu0 0.0
        %3236 = vmatpush.xpose.msra.mxu0 0.0
        %3237 = vmatpush.xpose.msra.mxu0 0.0
        %3238 = vmatpush.xpose.msra.mxu0 0.0
        %3239 = vmatpush.xpose.msra.mxu0 0.0
        %3240 = vmatpush.xpose.msra.mxu0 0.0
        %3241 = vmatpush.xpose.msra.mxu0 0.0
        %3242 = vmatpush.xpose.msra.mxu0 0.0
        %3243 = vmatpush.xpose.msra.mxu0 0.0
        %3244 = vmatpush.xpose.msra.mxu0 0.0
        %3245 = vmatpush.xpose.msra.mxu0 0.0
        %3246 = vmatpush.xpose.msra.mxu0 0.0
        %3247 = vmatpush.xpose.msra.mxu0 %v3230
        %3248 = vmatmul.f32.gmra.mxu0 %v3228
        %v3249 = vpop.f32.mrf.mxu0
        %v3250 = vadd.f32 0.0, %v3249
        %3251 = vdwg.mxu0
        %v3252 = vsel %vm2108, %v3166, -1e+20
        %v3253 = vsel %vm2108, %v3194, -1e+20
        %v3254 = vsel %vm2108, %v3222, -1e+20
        %v3255 = vsel %vm2108, %v3250, -1e+20
        %v3256 = vsel %vm1052, %v3252, -inf
        %3257 = vmax.xlane.f32.xlu0 %v3256
        %v3258 = vpop.xlane.xlu0 %3257
        %v3259 = vsel %vm1052, %v3253, -inf
        %3260 = vmax.xlane.f32.xlu0 %v3259
        %v3261 = vpop.xlane.xlu0 %3260
        %v3262 = vsel %vm1052, %v3254, -inf
        %3263 = vmax.xlane.f32.xlu0 %v3262
        %v3264 = vpop.xlane.xlu0 %3263
        %v3265 = vsel %vm1052, %v3255, -inf
        %3266 = vmax.xlane.f32.xlu0 %v3265
        %v3267 = vpop.xlane.xlu0 %3266
        %v3268 = vsub.f32 %v3252, %v3258
        %v3269 = vsub.f32 %v3253, %v3261
        %v3270 = vsub.f32 %v3254, %v3264
        %v3271 = vsub.f32 %v3255, %v3267
        %v3272 = vmul.f32 %v3268, 1.442695
        %v3273 = vpow.pop %v3272
        %v3274 = vmul.f32 %v3269, 1.442695
        %v3275 = vpow.pop %v3274
        %v3276 = vmul.f32 %v3270, 1.442695
        %v3277 = vpow.pop %v3276
        %v3278 = vmul.f32 %v3271, 1.442695
        %v3279 = vpow.pop %v3278
        %v3280 = vsel %vm1052, %v3273, 0.0
        %3281 = vadd.xlane.f32.xlu0 %v3280
        %v3282 = vpop.xlane.xlu0 %3281
        %v3283 = vsel %vm1052, %v3275, 0.0
        %3284 = vadd.xlane.f32.xlu0 %v3283
        %v3285 = vpop.xlane.xlu0 %3284
        %v3286 = vsel %vm1052, %v3277, 0.0
        %3287 = vadd.xlane.f32.xlu0 %v3286
        %v3288 = vpop.xlane.xlu0 %3287
        %v3289 = vsel %vm1052, %v3279, 0.0
        %3290 = vadd.xlane.f32.xlu0 %v3289
        %v3291 = vpop.xlane.xlu0 %3290
        %v3292 = vrcp.pop %v3282
        %v3293 = vrcp.pop %v3285
        %v3294 = vrcp.pop %v3288
        %v3295 = vrcp.pop %v3291
        %v3296 = vmul.f32 %v3273, %v3292
        %v3297 = vmul.f32 %v3275, %v3293
        %v3298 = vmul.f32 %v3277, %v3294
        %v3299 = vmul.f32 %v3279, %v3295
        %3300 = vrot.lane.b32.xlu0 %v3139, 64
        %v3301 = vpop.permute.xlu0 %3300
        %v3304 = vsel %vm1052, %v3296, 0
        %3306 = vmatpush.msra.mxu0 0.0
        %3307 = vmatpush.msra.mxu0 0.0
        %3308 = vmatpush.msra.mxu0 0.0
        %3309 = vmatpush.msra.mxu0 0.0
        %3310 = vmatpush.msra.mxu0 0.0
        %3311 = vmatpush.msra.mxu0 0.0
        %3312 = vmatpush.msra.mxu0 0.0
        %3313 = vmatpush.msra.mxu0 0.0
        %3314 = vmatpush.msra.mxu0 0.0
        %3315 = vmatpush.msra.mxu0 0.0
        %3316 = vmatpush.msra.mxu0 0.0
        %3317 = vmatpush.msra.mxu0 0.0
        %3318 = vmatpush.msra.mxu0 0.0
        %3319 = vmatpush.msra.mxu0 0.0
        %3320 = vmatpush.msra.mxu0 0.0
        %3321 = vmatpush.msra.mxu0 %v3301
        %3322 = vmatmul.f32.gmra.mxu0 %v3304
        %v3323 = vpop.f32.mrf.mxu0
        %v3324 = vadd.f32 0.0, %v3323
        %3325 = vdwg.mxu0
        %v3327 = vsel %vm1052, %v3324, 0
        %3329 = vmatpush.msra.mxu0 0.0
        %3330 = vmatpush.msra.mxu0 0.0
        %3331 = vmatpush.msra.mxu0 0.0
        %3332 = vmatpush.msra.mxu0 0.0
        %3333 = vmatpush.msra.mxu0 0.0
        %3334 = vmatpush.msra.mxu0 0.0
        %3335 = vmatpush.msra.mxu0 0.0
        %3336 = vmatpush.msra.mxu0 0.0
        %3337 = vmatpush.msra.mxu0 0.0
        %3338 = vmatpush.msra.mxu0 0.0
        %3339 = vmatpush.msra.mxu0 0.0
        %3340 = vmatpush.msra.mxu0 0.0
        %3341 = vmatpush.msra.mxu0 0.0
        %3342 = vmatpush.msra.mxu0 0.0
        %3343 = vmatpush.msra.mxu0 0.0
        %3344 = vmatpush.msra.mxu0 %v3112
        %3345 = vmatmul.f32.gmra.mxu0 %v3327
        %v3346 = vpop.f32.mrf.mxu0
        %v3347 = vadd.f32 0.0, %v3346
        %3348 = vdwg.mxu0
        %v3350 = vperm.slane %v3117, 0
        %v3352 = vadd.f32 %v3350, %v3347
        %3353 = vrot.lane.b32.xlu0 %v3139, 56
        %v3354 = vpop.permute.xlu0 %3353
        %v3357 = vsel %vm1052, %v3297, 0
        %3359 = vmatpush.msra.mxu0 0.0
        %3360 = vmatpush.msra.mxu0 0.0
        %3361 = vmatpush.msra.mxu0 0.0
        %3362 = vmatpush.msra.mxu0 0.0
        %3363 = vmatpush.msra.mxu0 0.0
        %3364 = vmatpush.msra.mxu0 0.0
        %3365 = vmatpush.msra.mxu0 0.0
        %3366 = vmatpush.msra.mxu0 0.0
        %3367 = vmatpush.msra.mxu0 0.0
        %3368 = vmatpush.msra.mxu0 0.0
        %3369 = vmatpush.msra.mxu0 0.0
        %3370 = vmatpush.msra.mxu0 0.0
        %3371 = vmatpush.msra.mxu0 0.0
        %3372 = vmatpush.msra.mxu0 0.0
        %3373 = vmatpush.msra.mxu0 0.0
        %3374 = vmatpush.msra.mxu0 %v3354
        %3375 = vmatmul.f32.gmra.mxu0 %v3357
        %v3376 = vpop.f32.mrf.mxu0
        %v3377 = vadd.f32 0.0, %v3376
        %3378 = vdwg.mxu0
        %v3380 = vsel %vm1052, %v3377, 0
        %3382 = vmatpush.msra.mxu0 0.0
        %3383 = vmatpush.msra.mxu0 0.0
        %3384 = vmatpush.msra.mxu0 0.0
        %3385 = vmatpush.msra.mxu0 0.0
        %3386 = vmatpush.msra.mxu0 0.0
        %3387 = vmatpush.msra.mxu0 0.0
        %3388 = vmatpush.msra.mxu0 0.0
        %3389 = vmatpush.msra.mxu0 0.0
        %3390 = vmatpush.msra.mxu0 0.0
        %3391 = vmatpush.msra.mxu0 0.0
        %3392 = vmatpush.msra.mxu0 0.0
        %3393 = vmatpush.msra.mxu0 0.0
        %3394 = vmatpush.msra.mxu0 0.0
        %3395 = vmatpush.msra.mxu0 0.0
        %3396 = vmatpush.msra.mxu0 0.0
        %3397 = vmatpush.msra.mxu0 %v3113
        %3398 = vmatmul.f32.gmra.mxu0 %v3380
        %v3399 = vpop.f32.mrf.mxu0
        %v3400 = vadd.f32 0.0, %v3399
        %3401 = vdwg.mxu0
        %v3402 = vadd.f32 %v3352, %v3400
        %3403 = vrot.lane.b32.xlu0 %v3139, 48
        %v3404 = vpop.permute.xlu0 %3403
        %v3407 = vsel %vm1052, %v3298, 0
        %3409 = vmatpush.msra.mxu0 0.0
        %3410 = vmatpush.msra.mxu0 0.0
        %3411 = vmatpush.msra.mxu0 0.0
        %3412 = vmatpush.msra.mxu0 0.0
        %3413 = vmatpush.msra.mxu0 0.0
        %3414 = vmatpush.msra.mxu0 0.0
        %3415 = vmatpush.msra.mxu0 0.0
        %3416 = vmatpush.msra.mxu0 0.0
        %3417 = vmatpush.msra.mxu0 0.0
        %3418 = vmatpush.msra.mxu0 0.0
        %3419 = vmatpush.msra.mxu0 0.0
        %3420 = vmatpush.msra.mxu0 0.0
        %3421 = vmatpush.msra.mxu0 0.0
        %3422 = vmatpush.msra.mxu0 0.0
        %3423 = vmatpush.msra.mxu0 0.0
        %3424 = vmatpush.msra.mxu0 %v3404
        %3425 = vmatmul.f32.gmra.mxu0 %v3407
        %v3426 = vpop.f32.mrf.mxu0
        %v3427 = vadd.f32 0.0, %v3426
        %3428 = vdwg.mxu0
        %v3430 = vsel %vm1052, %v3427, 0
        %3432 = vmatpush.msra.mxu0 0.0
        %3433 = vmatpush.msra.mxu0 0.0
        %3434 = vmatpush.msra.mxu0 0.0
        %3435 = vmatpush.msra.mxu0 0.0
        %3436 = vmatpush.msra.mxu0 0.0
        %3437 = vmatpush.msra.mxu0 0.0
        %3438 = vmatpush.msra.mxu0 0.0
        %3439 = vmatpush.msra.mxu0 0.0
        %3440 = vmatpush.msra.mxu0 0.0
        %3441 = vmatpush.msra.mxu0 0.0
        %3442 = vmatpush.msra.mxu0 0.0
        %3443 = vmatpush.msra.mxu0 0.0
        %3444 = vmatpush.msra.mxu0 0.0
        %3445 = vmatpush.msra.mxu0 0.0
        %3446 = vmatpush.msra.mxu0 0.0
        %3447 = vmatpush.msra.mxu0 %v3114
        %3448 = vmatmul.f32.gmra.mxu0 %v3430
        %v3449 = vpop.f32.mrf.mxu0
        %v3450 = vadd.f32 0.0, %v3449
        %3451 = vdwg.mxu0
        %v3452 = vadd.f32 %v3402, %v3450
        %3453 = vrot.lane.b32.xlu0 %v3139, 40
        %v3454 = vpop.permute.xlu0 %3453
        %v3457 = vsel %vm1052, %v3299, 0
        %3459 = vmatpush.msra.mxu0 0.0
        %3460 = vmatpush.msra.mxu0 0.0
        %3461 = vmatpush.msra.mxu0 0.0
        %3462 = vmatpush.msra.mxu0 0.0
        %3463 = vmatpush.msra.mxu0 0.0
        %3464 = vmatpush.msra.mxu0 0.0
        %3465 = vmatpush.msra.mxu0 0.0
        %3466 = vmatpush.msra.mxu0 0.0
        %3467 = vmatpush.msra.mxu0 0.0
        %3468 = vmatpush.msra.mxu0 0.0
        %3469 = vmatpush.msra.mxu0 0.0
        %3470 = vmatpush.msra.mxu0 0.0
        %3471 = vmatpush.msra.mxu0 0.0
        %3472 = vmatpush.msra.mxu0 0.0
        %3473 = vmatpush.msra.mxu0 0.0
        %3474 = vmatpush.msra.mxu0 %v3454
        %3475 = vmatmul.f32.gmra.mxu0 %v3457
        %v3476 = vpop.f32.mrf.mxu0
        %v3477 = vadd.f32 0.0, %v3476
        %3478 = vdwg.mxu0
        %v3480 = vsel %vm1052, %v3477, 0
        %3482 = vmatpush.msra.mxu0 0.0
        %3483 = vmatpush.msra.mxu0 0.0
        %3484 = vmatpush.msra.mxu0 0.0
        %3485 = vmatpush.msra.mxu0 0.0
        %3486 = vmatpush.msra.mxu0 0.0
        %3487 = vmatpush.msra.mxu0 0.0
        %3488 = vmatpush.msra.mxu0 0.0
        %3489 = vmatpush.msra.mxu0 0.0
        %3490 = vmatpush.msra.mxu0 0.0
        %3491 = vmatpush.msra.mxu0 0.0
        %3492 = vmatpush.msra.mxu0 0.0
        %3493 = vmatpush.msra.mxu0 0.0
        %3494 = vmatpush.msra.mxu0 0.0
        %3495 = vmatpush.msra.mxu0 0.0
        %3496 = vmatpush.msra.mxu0 0.0
        %3497 = vmatpush.msra.mxu0 %v3115
        %3498 = vmatmul.f32.gmra.mxu0 %v3480
        %v3499 = vpop.f32.mrf.mxu0
        %v3500 = vadd.f32 0.0, %v3499
        %3501 = vdwg.mxu0
        %v3502 = vadd.f32 %v3452, %v3500
        %s3503 = scalar_lea.vmem %s35, 1
        %v3504 = vld [vmem:[%s3503] sm:$0x1]
        %s3505 = scalar_lea.vmem %s37, 1
        %v3506 = vld [vmem:[%s3505] sm:$0x1]
        %v3507 = vadd.f32 %v3502, %v3105
        %v3508 = vsel %vm1025, %v3507, 0.0
        %3509 = vadd.xlane.f32.xlu0 %v3508
        %v3510 = vpop.xlane.xlu0 %3509
        %v3511 = vmul.f32 %v3510, %v1427
        %v3512 = vsub.f32 %v3507, %v3511
        %v3513 = vmul.f32 %v3512, %v3512
        %v3514 = vsel %vm1025, %v3513, 0.0
        %3515 = vadd.xlane.f32.xlu0 %v3514
        %v3516 = vpop.xlane.xlu0 %3515
        %v3517 = vmul.f32 %v3516, %v1427
        %v3518 = vadd.f32 %v3517, 1e-05
        %v3519 = vrsqrt.pop %v3518
        %v3520 = vmul.f32 %v3519, %v3518
        %v3521 = vmul.f32 %v3520, %v3519
        %v3522 = vmul.f32 0.5, %v3521
        %v3523 = vsub.f32 1.5, %v3522
        %v3524 = vmul.f32 %v3519, %v3523
        %vm3525 = vweird.f32 %v3518
        %vm3526 = vweird.f32 %v3519
        %vm3527 = vmor %vm3525, %vm3526
        %v3528 = vsel %vm3527, %v3519, %v3524
        %v3529 = vmul.f32 %v3512, %v3528
        %v3531 = vperm.slane %v3504, 0
        %v3533 = vmul.f32 %v3529, %v3531
        %v3535 = vperm.slane %v3506, 0
        %v3537 = vadd.f32 %v3533, %v3535
        %s3538 = scalar_lea.vmem %s39, 32
        %v3539 = vld [vmem:[%s3538] sm:$0xff]
        %v3540 = vld [vmem:[%s3538 + $0x8] sm:$0xff]
        %v3541 = vld [vmem:[%s3538 + $0x10] sm:$0xff]
        %v3542 = vld [vmem:[%s3538 + $0x18] sm:$0xff]
        %s3543 = scalar_lea.vmem %s41, 32
        %v3544 = vld [vmem:[%s3543] sm:$0xff]
        %v3545 = vld [vmem:[%s3543 + $0x8] sm:$0xff]
        %v3546 = vld [vmem:[%s3543 + $0x10] sm:$0xff]
        %v3547 = vld [vmem:[%s3543 + $0x18] sm:$0xff]
        %s3548 = scalar_lea.vmem %s43, 1
        %v3549 = vld [vmem:[%s3548] sm:$0x1]
        %v3551 = vsel %vm1025, %v3537, 0
        %3553 = vmatpush.msra.mxu0 0.0
        %3554 = vmatpush.msra.mxu0 0.0
        %3555 = vmatpush.msra.mxu0 0.0
        %3556 = vmatpush.msra.mxu0 0.0
        %3557 = vmatpush.msra.mxu0 0.0
        %3558 = vmatpush.msra.mxu0 0.0
        %3559 = vmatpush.msra.mxu0 0.0
        %3560 = vmatpush.msra.mxu0 0.0
        %3561 = vmatpush.msra.mxu0 0.0
        %3562 = vmatpush.msra.mxu0 0.0
        %3563 = vmatpush.msra.mxu0 0.0
        %3564 = vmatpush.msra.mxu0 0.0
        %3565 = vmatpush.msra.mxu0 %v3542
        %3566 = vmatpush.msra.mxu0 %v3541
        %3567 = vmatpush.msra.mxu0 %v3540
        %3568 = vmatpush.msra.mxu0 %v3539
        %3569 = vmatmul.f32.gmra.mxu0 %v3551
        %v3570 = vpop.f32.mrf.mxu0
        %v3571 = vadd.f32 0.0, %v3570
        %3572 = vdwg.mxu0
        %3577 = vrot.lane.b32.xlu0 %v3539, 96
        %v3578 = vpop.permute.xlu0 %3577
        %3579 = vrot.lane.b32.xlu0 %v3540, 96
        %v3580 = vpop.permute.xlu0 %3579
        %3581 = vrot.lane.b32.xlu0 %v3541, 96
        %v3582 = vpop.permute.xlu0 %3581
        %3583 = vrot.lane.b32.xlu0 %v3542, 96
        %v3584 = vpop.permute.xlu0 %3583
        %3589 = vmatpush.msra.mxu0 0.0
        %3590 = vmatpush.msra.mxu0 0.0
        %3591 = vmatpush.msra.mxu0 0.0
        %3592 = vmatpush.msra.mxu0 0.0
        %3593 = vmatpush.msra.mxu0 0.0
        %3594 = vmatpush.msra.mxu0 0.0
        %3595 = vmatpush.msra.mxu0 0.0
        %3596 = vmatpush.msra.mxu0 0.0
        %3597 = vmatpush.msra.mxu0 0.0
        %3598 = vmatpush.msra.mxu0 0.0
        %3599 = vmatpush.msra.mxu0 0.0
        %3600 = vmatpush.msra.mxu0 0.0
        %3601 = vmatpush.msra.mxu0 %v3584
        %3602 = vmatpush.msra.mxu0 %v3582
        %3603 = vmatpush.msra.mxu0 %v3580
        %3604 = vmatpush.msra.mxu0 %v3578
        %3605 = vmatmul.f32.gmra.mxu0 %v2585
        %v3606 = vpop.f32.mrf.mxu0
        %v3607 = vadd.f32 0.0, %v3606
        %3608 = vdwg.mxu0
        %v3610 = vsel %vm1052, %v3571, 0
        %v3613 = vsel %vm1052, %v3607, 0
        %3615 = vmatpush.xpose.msra.mxu0 0.0
        %3616 = vmatpush.xpose.msra.mxu0 0.0
        %3617 = vmatpush.xpose.msra.mxu0 0.0
        %3618 = vmatpush.xpose.msra.mxu0 0.0
        %3619 = vmatpush.xpose.msra.mxu0 0.0
        %3620 = vmatpush.xpose.msra.mxu0 0.0
        %3621 = vmatpush.xpose.msra.mxu0 0.0
        %3622 = vmatpush.xpose.msra.mxu0 0.0
        %3623 = vmatpush.xpose.msra.mxu0 0.0
        %3624 = vmatpush.xpose.msra.mxu0 0.0
        %3625 = vmatpush.xpose.msra.mxu0 0.0
        %3626 = vmatpush.xpose.msra.mxu0 0.0
        %3627 = vmatpush.xpose.msra.mxu0 0.0
        %3628 = vmatpush.xpose.msra.mxu0 0.0
        %3629 = vmatpush.xpose.msra.mxu0 0.0
        %3630 = vmatpush.xpose.msra.mxu0 %v3613
        %3631 = vmatmul.f32.gmra.mxu0 %v3610
        %v3632 = vpop.f32.mrf.mxu0
        %v3633 = vadd.f32 0.0, %v3632
        %3634 = vdwg.mxu0
        %3635 = vrot.lane.b32.xlu0 %v3571, 120
        %v3636 = vpop.permute.xlu0 %3635
        %3637 = vrot.lane.b32.xlu0 %v3607, 120
        %v3638 = vpop.permute.xlu0 %3637
        %v3639 = vsel %vm1052, %v3636, 0
        %v3641 = vsel %vm1052, %v3638, 0
        %3643 = vmatpush.xpose.msra.mxu0 0.0
        %3644 = vmatpush.xpose.msra.mxu0 0.0
        %3645 = vmatpush.xpose.msra.mxu0 0.0
        %3646 = vmatpush.xpose.msra.mxu0 0.0
        %3647 = vmatpush.xpose.msra.mxu0 0.0
        %3648 = vmatpush.xpose.msra.mxu0 0.0
        %3649 = vmatpush.xpose.msra.mxu0 0.0
        %3650 = vmatpush.xpose.msra.mxu0 0.0
        %3651 = vmatpush.xpose.msra.mxu0 0.0
        %3652 = vmatpush.xpose.msra.mxu0 0.0
        %3653 = vmatpush.xpose.msra.mxu0 0.0
        %3654 = vmatpush.xpose.msra.mxu0 0.0
        %3655 = vmatpush.xpose.msra.mxu0 0.0
        %3656 = vmatpush.xpose.msra.mxu0 0.0
        %3657 = vmatpush.xpose.msra.mxu0 0.0
        %3658 = vmatpush.xpose.msra.mxu0 %v3641
        %3659 = vmatmul.f32.gmra.mxu0 %v3639
        %v3660 = vpop.f32.mrf.mxu0
        %v3661 = vadd.f32 0.0, %v3660
        %3662 = vdwg.mxu0
        %3663 = vrot.lane.b32.xlu0 %v3571, 112
        %v3664 = vpop.permute.xlu0 %3663
        %3665 = vrot.lane.b32.xlu0 %v3607, 112
        %v3666 = vpop.permute.xlu0 %3665
        %v3667 = vsel %vm1052, %v3664, 0
        %v3669 = vsel %vm1052, %v3666, 0
        %3671 = vmatpush.xpose.msra.mxu0 0.0
        %3672 = vmatpush.xpose.msra.mxu0 0.0
        %3673 = vmatpush.xpose.msra.mxu0 0.0
        %3674 = vmatpush.xpose.msra.mxu0 0.0
        %3675 = vmatpush.xpose.msra.mxu0 0.0
        %3676 = vmatpush.xpose.msra.mxu0 0.0
        %3677 = vmatpush.xpose.msra.mxu0 0.0
        %3678 = vmatpush.xpose.msra.mxu0 0.0
        %3679 = vmatpush.xpose.msra.mxu0 0.0
        %3680 = vmatpush.xpose.msra.mxu0 0.0
        %3681 = vmatpush.xpose.msra.mxu0 0.0
        %3682 = vmatpush.xpose.msra.mxu0 0.0
        %3683 = vmatpush.xpose.msra.mxu0 0.0
        %3684 = vmatpush.xpose.msra.mxu0 0.0
        %3685 = vmatpush.xpose.msra.mxu0 0.0
        %3686 = vmatpush.xpose.msra.mxu0 %v3669
        %3687 = vmatmul.f32.gmra.mxu0 %v3667
        %v3688 = vpop.f32.mrf.mxu0
        %v3689 = vadd.f32 0.0, %v3688
        %3690 = vdwg.mxu0
        %3691 = vrot.lane.b32.xlu0 %v3571, 104
        %v3692 = vpop.permute.xlu0 %3691
        %3693 = vrot.lane.b32.xlu0 %v3607, 104
        %v3694 = vpop.permute.xlu0 %3693
        %v3695 = vsel %vm1052, %v3692, 0
        %v3697 = vsel %vm1052, %v3694, 0
        %3699 = vmatpush.xpose.msra.mxu0 0.0
        %3700 = vmatpush.xpose.msra.mxu0 0.0
        %3701 = vmatpush.xpose.msra.mxu0 0.0
        %3702 = vmatpush.xpose.msra.mxu0 0.0
        %3703 = vmatpush.xpose.msra.mxu0 0.0
        %3704 = vmatpush.xpose.msra.mxu0 0.0
        %3705 = vmatpush.xpose.msra.mxu0 0.0
        %3706 = vmatpush.xpose.msra.mxu0 0.0
        %3707 = vmatpush.xpose.msra.mxu0 0.0
        %3708 = vmatpush.xpose.msra.mxu0 0.0
        %3709 = vmatpush.xpose.msra.mxu0 0.0
        %3710 = vmatpush.xpose.msra.mxu0 0.0
        %3711 = vmatpush.xpose.msra.mxu0 0.0
        %3712 = vmatpush.xpose.msra.mxu0 0.0
        %3713 = vmatpush.xpose.msra.mxu0 0.0
        %3714 = vmatpush.xpose.msra.mxu0 %v3697
        %3715 = vmatmul.f32.gmra.mxu0 %v3695
        %v3716 = vpop.f32.mrf.mxu0
        %v3717 = vadd.f32 0.0, %v3716
        %3718 = vdwg.mxu0
        %v3719 = vsel %vm1163, %v3633, -1e+20
        %v3720 = vsel %vm1163, %v3661, -1e+20
        %v3721 = vsel %vm1163, %v3689, -1e+20
        %v3722 = vsel %vm1163, %v3717, -1e+20
        %v3723 = vsel %vm1052, %v3719, -inf
        %3724 = vmax.xlane.f32.xlu0 %v3723
        %v3725 = vpop.xlane.xlu0 %3724
        %v3726 = vsel %vm1052, %v3720, -inf
        %3727 = vmax.xlane.f32.xlu0 %v3726
        %v3728 = vpop.xlane.xlu0 %3727
        %v3729 = vsel %vm1052, %v3721, -inf
        %3730 = vmax.xlane.f32.xlu0 %v3729
        %v3731 = vpop.xlane.xlu0 %3730
        %v3732 = vsel %vm1052, %v3722, -inf
        %3733 = vmax.xlane.f32.xlu0 %v3732
        %v3734 = vpop.xlane.xlu0 %3733
        %v3735 = vsub.f32 %v3719, %v3725
        %v3736 = vsub.f32 %v3720, %v3728
        %v3737 = vsub.f32 %v3721, %v3731
        %v3738 = vsub.f32 %v3722, %v3734
        %v3739 = vmul.f32 %v3735, 1.442695
        %v3740 = vpow.pop %v3739
        %v3741 = vmul.f32 %v3736, 1.442695
        %v3742 = vpow.pop %v3741
        %v3743 = vmul.f32 %v3737, 1.442695
        %v3744 = vpow.pop %v3743
        %v3745 = vmul.f32 %v3738, 1.442695
        %v3746 = vpow.pop %v3745
        %v3747 = vsel %vm1052, %v3740, 0.0
        %3748 = vadd.xlane.f32.xlu0 %v3747
        %v3749 = vpop.xlane.xlu0 %3748
        %v3750 = vsel %vm1052, %v3742, 0.0
        %3751 = vadd.xlane.f32.xlu0 %v3750
        %v3752 = vpop.xlane.xlu0 %3751
        %v3753 = vsel %vm1052, %v3744, 0.0
        %3754 = vadd.xlane.f32.xlu0 %v3753
        %v3755 = vpop.xlane.xlu0 %3754
        %v3756 = vsel %vm1052, %v3746, 0.0
        %3757 = vadd.xlane.f32.xlu0 %v3756
        %v3758 = vpop.xlane.xlu0 %3757
        %v3759 = vrcp.pop %v3749
        %v3760 = vrcp.pop %v3752
        %v3761 = vrcp.pop %v3755
        %v3762 = vrcp.pop %v3758
        %v3763 = vmul.f32 %v3740, %v3759
        %v3764 = vmul.f32 %v3742, %v3760
        %v3765 = vmul.f32 %v3744, %v3761
        %v3766 = vmul.f32 %v3746, %v3762
        %3767 = vrot.lane.b32.xlu0 %v3607, 96
        %v3768 = vpop.permute.xlu0 %3767
        %v3771 = vsel %vm1052, %v3763, 0
        %3773 = vmatpush.msra.mxu0 0.0
        %3774 = vmatpush.msra.mxu0 0.0
        %3775 = vmatpush.msra.mxu0 0.0
        %3776 = vmatpush.msra.mxu0 0.0
        %3777 = vmatpush.msra.mxu0 0.0
        %3778 = vmatpush.msra.mxu0 0.0
        %3779 = vmatpush.msra.mxu0 0.0
        %3780 = vmatpush.msra.mxu0 0.0
        %3781 = vmatpush.msra.mxu0 0.0
        %3782 = vmatpush.msra.mxu0 0.0
        %3783 = vmatpush.msra.mxu0 0.0
        %3784 = vmatpush.msra.mxu0 0.0
        %3785 = vmatpush.msra.mxu0 0.0
        %3786 = vmatpush.msra.mxu0 0.0
        %3787 = vmatpush.msra.mxu0 0.0
        %3788 = vmatpush.msra.mxu0 %v3768
        %3789 = vmatmul.f32.gmra.mxu0 %v3771
        %v3790 = vpop.f32.mrf.mxu0
        %v3791 = vadd.f32 0.0, %v3790
        %3792 = vdwg.mxu0
        %v3794 = vsel %vm1052, %v3791, 0
        %3796 = vmatpush.msra.mxu0 0.0
        %3797 = vmatpush.msra.mxu0 0.0
        %3798 = vmatpush.msra.mxu0 0.0
        %3799 = vmatpush.msra.mxu0 0.0
        %3800 = vmatpush.msra.mxu0 0.0
        %3801 = vmatpush.msra.mxu0 0.0
        %3802 = vmatpush.msra.mxu0 0.0
        %3803 = vmatpush.msra.mxu0 0.0
        %3804 = vmatpush.msra.mxu0 0.0
        %3805 = vmatpush.msra.mxu0 0.0
        %3806 = vmatpush.msra.mxu0 0.0
        %3807 = vmatpush.msra.mxu0 0.0
        %3808 = vmatpush.msra.mxu0 0.0
        %3809 = vmatpush.msra.mxu0 0.0
        %3810 = vmatpush.msra.mxu0 0.0
        %3811 = vmatpush.msra.mxu0 %v3544
        %3812 = vmatmul.f32.gmra.mxu0 %v3794
        %v3813 = vpop.f32.mrf.mxu0
        %v3814 = vadd.f32 0.0, %v3813
        %3815 = vdwg.mxu0
        %v3817 = vperm.slane %v3549, 0
        %v3819 = vadd.f32 %v3817, %v3814
        %3820 = vrot.lane.b32.xlu0 %v3607, 88
        %v3821 = vpop.permute.xlu0 %3820
        %v3824 = vsel %vm1052, %v3764, 0
        %3826 = vmatpush.msra.mxu0 0.0
        %3827 = vmatpush.msra.mxu0 0.0
        %3828 = vmatpush.msra.mxu0 0.0
        %3829 = vmatpush.msra.mxu0 0.0
        %3830 = vmatpush.msra.mxu0 0.0
        %3831 = vmatpush.msra.mxu0 0.0
        %3832 = vmatpush.msra.mxu0 0.0
        %3833 = vmatpush.msra.mxu0 0.0
        %3834 = vmatpush.msra.mxu0 0.0
        %3835 = vmatpush.msra.mxu0 0.0
        %3836 = vmatpush.msra.mxu0 0.0
        %3837 = vmatpush.msra.mxu0 0.0
        %3838 = vmatpush.msra.mxu0 0.0
        %3839 = vmatpush.msra.mxu0 0.0
        %3840 = vmatpush.msra.mxu0 0.0
        %3841 = vmatpush.msra.mxu0 %v3821
        %3842 = vmatmul.f32.gmra.mxu0 %v3824
        %v3843 = vpop.f32.mrf.mxu0
        %v3844 = vadd.f32 0.0, %v3843
        %3845 = vdwg.mxu0
        %v3847 = vsel %vm1052, %v3844, 0
        %3849 = vmatpush.msra.mxu0 0.0
        %3850 = vmatpush.msra.mxu0 0.0
        %3851 = vmatpush.msra.mxu0 0.0
        %3852 = vmatpush.msra.mxu0 0.0
        %3853 = vmatpush.msra.mxu0 0.0
        %3854 = vmatpush.msra.mxu0 0.0
        %3855 = vmatpush.msra.mxu0 0.0
        %3856 = vmatpush.msra.mxu0 0.0
        %3857 = vmatpush.msra.mxu0 0.0
        %3858 = vmatpush.msra.mxu0 0.0
        %3859 = vmatpush.msra.mxu0 0.0
        %3860 = vmatpush.msra.mxu0 0.0
        %3861 = vmatpush.msra.mxu0 0.0
        %3862 = vmatpush.msra.mxu0 0.0
        %3863 = vmatpush.msra.mxu0 0.0
        %3864 = vmatpush.msra.mxu0 %v3545
        %3865 = vmatmul.f32.gmra.mxu0 %v3847
        %v3866 = vpop.f32.mrf.mxu0
        %v3867 = vadd.f32 0.0, %v3866
        %3868 = vdwg.mxu0
        %v3869 = vadd.f32 %v3819, %v3867
        %3870 = vrot.lane.b32.xlu0 %v3607, 80
        %v3871 = vpop.permute.xlu0 %3870
        %v3874 = vsel %vm1052, %v3765, 0
        %3876 = vmatpush.msra.mxu0 0.0
        %3877 = vmatpush.msra.mxu0 0.0
        %3878 = vmatpush.msra.mxu0 0.0
        %3879 = vmatpush.msra.mxu0 0.0
        %3880 = vmatpush.msra.mxu0 0.0
        %3881 = vmatpush.msra.mxu0 0.0
        %3882 = vmatpush.msra.mxu0 0.0
        %3883 = vmatpush.msra.mxu0 0.0
        %3884 = vmatpush.msra.mxu0 0.0
        %3885 = vmatpush.msra.mxu0 0.0
        %3886 = vmatpush.msra.mxu0 0.0
        %3887 = vmatpush.msra.mxu0 0.0
        %3888 = vmatpush.msra.mxu0 0.0
        %3889 = vmatpush.msra.mxu0 0.0
        %3890 = vmatpush.msra.mxu0 0.0
        %3891 = vmatpush.msra.mxu0 %v3871
        %3892 = vmatmul.f32.gmra.mxu0 %v3874
        %v3893 = vpop.f32.mrf.mxu0
        %v3894 = vadd.f32 0.0, %v3893
        %3895 = vdwg.mxu0
        %v3897 = vsel %vm1052, %v3894, 0
        %3899 = vmatpush.msra.mxu0 0.0
        %3900 = vmatpush.msra.mxu0 0.0
        %3901 = vmatpush.msra.mxu0 0.0
        %3902 = vmatpush.msra.mxu0 0.0
        %3903 = vmatpush.msra.mxu0 0.0
        %3904 = vmatpush.msra.mxu0 0.0
        %3905 = vmatpush.msra.mxu0 0.0
        %3906 = vmatpush.msra.mxu0 0.0
        %3907 = vmatpush.msra.mxu0 0.0
        %3908 = vmatpush.msra.mxu0 0.0
        %3909 = vmatpush.msra.mxu0 0.0
        %3910 = vmatpush.msra.mxu0 0.0
        %3911 = vmatpush.msra.mxu0 0.0
        %3912 = vmatpush.msra.mxu0 0.0
        %3913 = vmatpush.msra.mxu0 0.0
        %3914 = vmatpush.msra.mxu0 %v3546
        %3915 = vmatmul.f32.gmra.mxu0 %v3897
        %v3916 = vpop.f32.mrf.mxu0
        %v3917 = vadd.f32 0.0, %v3916
        %3918 = vdwg.mxu0
        %v3919 = vadd.f32 %v3869, %v3917
        %3920 = vrot.lane.b32.xlu0 %v3607, 72
        %v3921 = vpop.permute.xlu0 %3920
        %v3924 = vsel %vm1052, %v3766, 0
        %3926 = vmatpush.msra.mxu0 0.0
        %3927 = vmatpush.msra.mxu0 0.0
        %3928 = vmatpush.msra.mxu0 0.0
        %3929 = vmatpush.msra.mxu0 0.0
        %3930 = vmatpush.msra.mxu0 0.0
        %3931 = vmatpush.msra.mxu0 0.0
        %3932 = vmatpush.msra.mxu0 0.0
        %3933 = vmatpush.msra.mxu0 0.0
        %3934 = vmatpush.msra.mxu0 0.0
        %3935 = vmatpush.msra.mxu0 0.0
        %3936 = vmatpush.msra.mxu0 0.0
        %3937 = vmatpush.msra.mxu0 0.0
        %3938 = vmatpush.msra.mxu0 0.0
        %3939 = vmatpush.msra.mxu0 0.0
        %3940 = vmatpush.msra.mxu0 0.0
        %3941 = vmatpush.msra.mxu0 %v3921
        %3942 = vmatmul.f32.gmra.mxu0 %v3924
        %v3943 = vpop.f32.mrf.mxu0
        %v3944 = vadd.f32 0.0, %v3943
        %3945 = vdwg.mxu0
        %v3947 = vsel %vm1052, %v3944, 0
        %3949 = vmatpush.msra.mxu0 0.0
        %3950 = vmatpush.msra.mxu0 0.0
        %3951 = vmatpush.msra.mxu0 0.0
        %3952 = vmatpush.msra.mxu0 0.0
        %3953 = vmatpush.msra.mxu0 0.0
        %3954 = vmatpush.msra.mxu0 0.0
        %3955 = vmatpush.msra.mxu0 0.0
        %3956 = vmatpush.msra.mxu0 0.0
        %3957 = vmatpush.msra.mxu0 0.0
        %3958 = vmatpush.msra.mxu0 0.0
        %3959 = vmatpush.msra.mxu0 0.0
        %3960 = vmatpush.msra.mxu0 0.0
        %3961 = vmatpush.msra.mxu0 0.0
        %3962 = vmatpush.msra.mxu0 0.0
        %3963 = vmatpush.msra.mxu0 0.0
        %3964 = vmatpush.msra.mxu0 %v3547
        %3965 = vmatmul.f32.gmra.mxu0 %v3947
        %v3966 = vpop.f32.mrf.mxu0
        %v3967 = vadd.f32 0.0, %v3966
        %3968 = vdwg.mxu0
        %v3969 = vadd.f32 %v3919, %v3967
        %s3970 = scalar_lea.vmem %s45, 1
        %v3971 = vld [vmem:[%s3970] sm:$0x1]
        %s3972 = scalar_lea.vmem %s47, 1
        %v3973 = vld [vmem:[%s3972] sm:$0x1]
        %v3974 = vadd.f32 %v3969, %v3537
        %v3975 = vsel %vm1025, %v3974, 0.0
        %3976 = vadd.xlane.f32.xlu0 %v3975
        %v3977 = vpop.xlane.xlu0 %3976
        %v3978 = vmul.f32 %v3977, %v1427
        %v3979 = vsub.f32 %v3974, %v3978
        %v3980 = vmul.f32 %v3979, %v3979
        %v3981 = vsel %vm1025, %v3980, 0.0
        %3982 = vadd.xlane.f32.xlu0 %v3981
        %v3983 = vpop.xlane.xlu0 %3982
        %v3984 = vmul.f32 %v3983, %v1427
        %v3985 = vadd.f32 %v3984, 1e-05
        %v3986 = vrsqrt.pop %v3985
        %v3987 = vmul.f32 %v3986, %v3985
        %v3988 = vmul.f32 %v3987, %v3986
        %v3989 = vmul.f32 0.5, %v3988
        %v3990 = vsub.f32 1.5, %v3989
        %v3991 = vmul.f32 %v3986, %v3990
        %vm3992 = vweird.f32 %v3985
        %vm3993 = vweird.f32 %v3986
        %vm3994 = vmor %vm3992, %vm3993
        %v3995 = vsel %vm3994, %v3986, %v3991
        %v3996 = vmul.f32 %v3979, %v3995
        %v3998 = vperm.slane %v3971, 0
        %v4000 = vmul.f32 %v3996, %v3998
        %v4002 = vperm.slane %v3973, 0
        %v4004 = vadd.f32 %v4000, %v4002
        %s4005 = scalar_lea.vmem %s53, 32
        %v4006 = vld [vmem:[%s4005] sm:$0xff]
        %v4007 = vld [vmem:[%s4005 + $0x8] sm:$0xff]
        %v4008 = vld [vmem:[%s4005 + $0x10] sm:$0xff]
        %v4009 = vld [vmem:[%s4005 + $0x18] sm:$0xff]
        %s4010 = scalar_lea.vmem %s55, 1
        %v4011 = vld [vmem:[%s4010] sm:$0x1]
        %s4012 = scalar_lea.vmem %s57, 128
        %v4013 = vld [vmem:[%s4012] sm:$0xff]
        %v4014 = vld [vmem:[%s4012 + $0x8] sm:$0xff]
        %v4015 = vld [vmem:[%s4012 + $0x10] sm:$0xff]
        %v4016 = vld [vmem:[%s4012 + $0x18] sm:$0xff]
        %v4017 = vld [vmem:[%s4012 + $0x20] sm:$0xff]
        %v4018 = vld [vmem:[%s4012 + $0x28] sm:$0xff]
        %v4019 = vld [vmem:[%s4012 + $0x30] sm:$0xff]
        %v4020 = vld [vmem:[%s4012 + $0x38] sm:$0xff]
        %v4021 = vld [vmem:[%s4012 + $0x40] sm:$0xff]
        %v4022 = vld [vmem:[%s4012 + $0x48] sm:$0xff]
        %v4023 = vld [vmem:[%s4012 + $0x50] sm:$0xff]
        %v4024 = vld [vmem:[%s4012 + $0x58] sm:$0xff]
        %v4025 = vld [vmem:[%s4012 + $0x60] sm:$0xff]
        %v4026 = vld [vmem:[%s4012 + $0x68] sm:$0xff]
        %v4027 = vld [vmem:[%s4012 + $0x70] sm:$0xff]
        %v4028 = vld [vmem:[%s4012 + $0x78] sm:$0xff]
        %s4029 = scalar_lea.vmem %s59, 1
        %v4030 = vld [vmem:[%s4029] sm:$0x1]
        %v4032 = vperm.slane %v4011, 0
        %v4035 = vsel %vm1025, %v4004, 0
        %4037 = vmatpush.msra.mxu0 0.0
        %4038 = vmatpush.msra.mxu0 0.0
        %4039 = vmatpush.msra.mxu0 0.0
        %4040 = vmatpush.msra.mxu0 0.0
        %4041 = vmatpush.msra.mxu0 0.0
        %4042 = vmatpush.msra.mxu0 0.0
        %4043 = vmatpush.msra.mxu0 0.0
        %4044 = vmatpush.msra.mxu0 0.0
        %4045 = vmatpush.msra.mxu0 0.0
        %4046 = vmatpush.msra.mxu0 0.0
        %4047 = vmatpush.msra.mxu0 0.0
        %4048 = vmatpush.msra.mxu0 0.0
        %4049 = vmatpush.msra.mxu0 %v4009
        %4050 = vmatpush.msra.mxu0 %v4008
        %4051 = vmatpush.msra.mxu0 %v4007
        %4052 = vmatpush.msra.mxu0 %v4006
        %4053 = vmatmul.f32.gmra.mxu0 %v4035
        %v4054 = vpop.f32.mrf.mxu0
        %v4055 = vadd.f32 %v4032, %v4054
        %4056 = vdwg.mxu0
        %v4057 = vmax.f32 %v4055, 0.0
        %v4059 = vperm.slane %v4030, 0
        %4061 = vmatpush.msra.mxu0 %v4028
        %4062 = vmatpush.msra.mxu0 %v4027
        %4063 = vmatpush.msra.mxu0 %v4026
        %4064 = vmatpush.msra.mxu0 %v4025
        %4065 = vmatpush.msra.mxu0 %v4024
        %4066 = vmatpush.msra.mxu0 %v4023
        %4067 = vmatpush.msra.mxu0 %v4022
        %4068 = vmatpush.msra.mxu0 %v4021
        %4069 = vmatpush.msra.mxu0 %v4020
        %4070 = vmatpush.msra.mxu0 %v4019
        %4071 = vmatpush.msra.mxu0 %v4018
        %4072 = vmatpush.msra.mxu0 %v4017
        %4073 = vmatpush.msra.mxu0 %v4016
        %4074 = vmatpush.msra.mxu0 %v4015
        %4075 = vmatpush.msra.mxu0 %v4014
        %4076 = vmatpush.msra.mxu0 %v4013
        %4077 = vmatmul.f32.gmra.mxu0 %v4057
        %v4078 = vpop.f32.mrf.mxu0
        %v4079 = vadd.f32 %v4059, %v4078
        %4080 = vdwg.mxu0
        %s4081 = scalar_lea.vmem %s49, 1
        %v4082 = vld [vmem:[%s4081] sm:$0x1]
        %s4083 = scalar_lea.vmem %s51, 1
        %v4084 = vld [vmem:[%s4083] sm:$0x1]
        %v4085 = vadd.f32 %v4079, %v4004
        %v4086 = vsel %vm1025, %v4085, 0.0
        %4087 = vadd.xlane.f32.xlu0 %v4086
        %v4088 = vpop.xlane.xlu0 %4087
        %v4089 = vmul.f32 %v4088, %v1427
        %v4090 = vsub.f32 %v4085, %v4089
        %v4091 = vmul.f32 %v4090, %v4090
        %v4092 = vsel %vm1025, %v4091, 0.0
        %4093 = vadd.xlane.f32.xlu0 %v4092
        %v4094 = vpop.xlane.xlu0 %4093
        %v4095 = vmul.f32 %v4094, %v1427
        %v4096 = vadd.f32 %v4095, 1e-05
        %v4097 = vrsqrt.pop %v4096
        %v4098 = vmul.f32 %v4097, %v4096
        %v4099 = vmul.f32 %v4098, %v4097
        %v4100 = vmul.f32 0.5, %v4099
        %v4101 = vsub.f32 1.5, %v4100
        %v4102 = vmul.f32 %v4097, %v4101
        %vm4103 = vweird.f32 %v4096
        %vm4104 = vweird.f32 %v4097
        %vm4105 = vmor %vm4103, %vm4104
        %v4106 = vsel %vm4105, %v4097, %v4102
        %v4107 = vmul.f32 %v4090, %v4106
        %v4109 = vperm.slane %v4082, 0
        %v4111 = vmul.f32 %v4107, %v4109
        %v4113 = vperm.slane %v4084, 0
        %v4115 = vadd.f32 %v4111, %v4113
        %v4116 = vld [vmem:[%s61] sm:$0xff]
        %v4117 = vld [vmem:[%s61 + $0x8] sm:$0xff]
        %v4118 = vld [vmem:[%s61 + $0x10] sm:$0xff]
        %v4119 = vld [vmem:[%s61 + $0x18] sm:$0xff]
        %v4120 = vld [vmem:[%s63] sm:$0x1]
        %v4122 = vperm.slane %v4120, 0
        %v4125 = vsel %vm1025, %v4115, 0
        %4127 = vmatpush.msra.mxu0 0.0
        %4128 = vmatpush.msra.mxu0 0.0
        %4129 = vmatpush.msra.mxu0 0.0
        %4130 = vmatpush.msra.mxu0 0.0
        %4131 = vmatpush.msra.mxu0 0.0
        %4132 = vmatpush.msra.mxu0 0.0
        %4133 = vmatpush.msra.mxu0 0.0
        %4134 = vmatpush.msra.mxu0 0.0
        %4135 = vmatpush.msra.mxu0 0.0
        %4136 = vmatpush.msra.mxu0 0.0
        %4137 = vmatpush.msra.mxu0 0.0
        %4138 = vmatpush.msra.mxu0 0.0
        %4139 = vmatpush.msra.mxu0 %v4119
        %4140 = vmatpush.msra.mxu0 %v4118
        %4141 = vmatpush.msra.mxu0 %v4117
        %4142 = vmatpush.msra.mxu0 %v4116
        %4143 = vmatmul.f32.gmra.mxu0 %v4125
        %v4144 = vpop.f32.mrf.mxu0
        %v4145 = vadd.f32 %v4122, %v4144
        %4146 = vdwg.mxu0
        %4147 = vst [vmem:[%s1001] sm:$0xff] %v4145
        %s4148 = sand.u32 %s774, 1
        %s4149 = scalar_lea.sflag [#allocation3], %s4148
        %s4150 = sand.u32 %s774, 1
        %s4151 = smul.addr %s4150, 8
        %s4152 = scalar_lea.vmem [#allocation2], %s4151
        // Predicated region
        $region149: #{transformer_fwd.1} parent=147 // pred_check
          %p4153 = pneg %p784
        $region150: #{transformer_fwd.1} parent=147 // pred_check_branch
          %4155 = sbr.rel (%p4153) target = $region152
        $region151: #{transformer_fwd.1} parent=147 // pred_region
          %4157 = vsyncadd %s4149, 0
          %s4158 = smul.addr %s79, 8
          %s4159 = scalar_lea.hbm %s65, %s4158
          %s4161 = sshll.u32 %s4152, 4
          %s4162 = int_to_ptr.vmem [resolvable:$true] %s4161
          %s4163 = sshll.u32 %s4159, 4
          %s4164 = int_to_ptr.hbm [resolvable:$true] %s4163
          %4166 = dma.vmem_to_hbm [thread:$0]  %s4162, 128, %s4164, %s4149
        $region152: #{transformer_fwd.1} parent=147 // pred_fallthru
          _
      $region148: #{transformer_fwd.1} parent=5 // pred_fallthru
        _
      %p4167 = scmp.le.s32.totalorder 2, %s74
      // Predicated region
      $region153: #{transformer_fwd.1} parent=5 // pred_check
        %p4168 = pneg %p4167
      $region154: #{transformer_fwd.1} parent=5 // pred_check_branch
        %4170 = sbr.rel (%p4168) target = $region156
      $region155: #{transformer_fwd.1} parent=5 // pred_region
        %s4171 = ssub.s32 %s74, 2
        // Predicated region
        $region157: #{transformer_fwd.1} parent=155 // pred_check
          %p4172 = pneg %p790
        $region158: #{transformer_fwd.1} parent=155 // pred_check_branch
          %4174 = sbr.rel (%p4172) target = $region160
        $region159: #{transformer_fwd.1} parent=155 // pred_region
          %s4175 = sand.u32 %s775, 1
          %s4176 = scalar_lea.sflag [#allocation3], %s4175
          %s4177 = sand.u32 %s775, 1
          %s4178 = smul.addr %s4177, 8
          %s4179 = scalar_lea.vmem [#allocation2], %s4178
          %4181 = dma.done %s4176, 128
        $region160: #{transformer_fwd.1} parent=155 // pred_fallthru
          _
      $region156: #{transformer_fwd.1} parent=5 // pred_fallthru
        _
    $region6: #{transformer_fwd.1} parent=1 // loop_footer
      %s78 = sadd.s32 1, %s74
    $region7: #{transformer_fwd.1} parent=1 // loop_footer_branch
      %73 = sbr.rel target = $region3
    $region8: #{transformer_fwd.1} parent=1 // loop_exit
      _
    %4182 = vsyncpa [#allocation3], 1
    %s4183 = scalar_lea.sflag [#allocation3], 1
    %4184 = vsyncpa %s4183, 1

</llo_original>
